<compile_context>
chip_gen: v6e
topology: v6e:2x2x1
jax: 0.10.0
libtpu: 0.0.40
codegen_flags: <defaults>
</compile_context>

<pallas_src>
import math
import functools

import jax
import jax.numpy as jnp
import numpy as np
from jax.experimental import pallas as pl
from jax.experimental.pallas import tpu as pltpu

LEAKY_SLOPE = 0.1      # nn.LeakyReLU(0.1)
LN_EPS = 1e-5          # nn.LayerNorm default eps
MASK_NEG = -1e30       # stands in for float('-inf') in masked_fill


# ----------------------------------------------------------------------------
# Pallas kernel: the FULL encoder stack for one batch element.
# Grid is over the batch dimension; each grid step holds an (L, D) slab and the
# whole stacked-weight set in VMEM and loops over layers internally.
# ----------------------------------------------------------------------------
def _encoder_stack_kernel(x_ref, mask_ref,
                          wq_ref, wo_ref, w1_ref, b1_ref, w2_ref, b2_ref,
                          g1_ref, be1_ref, g2_ref, be2_ref,
                          o_ref, *, heads: int):
    layers = wq_ref.shape[0]
    dh = wq_ref.shape[-1]
    L, D = x_ref.shape[1], x_ref.shape[2]
    inv_scale = jnp.float32(1.0 / math.sqrt(dh))     # 1 / sqrt(dim_qk)

    x = x_ref[0]                                     # (L, D) f32
    # Additive mask bias, computed ONCE (hoisted out of layer/head loops).
    bias = mask_ref[...] * jnp.float32(MASK_NEG)     # (1, 1, L) → broadcasts to (H,L,L)

    # TODO(synk): for large D*LAYERS (v7x has only 64 MiB VMEM) stream weights per
    # layer via a grid axis instead of keeping the whole stack resident.
    for l in range(layers):                          # static, small unrolled loop
        # ---- multi-head self-attention (shared Q/K/V projection, see notes) ----
        x_b = x.astype(jnp.bfloat16)
        x3 = jnp.broadcast_to(x_b, (heads, L, D))                    # (H, L, D)
        q = jnp.einsum('hld,hde->hle', x3, wq_ref[l],
                       preferred_element_type=jnp.float32)           # (H, L, dh)
        q_b = q.astype(jnp.bfloat16)                                 # Q == K == V

        s = jnp.einsum('hqd,hkd->hqk', q_b, q_b,
                       preferred_element_type=jnp.float32) * inv_scale
        s = s + bias                                                 # (H, L, L)
        m = jnp.max(s, axis=-1, keepdims=True)
        e = jnp.exp(s - m)
        den = jnp.sum(e, axis=-1, keepdims=True)
        p = e * pl.reciprocal(den, approx=True)                      # softmax

        ctx = jnp.einsum('hqk,hkd->hqd', p.astype(jnp.bfloat16), q_b,
                         preferred_element_type=jnp.float32)         # (H, L, dh)
        attn = jnp.einsum('hqd,hde->hqe', ctx.astype(jnp.bfloat16), wo_ref[l],
                          preferred_element_type=jnp.float32)        # (H, L, D)
        attn = jnp.sum(attn, axis=0)                                 # (L, D)

        # ---- add & LayerNorm 1 (f32) ------------------------------------------
        h1 = x + attn
        mu1 = jnp.mean(h1, axis=-1, keepdims=True)
        var1 = jnp.mean((h1 - mu1) ** 2, axis=-1, keepdims=True)
        y = (h1 - mu1) * jax.lax.rsqrt(var1 + LN_EPS)
        y = y * g1_ref[l] + be1_ref[l]

        # ---- position-wise FFN (Linear -> LeakyReLU(0.1) -> Linear) ------------
        f = jnp.dot(y.astype(jnp.bfloat16), w1_ref[l],
                    preferred_element_type=jnp.float32) + b1_ref[l]
        f = jnp.where(f >= 0, f, LEAKY_SLOPE * f)
        f = jnp.dot(f.astype(jnp.bfloat16), w2_ref[l],
                    preferred_element_type=jnp.float32) + b2_ref[l]

        # ---- add & LayerNorm 2 (f32) ------------------------------------------
        h2 = y + f
        mu2 = jnp.mean(h2, axis=-1, keepdims=True)
        var2 = jnp.mean((h2 - mu2) ** 2, axis=-1, keepdims=True)
        z = (h2 - mu2) * jax.lax.rsqrt(var2 + LN_EPS)
        x = z * g2_ref[l] + be2_ref[l]

    o_ref[0] = x.astype(o_ref.dtype)


# ----------------------------------------------------------------------------
# Wrappers
# ----------------------------------------------------------------------------
def prepare_encoder_params(layer_params, heads):
    """Stack + pre-arrange all per-layer weights ONCE (not per forward call).
    Matmul weights are pre-transposed, head-split and cast to bf16 (MXU operands);
    LayerNorm params and biases stay f32."""
    D = layer_params[0]['wq'].shape[0]
    dh = D // heads

    def stack(fn):
        return jnp.stack([fn(p) for p in layer_params])

    return dict(
        # (LAYERS, H, D, dh): per-head column blocks of Wq^T (shared Q/K/V proj)
        wq=stack(lambda p: p['wq'].T.reshape(D, heads, dh).transpose(1, 0, 2)
                 ).astype(jnp.bfloat16),
        # (LAYERS, H, dh, D): per-head row blocks of Wo^T
        wo=stack(lambda p: p['wo'].T.reshape(heads, dh, D)).astype(jnp.bfloat16),
        w1=stack(lambda p: p['w1'].T).astype(jnp.bfloat16),     # (LAYERS, D, D)
        w2=stack(lambda p: p['w2'].T).astype(jnp.bfloat16),     # (LAYERS, D, D)
        b1=stack(lambda p: p['b1'].reshape(1, D)),              # (LAYERS, 1, D) f32
        b2=stack(lambda p: p['b2'].reshape(1, D)),
        g1=stack(lambda p: p['g1'].reshape(1, D)),
        be1=stack(lambda p: p['be1'].reshape(1, D)),
        g2=stack(lambda p: p['g2'].reshape(1, D)),
        be2=stack(lambda p: p['be2'].reshape(1, D)),
    )


def encoder_forward_pallas(x, mask, stacked, heads):
    """Full Encoder in ONE pallas_call. x: (B, L, D) f32, mask: (B, L) {0,1}."""
    B, L, D = x.shape
    mask3 = mask.astype(jnp.float32)[:, None, :]          # (B, 1, L)

    def whole(arr):                                       # full-array, DMA'd once
        zeros = (0,) * arr.ndim
        return pl.BlockSpec(arr.shape, lambda b: zeros)

    weight_order = ('wq', 'wo', 'w1', 'b1', 'w2', 'b2', 'g1', 'be1', 'g2', 'be2')
    weights = [stacked[k] for k in weight_order]

    in_specs = [
        pl.BlockSpec((1, L, D), lambda b: (b, 0, 0)),     # x (per-batch slab)
        pl.BlockSpec((1, 1, L), lambda b: (b, 0, 0)),     # mask
    ] + [whole(w) for w in weights]

    kernel = functools.partial(_encoder_stack_kernel, heads=heads)
    return pl.pallas_call(
        kernel,
        out_shape=jax.ShapeDtypeStruct((B, L, D), jnp.float32),
        grid_spec=pltpu.PrefetchScalarGridSpec(
            num_scalar_prefetch=0,
            grid=(B,),                                    # batch-parallel (v7x: 2 TCs)
            in_specs=in_specs,
            out_specs=pl.BlockSpec((1, L, D), lambda b: (b, 0, 0)),
        ),
        compiler_params=pltpu.CompilerParams(
            dimension_semantics=("parallel",)),
    )(x, mask3, *weights)


# ----------------------------------------------------------------------------
# Pure-JAX reference (mirrors the PyTorch forward exactly, f32) — for checking.
# ----------------------------------------------------------------------------
def _encoder_layer_ref(x, mask, p, heads):
    B, L, D = x.shape
    dh = D // heads
    qkv = jnp.einsum('bld,ed->ble', x, p['wq'])                   # x @ Wq^T
    q = qkv.reshape(B, L, heads, dh).transpose(0, 2, 1, 3)        # (B,H,L,dh)
    s = jnp.einsum('bhqd,bhkd->bhqk', q, q) / math.sqrt(dh)
    s = s + mask[:, None, None, :].astype(jnp.float32) * MASK_NEG
    a = jax.nn.softmax(s, axis=-1)
    o = jnp.einsum('bhqk,bhkd->bhqd', a, q).transpose(0, 2, 1, 3).reshape(B, L, D)
    o = jnp.einsum('bld,ed->ble', o, p['wo'])

    def ln(h, g, b):
        mu = jnp.mean(h, axis=-1, keepdims=True)
        var = jnp.mean((h - mu) ** 2, axis=-1, keepdims=True)
        return (h - mu) / jnp.sqrt(var + LN_EPS) * g + b

    y = ln(x + o, p['g1'], p['be1'])
    f = jnp.einsum('bld,ed->ble', y, p['w1']) + p['b1']
    f = jnp.where(f >= 0, f, LEAKY_SLOPE * f)
    f = jnp.einsum('bld,ed->ble', f, p['w2']) + p['b2']
    return ln(y + f, p['g2'], p['be2'])


def encoder_forward_ref(x, mask, layer_params, heads):
    for p in layer_params:
        x = _encoder_layer_ref(x, mask, p, heads)
    return x


# ----------------------------------------------------------------------------
# Deterministic parameter init (synthetic; shapes follow the module __init__).
# ----------------------------------------------------------------------------
def init_layer_params(key, D):
    ks = jax.random.split(key, 10)
    s = 0.1
    return dict(
        wq=jax.random.normal(ks[0], (D, D), jnp.float32) * s,    # query_linear.weight
        wo=jax.random.normal(ks[1], (D, D), jnp.float32) * s,    # mha.linear.weight
        w1=jax.random.normal(ks[2], (D, D), jnp.float32) * s,    # ffn.linear1.weight
        b1=jax.random.normal(ks[3], (D,), jnp.float32) * s,      # ffn.linear1.bias
        w2=jax.random.normal(ks[4], (D, D), jnp.float32) * s,    # ffn.linear2.weight
        b2=jax.random.normal(ks[5], (D,), jnp.float32) * s,      # ffn.linear2.bias
        g1=1.0 + 0.02 * jax.random.normal(ks[6], (D,), jnp.float32),  # norm1.weight
        be1=0.02 * jax.random.normal(ks[7], (D,), jnp.float32),       # norm1.bias
        g2=1.0 + 0.02 * jax.random.normal(ks[8], (D,), jnp.float32),  # norm2.weight
        be2=0.02 * jax.random.normal(ks[9], (D,), jnp.float32),       # norm2.bias
    )


if __name__ == "__main__":
    B, L, D, HEADS, LAYERS = 2, 8, 32, 8, 2

    root = jax.random.PRNGKey(0)
    kx, kparams = jax.random.split(root)
    x = jax.random.normal(kx, (B, L, D), jnp.float32)

    # mask: last 2 key positions masked for batch 0, last 1 for batch 1
    mask = (jnp.arange(L)[None, :] >= (L - jnp.array([2, 1])[:, None])
            ).astype(jnp.float32)                                  # (B, L)

    layer_keys = jax.random.split(kparams, LAYERS)
    layer_params = [init_layer_params(k, D) for k in layer_keys]
    stacked = prepare_encoder_params(layer_params, HEADS)          # once, not per call

    out = jax.block_until_ready(encoder_forward_pallas(x, mask, stacked, HEADS))
    ref = jax.block_until_ready(encoder_forward_ref(x, mask, layer_params, HEADS))
    np.testing.assert_allclose(np.asarray(out), np.asarray(ref),
                               rtol=5e-2, atol=5e-2)

    print("KERNEL_OK")
</pallas_src>

<mosaic_0001>
module attributes {stable_mosaic.version = 11 : i64} {
  func.func @_encoder_stack_kernel(%arg0: i32, %arg1: memref<1x8x32xf32, #tpu.memory_space<vmem>>, %arg2: memref<1x1x8xf32, #tpu.memory_space<vmem>>, %arg3: memref<2x8x32x4xbf16, #tpu.memory_space<vmem>>, %arg4: memref<2x8x4x32xbf16, #tpu.memory_space<vmem>>, %arg5: memref<2x32x32xbf16, #tpu.memory_space<vmem>>, %arg6: memref<2x1x32xf32, #tpu.memory_space<vmem>>, %arg7: memref<2x32x32xbf16, #tpu.memory_space<vmem>>, %arg8: memref<2x1x32xf32, #tpu.memory_space<vmem>>, %arg9: memref<2x1x32xf32, #tpu.memory_space<vmem>>, %arg10: memref<2x1x32xf32, #tpu.memory_space<vmem>>, %arg11: memref<2x1x32xf32, #tpu.memory_space<vmem>>, %arg12: memref<2x1x32xf32, #tpu.memory_space<vmem>>, %arg13: memref<1x8x32xf32, #tpu.memory_space<vmem>>) attributes {dimension_semantics = [#tpu.dimension_semantics<parallel>], iteration_bounds = array<i64: 2>, scalar_prefetch = 0 : i64, scratch_operands = 0 : i64, tpu.core_type = #tpu.core_type<tc>, window_params = [{transform_indices = @transform_0, window_bounds = array<i64: 1, 8, 32>}, {transform_indices = @transform_1, window_bounds = array<i64: 1, 1, 8>}, {pipeline_mode = #tpu.pipeline_mode<synchronous>, transform_indices = @transform_2, window_bounds = array<i64: 2, 8, 32, 4>}, {pipeline_mode = #tpu.pipeline_mode<synchronous>, transform_indices = @transform_3, window_bounds = array<i64: 2, 8, 4, 32>}, {pipeline_mode = #tpu.pipeline_mode<synchronous>, transform_indices = @transform_4, window_bounds = array<i64: 2, 32, 32>}, {pipeline_mode = #tpu.pipeline_mode<synchronous>, transform_indices = @transform_5, window_bounds = array<i64: 2, 1, 32>}, {pipeline_mode = #tpu.pipeline_mode<synchronous>, transform_indices = @transform_6, window_bounds = array<i64: 2, 32, 32>}, {pipeline_mode = #tpu.pipeline_mode<synchronous>, transform_indices = @transform_7, window_bounds = array<i64: 2, 1, 32>}, {pipeline_mode = #tpu.pipeline_mode<synchronous>, transform_indices = @transform_8, window_bounds = array<i64: 2, 1, 32>}, {pipeline_mode = #tpu.pipeline_mode<synchronous>, transform_indices = @transform_9, window_bounds = array<i64: 2, 1, 32>}, {pipeline_mode = #tpu.pipeline_mode<synchronous>, transform_indices = @transform_10, window_bounds = array<i64: 2, 1, 32>}, {pipeline_mode = #tpu.pipeline_mode<synchronous>, transform_indices = @transform_11, window_bounds = array<i64: 2, 1, 32>}, {transform_indices = @transform_12, window_bounds = array<i64: 1, 8, 32>}]} {
    %c0 = arith.constant 0 : index
    %c0_0 = arith.constant 0 : index
    %c0_1 = arith.constant 0 : index
    %0 = vector.load %arg1[%c0, %c0_0, %c0_1] : memref<1x8x32xf32, #tpu.memory_space<vmem>>, vector<1x8x32xf32>
    %1 = vector.shape_cast %0 : vector<1x8x32xf32> to vector<8x32xf32>
    %c0_2 = arith.constant 0 : index
    %c0_3 = arith.constant 0 : index
    %c0_4 = arith.constant 0 : index
    %2 = vector.load %arg2[%c0_2, %c0_3, %c0_4] : memref<1x1x8xf32, #tpu.memory_space<vmem>>, vector<1x1x8xf32>
    %cst = arith.constant -1.000000e+30 : f32
    %3 = vector.broadcast %cst : f32 to vector<1x1x8xf32>
    %4 = arith.mulf %2, %3 : vector<1x1x8xf32>
    %5 = arith.truncf %1 : vector<8x32xf32> to vector<8x32xbf16>
    %6 = vector.shape_cast %5 : vector<8x32xbf16> to vector<1x8x32xbf16>
    %7 = vector.broadcast %6 : vector<1x8x32xbf16> to vector<8x8x32xbf16>
    %c0_5 = arith.constant 0 : index
    %c0_6 = arith.constant 0 : index
    %c0_7 = arith.constant 0 : index
    %c0_8 = arith.constant 0 : index
    %8 = vector.load %arg3[%c0_5, %c0_6, %c0_7, %c0_8] : memref<2x8x32x4xbf16, #tpu.memory_space<vmem>>, vector<1x8x32x4xbf16>
    %9 = vector.shape_cast %8 : vector<1x8x32x4xbf16> to vector<8x32x4xbf16>
    "tpu.trace_start"() <{level = 10 : i32, message = "hld,hde->hle"}> : () -> ()
    %cst_9 = arith.constant dense<0.000000e+00> : vector<8x8x4xf32>
    %10 = tpu.matmul %7, %9, %cst_9 {dimension_numbers = #tpu.dot_dimension_numbers<[2], [1], [1], [2], [0, 0, 0, 1, 1, 2], [0], [0]>} : vector<8x8x32xbf16>, vector<8x32x4xbf16>, vector<8x8x4xf32> -> vector<8x8x4xf32>
    "tpu.trace_stop"() : () -> ()
    %11 = arith.truncf %10 : vector<8x8x4xf32> to vector<8x8x4xbf16>
    "tpu.trace_start"() <{level = 10 : i32, message = "hqd,hkd->hqk"}> : () -> ()
    %cst_10 = arith.constant dense<0.000000e+00> : vector<8x8x8xf32>
    %12 = tpu.matmul %11, %11, %cst_10 {dimension_numbers = #tpu.dot_dimension_numbers<[2], [2], [1], [1], [0, 0, 0, 1, 1, 1], [0], [0]>} : vector<8x8x4xbf16>, vector<8x8x4xbf16>, vector<8x8x8xf32> -> vector<8x8x8xf32>
    "tpu.trace_stop"() : () -> ()
    %cst_11 = arith.constant 5.000000e-01 : f32
    %13 = vector.broadcast %cst_11 : f32 to vector<8x8x8xf32>
    %14 = arith.mulf %12, %13 : vector<8x8x8xf32>
    %15 = vector.broadcast %4 : vector<1x1x8xf32> to vector<8x8x8xf32>
    %16 = arith.addf %14, %15 : vector<8x8x8xf32>
    %cst_12 = arith.constant dense<0xFF800000> : vector<8x8xf32>
    %17 = vector.multi_reduction <maximumf>, %16, %cst_12 [2] : vector<8x8x8xf32> to vector<8x8xf32>
    %18 = vector.shape_cast %17 : vector<8x8xf32> to vector<8x8x1xf32>
    %19 = vector.broadcast %18 : vector<8x8x1xf32> to vector<8x8x8xf32>
    %20 = arith.subf %16, %19 : vector<8x8x8xf32>
    %21 = math.exp %20 : vector<8x8x8xf32>
    %cst_13 = arith.constant dense<0.000000e+00> : vector<8x8xf32>
    %22 = vector.multi_reduction <add>, %21, %cst_13 [2] : vector<8x8x8xf32> to vector<8x8xf32>
    %23 = vector.shape_cast %22 : vector<8x8xf32> to vector<8x8x1xf32>
    %24 = tpu.reciprocal %23 {approx = true} : vector<8x8x1xf32> -> vector<8x8x1xf32>
    %25 = vector.broadcast %24 : vector<8x8x1xf32> to vector<8x8x8xf32>
    %26 = arith.mulf %21, %25 : vector<8x8x8xf32>
    %27 = arith.truncf %26 : vector<8x8x8xf32> to vector<8x8x8xbf16>
    "tpu.trace_start"() <{level = 10 : i32, message = "hqk,hkd->hqd"}> : () -> ()
    %cst_14 = arith.constant dense<0.000000e+00> : vector<8x8x4xf32>
    %28 = tpu.matmul %27, %11, %cst_14 {dimension_numbers = #tpu.dot_dimension_numbers<[2], [1], [1], [2], [0, 0, 0, 1, 1, 2], [0], [0]>} : vector<8x8x8xbf16>, vector<8x8x4xbf16>, vector<8x8x4xf32> -> vector<8x8x4xf32>
    "tpu.trace_stop"() : () -> ()
    %29 = arith.truncf %28 : vector<8x8x4xf32> to vector<8x8x4xbf16>
    %c0_15 = arith.constant 0 : index
    %c0_16 = arith.constant 0 : index
    %c0_17 = arith.constant 0 : index
    %c0_18 = arith.constant 0 : index
    %30 = vector.load %arg4[%c0_15, %c0_16, %c0_17, %c0_18] : memref<2x8x4x32xbf16, #tpu.memory_space<vmem>>, vector<1x8x4x32xbf16>
    %31 = vector.shape_cast %30 : vector<1x8x4x32xbf16> to vector<8x4x32xbf16>
    "tpu.trace_start"() <{level = 10 : i32, message = "hqd,hde->hqe"}> : () -> ()
    %cst_19 = arith.constant dense<0.000000e+00> : vector<8x8x32xf32>
    %32 = tpu.matmul %29, %31, %cst_19 {dimension_numbers = #tpu.dot_dimension_numbers<[2], [1], [1], [2], [0, 0, 0, 1, 1, 2], [0], [0]>} : vector<8x8x4xbf16>, vector<8x4x32xbf16>, vector<8x8x32xf32> -> vector<8x8x32xf32>
    "tpu.trace_stop"() : () -> ()
    %cst_20 = arith.constant dense<0.000000e+00> : vector<8x32xf32>
    %33 = vector.multi_reduction <add>, %32, %cst_20 [0] : vector<8x8x32xf32> to vector<8x32xf32>
    %34 = arith.addf %1, %33 : vector<8x32xf32>
    %cst_21 = arith.constant dense<0.000000e+00> : vector<8xf32>
    %35 = vector.multi_reduction <add>, %34, %cst_21 [1] : vector<8x32xf32> to vector<8xf32>
    %36 = vector.shape_cast %35 : vector<8xf32> to vector<8x1xf32>
    %cst_22 = arith.constant 3.200000e+01 : f32
    %37 = vector.broadcast %cst_22 : f32 to vector<8x1xf32>
    %38 = arith.divf %36, %37 : vector<8x1xf32>
    %39 = vector.broadcast %38 : vector<8x1xf32> to vector<8x32xf32>
    %40 = arith.subf %34, %39 : vector<8x32xf32>
    %41 = arith.mulf %40, %40 : vector<8x32xf32>
    %cst_23 = arith.constant dense<0.000000e+00> : vector<8xf32>
    %42 = vector.multi_reduction <add>, %41, %cst_23 [1] : vector<8x32xf32> to vector<8xf32>
    %43 = vector.shape_cast %42 : vector<8xf32> to vector<8x1xf32>
    %cst_24 = arith.constant 3.200000e+01 : f32
    %44 = vector.broadcast %cst_24 : f32 to vector<8x1xf32>
    %45 = arith.divf %43, %44 : vector<8x1xf32>
    %46 = vector.broadcast %38 : vector<8x1xf32> to vector<8x32xf32>
    %47 = arith.subf %34, %46 : vector<8x32xf32>
    %cst_25 = arith.constant 9.99999974E-6 : f32
    %48 = vector.broadcast %cst_25 : f32 to vector<8x1xf32>
    %49 = arith.addf %45, %48 : vector<8x1xf32>
    %50 = math.rsqrt %49 : vector<8x1xf32>
    %51 = vector.broadcast %50 : vector<8x1xf32> to vector<8x32xf32>
    %52 = arith.mulf %47, %51 : vector<8x32xf32>
    %c0_26 = arith.constant 0 : index
    %c0_27 = arith.constant 0 : index
    %c0_28 = arith.constant 0 : index
    %53 = vector.load %arg9[%c0_26, %c0_27, %c0_28] : memref<2x1x32xf32, #tpu.memory_space<vmem>>, vector<1x1x32xf32>
    %54 = vector.shape_cast %53 : vector<1x1x32xf32> to vector<1x32xf32>
    %55 = vector.broadcast %54 : vector<1x32xf32> to vector<8x32xf32>
    %56 = arith.mulf %52, %55 : vector<8x32xf32>
    %c0_29 = arith.constant 0 : index
    %c0_30 = arith.constant 0 : index
    %c0_31 = arith.constant 0 : index
    %57 = vector.load %arg10[%c0_29, %c0_30, %c0_31] : memref<2x1x32xf32, #tpu.memory_space<vmem>>, vector<1x1x32xf32>
    %58 = vector.shape_cast %57 : vector<1x1x32xf32> to vector<1x32xf32>
    %59 = vector.broadcast %58 : vector<1x32xf32> to vector<8x32xf32>
    %60 = arith.addf %56, %59 : vector<8x32xf32>
    %61 = arith.truncf %60 : vector<8x32xf32> to vector<8x32xbf16>
    %c0_32 = arith.constant 0 : index
    %c0_33 = arith.constant 0 : index
    %c0_34 = arith.constant 0 : index
    %62 = vector.load %arg5[%c0_32, %c0_33, %c0_34] : memref<2x32x32xbf16, #tpu.memory_space<vmem>>, vector<1x32x32xbf16>
    %63 = vector.shape_cast %62 : vector<1x32x32xbf16> to vector<32x32xbf16>
    %cst_35 = arith.constant dense<0.000000e+00> : vector<8x32xf32>
    %64 = tpu.matmul %61, %63, %cst_35 {dimension_numbers = #tpu.dot_dimension_numbers<[1], [0], [0], [1], [0, 0, 1, 1], [], []>} : vector<8x32xbf16>, vector<32x32xbf16>, vector<8x32xf32> -> vector<8x32xf32>
    %c0_36 = arith.constant 0 : index
    %c0_37 = arith.constant 0 : index
    %c0_38 = arith.constant 0 : index
    %65 = vector.load %arg6[%c0_36, %c0_37, %c0_38] : memref<2x1x32xf32, #tpu.memory_space<vmem>>, vector<1x1x32xf32>
    %66 = vector.shape_cast %65 : vector<1x1x32xf32> to vector<1x32xf32>
    %67 = vector.broadcast %66 : vector<1x32xf32> to vector<8x32xf32>
    %68 = arith.addf %64, %67 : vector<8x32xf32>
    %cst_39 = arith.constant 0.000000e+00 : f32
    %69 = vector.broadcast %cst_39 : f32 to vector<8x32xf32>
    %70 = arith.cmpf oge, %68, %69 : vector<8x32xf32>
    %cst_40 = arith.constant 1.000000e-01 : f32
    %71 = vector.broadcast %cst_40 : f32 to vector<8x32xf32>
    %72 = arith.mulf %71, %68 : vector<8x32xf32>
    %73 = arith.select %70, %68, %72 : vector<8x32xi1>, vector<8x32xf32>
    %74 = arith.truncf %73 : vector<8x32xf32> to vector<8x32xbf16>
    %c0_41 = arith.constant 0 : index
    %c0_42 = arith.constant 0 : index
    %c0_43 = arith.constant 0 : index
    %75 = vector.load %arg7[%c0_41, %c0_42, %c0_43] : memref<2x32x32xbf16, #tpu.memory_space<vmem>>, vector<1x32x32xbf16>
    %76 = vector.shape_cast %75 : vector<1x32x32xbf16> to vector<32x32xbf16>
    %cst_44 = arith.constant dense<0.000000e+00> : vector<8x32xf32>
    %77 = tpu.matmul %74, %76, %cst_44 {dimension_numbers = #tpu.dot_dimension_numbers<[1], [0], [0], [1], [0, 0, 1, 1], [], []>} : vector<8x32xbf16>, vector<32x32xbf16>, vector<8x32xf32> -> vector<8x32xf32>
    %c0_45 = arith.constant 0 : index
    %c0_46 = arith.constant 0 : index
    %c0_47 = arith.constant 0 : index
    %78 = vector.load %arg8[%c0_45, %c0_46, %c0_47] : memref<2x1x32xf32, #tpu.memory_space<vmem>>, vector<1x1x32xf32>
    %79 = vector.shape_cast %78 : vector<1x1x32xf32> to vector<1x32xf32>
    %80 = vector.broadcast %79 : vector<1x32xf32> to vector<8x32xf32>
    %81 = arith.addf %77, %80 : vector<8x32xf32>
    %82 = arith.addf %60, %81 : vector<8x32xf32>
    %cst_48 = arith.constant dense<0.000000e+00> : vector<8xf32>
    %83 = vector.multi_reduction <add>, %82, %cst_48 [1] : vector<8x32xf32> to vector<8xf32>
    %84 = vector.shape_cast %83 : vector<8xf32> to vector<8x1xf32>
    %cst_49 = arith.constant 3.200000e+01 : f32
    %85 = vector.broadcast %cst_49 : f32 to vector<8x1xf32>
    %86 = arith.divf %84, %85 : vector<8x1xf32>
    %87 = vector.broadcast %86 : vector<8x1xf32> to vector<8x32xf32>
    %88 = arith.subf %82, %87 : vector<8x32xf32>
    %89 = arith.mulf %88, %88 : vector<8x32xf32>
    %cst_50 = arith.constant dense<0.000000e+00> : vector<8xf32>
    %90 = vector.multi_reduction <add>, %89, %cst_50 [1] : vector<8x32xf32> to vector<8xf32>
    %91 = vector.shape_cast %90 : vector<8xf32> to vector<8x1xf32>
    %cst_51 = arith.constant 3.200000e+01 : f32
    %92 = vector.broadcast %cst_51 : f32 to vector<8x1xf32>
    %93 = arith.divf %91, %92 : vector<8x1xf32>
    %94 = vector.broadcast %86 : vector<8x1xf32> to vector<8x32xf32>
    %95 = arith.subf %82, %94 : vector<8x32xf32>
    %cst_52 = arith.constant 9.99999974E-6 : f32
    %96 = vector.broadcast %cst_52 : f32 to vector<8x1xf32>
    %97 = arith.addf %93, %96 : vector<8x1xf32>
    %98 = math.rsqrt %97 : vector<8x1xf32>
    %99 = vector.broadcast %98 : vector<8x1xf32> to vector<8x32xf32>
    %100 = arith.mulf %95, %99 : vector<8x32xf32>
    %c0_53 = arith.constant 0 : index
    %c0_54 = arith.constant 0 : index
    %c0_55 = arith.constant 0 : index
    %101 = vector.load %arg11[%c0_53, %c0_54, %c0_55] : memref<2x1x32xf32, #tpu.memory_space<vmem>>, vector<1x1x32xf32>
    %102 = vector.shape_cast %101 : vector<1x1x32xf32> to vector<1x32xf32>
    %103 = vector.broadcast %102 : vector<1x32xf32> to vector<8x32xf32>
    %104 = arith.mulf %100, %103 : vector<8x32xf32>
    %c0_56 = arith.constant 0 : index
    %c0_57 = arith.constant 0 : index
    %c0_58 = arith.constant 0 : index
    %105 = vector.load %arg12[%c0_56, %c0_57, %c0_58] : memref<2x1x32xf32, #tpu.memory_space<vmem>>, vector<1x1x32xf32>
    %106 = vector.shape_cast %105 : vector<1x1x32xf32> to vector<1x32xf32>
    %107 = vector.broadcast %106 : vector<1x32xf32> to vector<8x32xf32>
    %108 = arith.addf %104, %107 : vector<8x32xf32>
    %109 = arith.truncf %108 : vector<8x32xf32> to vector<8x32xbf16>
    %110 = vector.shape_cast %109 : vector<8x32xbf16> to vector<1x8x32xbf16>
    %111 = vector.broadcast %110 : vector<1x8x32xbf16> to vector<8x8x32xbf16>
    %c1 = arith.constant 1 : index
    %c0_59 = arith.constant 0 : index
    %c0_60 = arith.constant 0 : index
    %c0_61 = arith.constant 0 : index
    %112 = vector.load %arg3[%c1, %c0_59, %c0_60, %c0_61] : memref<2x8x32x4xbf16, #tpu.memory_space<vmem>>, vector<1x8x32x4xbf16>
    %113 = vector.shape_cast %112 : vector<1x8x32x4xbf16> to vector<8x32x4xbf16>
    "tpu.trace_start"() <{level = 10 : i32, message = "hld,hde->hle"}> : () -> ()
    %cst_62 = arith.constant dense<0.000000e+00> : vector<8x8x4xf32>
    %114 = tpu.matmul %111, %113, %cst_62 {dimension_numbers = #tpu.dot_dimension_numbers<[2], [1], [1], [2], [0, 0, 0, 1, 1, 2], [0], [0]>} : vector<8x8x32xbf16>, vector<8x32x4xbf16>, vector<8x8x4xf32> -> vector<8x8x4xf32>
    "tpu.trace_stop"() : () -> ()
    %115 = arith.truncf %114 : vector<8x8x4xf32> to vector<8x8x4xbf16>
    "tpu.trace_start"() <{level = 10 : i32, message = "hqd,hkd->hqk"}> : () -> ()
    %cst_63 = arith.constant dense<0.000000e+00> : vector<8x8x8xf32>
    %116 = tpu.matmul %115, %115, %cst_63 {dimension_numbers = #tpu.dot_dimension_numbers<[2], [2], [1], [1], [0, 0, 0, 1, 1, 1], [0], [0]>} : vector<8x8x4xbf16>, vector<8x8x4xbf16>, vector<8x8x8xf32> -> vector<8x8x8xf32>
    "tpu.trace_stop"() : () -> ()
    %cst_64 = arith.constant 5.000000e-01 : f32
    %117 = vector.broadcast %cst_64 : f32 to vector<8x8x8xf32>
    %118 = arith.mulf %116, %117 : vector<8x8x8xf32>
    %119 = vector.broadcast %4 : vector<1x1x8xf32> to vector<8x8x8xf32>
    %120 = arith.addf %118, %119 : vector<8x8x8xf32>
    %cst_65 = arith.constant dense<0xFF800000> : vector<8x8xf32>
    %121 = vector.multi_reduction <maximumf>, %120, %cst_65 [2] : vector<8x8x8xf32> to vector<8x8xf32>
    %122 = vector.shape_cast %121 : vector<8x8xf32> to vector<8x8x1xf32>
    %123 = vector.broadcast %122 : vector<8x8x1xf32> to vector<8x8x8xf32>
    %124 = arith.subf %120, %123 : vector<8x8x8xf32>
    %125 = math.exp %124 : vector<8x8x8xf32>
    %cst_66 = arith.constant dense<0.000000e+00> : vector<8x8xf32>
    %126 = vector.multi_reduction <add>, %125, %cst_66 [2] : vector<8x8x8xf32> to vector<8x8xf32>
    %127 = vector.shape_cast %126 : vector<8x8xf32> to vector<8x8x1xf32>
    %128 = tpu.reciprocal %127 {approx = true} : vector<8x8x1xf32> -> vector<8x8x1xf32>
    %129 = vector.broadcast %128 : vector<8x8x1xf32> to vector<8x8x8xf32>
    %130 = arith.mulf %125, %129 : vector<8x8x8xf32>
    %131 = arith.truncf %130 : vector<8x8x8xf32> to vector<8x8x8xbf16>
    "tpu.trace_start"() <{level = 10 : i32, message = "hqk,hkd->hqd"}> : () -> ()
    %cst_67 = arith.constant dense<0.000000e+00> : vector<8x8x4xf32>
    %132 = tpu.matmul %131, %115, %cst_67 {dimension_numbers = #tpu.dot_dimension_numbers<[2], [1], [1], [2], [0, 0, 0, 1, 1, 2], [0], [0]>} : vector<8x8x8xbf16>, vector<8x8x4xbf16>, vector<8x8x4xf32> -> vector<8x8x4xf32>
    "tpu.trace_stop"() : () -> ()
    %133 = arith.truncf %132 : vector<8x8x4xf32> to vector<8x8x4xbf16>
    %c1_68 = arith.constant 1 : index
    %c0_69 = arith.constant 0 : index
    %c0_70 = arith.constant 0 : index
    %c0_71 = arith.constant 0 : index
    %134 = vector.load %arg4[%c1_68, %c0_69, %c0_70, %c0_71] : memref<2x8x4x32xbf16, #tpu.memory_space<vmem>>, vector<1x8x4x32xbf16>
    %135 = vector.shape_cast %134 : vector<1x8x4x32xbf16> to vector<8x4x32xbf16>
    "tpu.trace_start"() <{level = 10 : i32, message = "hqd,hde->hqe"}> : () -> ()
    %cst_72 = arith.constant dense<0.000000e+00> : vector<8x8x32xf32>
    %136 = tpu.matmul %133, %135, %cst_72 {dimension_numbers = #tpu.dot_dimension_numbers<[2], [1], [1], [2], [0, 0, 0, 1, 1, 2], [0], [0]>} : vector<8x8x4xbf16>, vector<8x4x32xbf16>, vector<8x8x32xf32> -> vector<8x8x32xf32>
    "tpu.trace_stop"() : () -> ()
    %cst_73 = arith.constant dense<0.000000e+00> : vector<8x32xf32>
    %137 = vector.multi_reduction <add>, %136, %cst_73 [0] : vector<8x8x32xf32> to vector<8x32xf32>
    %138 = arith.addf %108, %137 : vector<8x32xf32>
    %cst_74 = arith.constant dense<0.000000e+00> : vector<8xf32>
    %139 = vector.multi_reduction <add>, %138, %cst_74 [1] : vector<8x32xf32> to vector<8xf32>
    %140 = vector.shape_cast %139 : vector<8xf32> to vector<8x1xf32>
    %cst_75 = arith.constant 3.200000e+01 : f32
    %141 = vector.broadcast %cst_75 : f32 to vector<8x1xf32>
    %142 = arith.divf %140, %141 : vector<8x1xf32>
    %143 = vector.broadcast %142 : vector<8x1xf32> to vector<8x32xf32>
    %144 = arith.subf %138, %143 : vector<8x32xf32>
    %145 = arith.mulf %144, %144 : vector<8x32xf32>
    %cst_76 = arith.constant dense<0.000000e+00> : vector<8xf32>
    %146 = vector.multi_reduction <add>, %145, %cst_76 [1] : vector<8x32xf32> to vector<8xf32>
    %147 = vector.shape_cast %146 : vector<8xf32> to vector<8x1xf32>
    %cst_77 = arith.constant 3.200000e+01 : f32
    %148 = vector.broadcast %cst_77 : f32 to vector<8x1xf32>
    %149 = arith.divf %147, %148 : vector<8x1xf32>
    %150 = vector.broadcast %142 : vector<8x1xf32> to vector<8x32xf32>
    %151 = arith.subf %138, %150 : vector<8x32xf32>
    %cst_78 = arith.constant 9.99999974E-6 : f32
    %152 = vector.broadcast %cst_78 : f32 to vector<8x1xf32>
    %153 = arith.addf %149, %152 : vector<8x1xf32>
    %154 = math.rsqrt %153 : vector<8x1xf32>
    %155 = vector.broadcast %154 : vector<8x1xf32> to vector<8x32xf32>
    %156 = arith.mulf %151, %155 : vector<8x32xf32>
    %c1_79 = arith.constant 1 : index
    %c0_80 = arith.constant 0 : index
    %c0_81 = arith.constant 0 : index
    %157 = vector.load %arg9[%c1_79, %c0_80, %c0_81] : memref<2x1x32xf32, #tpu.memory_space<vmem>>, vector<1x1x32xf32>
    %158 = vector.shape_cast %157 : vector<1x1x32xf32> to vector<1x32xf32>
    %159 = vector.broadcast %158 : vector<1x32xf32> to vector<8x32xf32>
    %160 = arith.mulf %156, %159 : vector<8x32xf32>
    %c1_82 = arith.constant 1 : index
    %c0_83 = arith.constant 0 : index
    %c0_84 = arith.constant 0 : index
    %161 = vector.load %arg10[%c1_82, %c0_83, %c0_84] : memref<2x1x32xf32, #tpu.memory_space<vmem>>, vector<1x1x32xf32>
    %162 = vector.shape_cast %161 : vector<1x1x32xf32> to vector<1x32xf32>
    %163 = vector.broadcast %162 : vector<1x32xf32> to vector<8x32xf32>
    %164 = arith.addf %160, %163 : vector<8x32xf32>
    %165 = arith.truncf %164 : vector<8x32xf32> to vector<8x32xbf16>
    %c1_85 = arith.constant 1 : index
    %c0_86 = arith.constant 0 : index
    %c0_87 = arith.constant 0 : index
    %166 = vector.load %arg5[%c1_85, %c0_86, %c0_87] : memref<2x32x32xbf16, #tpu.memory_space<vmem>>, vector<1x32x32xbf16>
    %167 = vector.shape_cast %166 : vector<1x32x32xbf16> to vector<32x32xbf16>
    %cst_88 = arith.constant dense<0.000000e+00> : vector<8x32xf32>
    %168 = tpu.matmul %165, %167, %cst_88 {dimension_numbers = #tpu.dot_dimension_numbers<[1], [0], [0], [1], [0, 0, 1, 1], [], []>} : vector<8x32xbf16>, vector<32x32xbf16>, vector<8x32xf32> -> vector<8x32xf32>
    %c1_89 = arith.constant 1 : index
    %c0_90 = arith.constant 0 : index
    %c0_91 = arith.constant 0 : index
    %169 = vector.load %arg6[%c1_89, %c0_90, %c0_91] : memref<2x1x32xf32, #tpu.memory_space<vmem>>, vector<1x1x32xf32>
    %170 = vector.shape_cast %169 : vector<1x1x32xf32> to vector<1x32xf32>
    %171 = vector.broadcast %170 : vector<1x32xf32> to vector<8x32xf32>
    %172 = arith.addf %168, %171 : vector<8x32xf32>
    %cst_92 = arith.constant 0.000000e+00 : f32
    %173 = vector.broadcast %cst_92 : f32 to vector<8x32xf32>
    %174 = arith.cmpf oge, %172, %173 : vector<8x32xf32>
    %cst_93 = arith.constant 1.000000e-01 : f32
    %175 = vector.broadcast %cst_93 : f32 to vector<8x32xf32>
    %176 = arith.mulf %175, %172 : vector<8x32xf32>
    %177 = arith.select %174, %172, %176 : vector<8x32xi1>, vector<8x32xf32>
    %178 = arith.truncf %177 : vector<8x32xf32> to vector<8x32xbf16>
    %c1_94 = arith.constant 1 : index
    %c0_95 = arith.constant 0 : index
    %c0_96 = arith.constant 0 : index
    %179 = vector.load %arg7[%c1_94, %c0_95, %c0_96] : memref<2x32x32xbf16, #tpu.memory_space<vmem>>, vector<1x32x32xbf16>
    %180 = vector.shape_cast %179 : vector<1x32x32xbf16> to vector<32x32xbf16>
    %cst_97 = arith.constant dense<0.000000e+00> : vector<8x32xf32>
    %181 = tpu.matmul %178, %180, %cst_97 {dimension_numbers = #tpu.dot_dimension_numbers<[1], [0], [0], [1], [0, 0, 1, 1], [], []>} : vector<8x32xbf16>, vector<32x32xbf16>, vector<8x32xf32> -> vector<8x32xf32>
    %c1_98 = arith.constant 1 : index
    %c0_99 = arith.constant 0 : index
    %c0_100 = arith.constant 0 : index
    %182 = vector.load %arg8[%c1_98, %c0_99, %c0_100] : memref<2x1x32xf32, #tpu.memory_space<vmem>>, vector<1x1x32xf32>
    %183 = vector.shape_cast %182 : vector<1x1x32xf32> to vector<1x32xf32>
    %184 = vector.broadcast %183 : vector<1x32xf32> to vector<8x32xf32>
    %185 = arith.addf %181, %184 : vector<8x32xf32>
    %186 = arith.addf %164, %185 : vector<8x32xf32>
    %cst_101 = arith.constant dense<0.000000e+00> : vector<8xf32>
    %187 = vector.multi_reduction <add>, %186, %cst_101 [1] : vector<8x32xf32> to vector<8xf32>
    %188 = vector.shape_cast %187 : vector<8xf32> to vector<8x1xf32>
    %cst_102 = arith.constant 3.200000e+01 : f32
    %189 = vector.broadcast %cst_102 : f32 to vector<8x1xf32>
    %190 = arith.divf %188, %189 : vector<8x1xf32>
    %191 = vector.broadcast %190 : vector<8x1xf32> to vector<8x32xf32>
    %192 = arith.subf %186, %191 : vector<8x32xf32>
    %193 = arith.mulf %192, %192 : vector<8x32xf32>
    %cst_103 = arith.constant dense<0.000000e+00> : vector<8xf32>
    %194 = vector.multi_reduction <add>, %193, %cst_103 [1] : vector<8x32xf32> to vector<8xf32>
    %195 = vector.shape_cast %194 : vector<8xf32> to vector<8x1xf32>
    %cst_104 = arith.constant 3.200000e+01 : f32
    %196 = vector.broadcast %cst_104 : f32 to vector<8x1xf32>
    %197 = arith.divf %195, %196 : vector<8x1xf32>
    %198 = vector.broadcast %190 : vector<8x1xf32> to vector<8x32xf32>
    %199 = arith.subf %186, %198 : vector<8x32xf32>
    %cst_105 = arith.constant 9.99999974E-6 : f32
    %200 = vector.broadcast %cst_105 : f32 to vector<8x1xf32>
    %201 = arith.addf %197, %200 : vector<8x1xf32>
    %202 = math.rsqrt %201 : vector<8x1xf32>
    %203 = vector.broadcast %202 : vector<8x1xf32> to vector<8x32xf32>
    %204 = arith.mulf %199, %203 : vector<8x32xf32>
    %c1_106 = arith.constant 1 : index
    %c0_107 = arith.constant 0 : index
    %c0_108 = arith.constant 0 : index
    %205 = vector.load %arg11[%c1_106, %c0_107, %c0_108] : memref<2x1x32xf32, #tpu.memory_space<vmem>>, vector<1x1x32xf32>
    %206 = vector.shape_cast %205 : vector<1x1x32xf32> to vector<1x32xf32>
    %207 = vector.broadcast %206 : vector<1x32xf32> to vector<8x32xf32>
    %208 = arith.mulf %204, %207 : vector<8x32xf32>
    %c1_109 = arith.constant 1 : index
    %c0_110 = arith.constant 0 : index
    %c0_111 = arith.constant 0 : index
    %209 = vector.load %arg12[%c1_109, %c0_110, %c0_111] : memref<2x1x32xf32, #tpu.memory_space<vmem>>, vector<1x1x32xf32>
    %210 = vector.shape_cast %209 : vector<1x1x32xf32> to vector<1x32xf32>
    %211 = vector.broadcast %210 : vector<1x32xf32> to vector<8x32xf32>
    %212 = arith.addf %208, %211 : vector<8x32xf32>
    %c0_112 = arith.constant 0 : index
    %c0_113 = arith.constant 0 : index
    %c0_114 = arith.constant 0 : index
    %213 = vector.load %arg13[%c0_112, %c0_113, %c0_114] : memref<1x8x32xf32, #tpu.memory_space<vmem>>, vector<1x8x32xf32>
    %214 = vector.shape_cast %213 : vector<1x8x32xf32> to vector<8x32xf32>
    %215 = vector.shape_cast %212 : vector<8x32xf32> to vector<1x8x32xf32>
    tpu.vector_store %arg13[%c0_112, %c0_113, %c0_114], %215 {strides = array<i32>} : memref<1x8x32xf32, #tpu.memory_space<vmem>>, vector<1x8x32xf32>,
    return
  }
  func.func @transform_0(%arg0: i32) -> (i32, i32, i32) {
    %c0_i32 = arith.constant 0 : i32
    %c0_i32_0 = arith.constant 0 : i32
    %c0_i32_1 = arith.constant 0 : i32
    return %arg0, %c0_i32, %c0_i32_0 : i32, i32, i32
  }
  func.func @transform_1(%arg0: i32) -> (i32, i32, i32) {
    %c0_i32 = arith.constant 0 : i32
    %c0_i32_0 = arith.constant 0 : i32
    %c0_i32_1 = arith.constant 0 : i32
    return %arg0, %c0_i32, %c0_i32_0 : i32, i32, i32
  }
  func.func @transform_2(%arg0: i32) -> (i32, i32, i32, i32) {
    %c0_i32 = arith.constant 0 : i32
    %c0_i32_0 = arith.constant 0 : i32
    %c0_i32_1 = arith.constant 0 : i32
    %c0_i32_2 = arith.constant 0 : i32
    %c0_i32_3 = arith.constant 0 : i32
    return %c0_i32, %c0_i32_0, %c0_i32_1, %c0_i32_2 : i32, i32, i32, i32
  }
  func.func @transform_3(%arg0: i32) -> (i32, i32, i32, i32) {
    %c0_i32 = arith.constant 0 : i32
    %c0_i32_0 = arith.constant 0 : i32
    %c0_i32_1 = arith.constant 0 : i32
    %c0_i32_2 = arith.constant 0 : i32
    %c0_i32_3 = arith.constant 0 : i32
    return %c0_i32, %c0_i32_0, %c0_i32_1, %c0_i32_2 : i32, i32, i32, i32
  }
  func.func @transform_4(%arg0: i32) -> (i32, i32, i32) {
    %c0_i32 = arith.constant 0 : i32
    %c0_i32_0 = arith.constant 0 : i32
    %c0_i32_1 = arith.constant 0 : i32
    %c0_i32_2 = arith.constant 0 : i32
    return %c0_i32, %c0_i32_0, %c0_i32_1 : i32, i32, i32
  }
  func.func @transform_5(%arg0: i32) -> (i32, i32, i32) {
    %c0_i32 = arith.constant 0 : i32
    %c0_i32_0 = arith.constant 0 : i32
    %c0_i32_1 = arith.constant 0 : i32
    %c0_i32_2 = arith.constant 0 : i32
    return %c0_i32, %c0_i32_0, %c0_i32_1 : i32, i32, i32
  }
  func.func @transform_6(%arg0: i32) -> (i32, i32, i32) {
    %c0_i32 = arith.constant 0 : i32
    %c0_i32_0 = arith.constant 0 : i32
    %c0_i32_1 = arith.constant 0 : i32
    %c0_i32_2 = arith.constant 0 : i32
    return %c0_i32, %c0_i32_0, %c0_i32_1 : i32, i32, i32
  }
  func.func @transform_7(%arg0: i32) -> (i32, i32, i32) {
    %c0_i32 = arith.constant 0 : i32
    %c0_i32_0 = arith.constant 0 : i32
    %c0_i32_1 = arith.constant 0 : i32
    %c0_i32_2 = arith.constant 0 : i32
    return %c0_i32, %c0_i32_0, %c0_i32_1 : i32, i32, i32
  }
  func.func @transform_8(%arg0: i32) -> (i32, i32, i32) {
    %c0_i32 = arith.constant 0 : i32
    %c0_i32_0 = arith.constant 0 : i32
    %c0_i32_1 = arith.constant 0 : i32
    %c0_i32_2 = arith.constant 0 : i32
    return %c0_i32, %c0_i32_0, %c0_i32_1 : i32, i32, i32
  }
  func.func @transform_9(%arg0: i32) -> (i32, i32, i32) {
    %c0_i32 = arith.constant 0 : i32
    %c0_i32_0 = arith.constant 0 : i32
    %c0_i32_1 = arith.constant 0 : i32
    %c0_i32_2 = arith.constant 0 : i32
    return %c0_i32, %c0_i32_0, %c0_i32_1 : i32, i32, i32
  }
  func.func @transform_10(%arg0: i32) -> (i32, i32, i32) {
    %c0_i32 = arith.constant 0 : i32
    %c0_i32_0 = arith.constant 0 : i32
    %c0_i32_1 = arith.constant 0 : i32
    %c0_i32_2 = arith.constant 0 : i32
    return %c0_i32, %c0_i32_0, %c0_i32_1 : i32, i32, i32
  }
  func.func @transform_11(%arg0: i32) -> (i32, i32, i32) {
    %c0_i32 = arith.constant 0 : i32
    %c0_i32_0 = arith.constant 0 : i32
    %c0_i32_1 = arith.constant 0 : i32
    %c0_i32_2 = arith.constant 0 : i32
    return %c0_i32, %c0_i32_0, %c0_i32_1 : i32, i32, i32
  }
  func.func @transform_12(%arg0: i32) -> (i32, i32, i32) {
    %c0_i32 = arith.constant 0 : i32
    %c0_i32_0 = arith.constant 0 : i32
    %c0_i32_1 = arith.constant 0 : i32
    return %arg0, %c0_i32, %c0_i32_0 : i32, i32, i32
  }
}

</mosaic_0001>

<llo_original>
// kernel: tpu_custom_call.1
$region0: #{tpu_custom_call.1}
  #allocation0 [shape = 'u32[]', space=smem, size = 0x4, offset = 0x4, fixed_abs, tag = 'smem constant byte address 0x4 - core index']
  #allocation1 [shape = 'u32[144,128]{1,0:T(1,128)}', space=vmem, size = 0x12000, scoped, tag = 'internal scratch']
  %s0 = inlined_call_operand.vmem [shape: f32[2,8,32], index: 0, kind: input, shape index: {}]
  %s1 = inlined_call_operand.vmem [shape: f32[2,1,8], index: 1, kind: input, shape index: {}]
  %s2 = inlined_call_operand.vmem [shape: bf16[2,8,32,4], index: 2, kind: input, shape index: {}]
  %s3 = inlined_call_operand.vmem [shape: bf16[2,8,4,32], index: 3, kind: input, shape index: {}]
  %s4 = inlined_call_operand.vmem [shape: bf16[2,32,32], index: 4, kind: input, shape index: {}]
  %s5 = inlined_call_operand.vmem [shape: f32[2,1,32], index: 5, kind: input, shape index: {}]
  %s6 = inlined_call_operand.vmem [shape: bf16[2,32,32], index: 6, kind: input, shape index: {}]
  %s7 = inlined_call_operand.vmem [shape: f32[2,1,32], index: 7, kind: input, shape index: {}]
  %s8 = inlined_call_operand.vmem [shape: f32[2,1,32], index: 8, kind: input, shape index: {}]
  %s9 = inlined_call_operand.vmem [shape: f32[2,1,32], index: 9, kind: input, shape index: {}]
  %s10 = inlined_call_operand.vmem [shape: f32[2,1,32], index: 10, kind: input, shape index: {}]
  %s11 = inlined_call_operand.vmem [shape: f32[2,1,32], index: 11, kind: input, shape index: {}]
  %s12 = inlined_call_operand.hbm [shape: f32[2,8,32], index: 12, kind: output, shape index: {}]
  %s13 = sld [smem:[#allocation0]]
  $region81: #{tpu_custom_call.1} parent=0
    _
  %s15 = ssub.s32 1, %s13
  %s16 = scalar_select 0, %s15, %s13
  $region1: #{tpu_custom_call.1} parent=0
    #allocation2 [shape = 'u8[8192]{0}', space=vmem, size = 0x2000, scoped, tag = 'output window, operand 0']
    #allocation3 [shape = 's32[2]{0}', space=sflag, size = 0x8, scoped, tag = 'scoped memory for tpu_custom_call.1']
    %17 = vsyncpa [#allocation3], 0
    %s18 = scalar_lea.sflag [#allocation3], 1
    %19 = vsyncpa %s18, 0
    loop: start=0, step=1, limit=4
    $region2: #{tpu_custom_call.1} parent=1 // loop_pre_header
      _
    $region3: #{tpu_custom_call.1} parent=1 // loop_header
      %s21 = sphi 0, %s25
      %p22 = scmp.ge.s32.totalorder %s21, 4
      %s31 = sphi 0, %s33
      %s34 = sphi 0, %s31
      %s35 = sphi 0, %s34
      %s51 = sphi 0, %s35
      %s57 = sphi 0, %s59
      %s60 = sphi 0, %s57
      %s61 = sphi 0, %s60
      %s77 = sphi 0, %s61
      %s81 = sphi 0, %s81
      %s83 = sphi 0, %s81
      %s84 = sphi 0, %s83
      %s98 = sphi 0, %s84
      %s102 = sphi 0, %s102
      %s104 = sphi 0, %s102
      %s105 = sphi 0, %s104
      %s119 = sphi 0, %s105
      %s123 = sphi 0, %s123
      %s125 = sphi 0, %s123
      %s126 = sphi 0, %s125
      %s140 = sphi 0, %s126
      %s144 = sphi 0, %s144
      %s146 = sphi 0, %s144
      %s147 = sphi 0, %s146
      %s161 = sphi 0, %s147
      %s165 = sphi 0, %s165
      %s167 = sphi 0, %s165
      %s168 = sphi 0, %s167
      %s182 = sphi 0, %s168
      %s186 = sphi 0, %s186
      %s188 = sphi 0, %s186
      %s189 = sphi 0, %s188
      %s203 = sphi 0, %s189
      %s207 = sphi 0, %s207
      %s209 = sphi 0, %s207
      %s210 = sphi 0, %s209
      %s224 = sphi 0, %s210
      %s228 = sphi 0, %s228
      %s230 = sphi 0, %s228
      %s231 = sphi 0, %s230
      %s245 = sphi 0, %s231
      %s249 = sphi 0, %s249
      %s251 = sphi 0, %s249
      %s252 = sphi 0, %s251
      %s266 = sphi 0, %s252
      %s270 = sphi 0, %s270
      %s272 = sphi 0, %s270
      %s273 = sphi 0, %s272
      %s287 = sphi 0, %s273
      %s293 = sphi 0, %s295
      %s296 = sphi 0, %s293
      %s297 = sphi 0, %s296
      %s313 = sphi 0, %s297
    $region4: #{tpu_custom_call.1} parent=1 // loop_header_branch
      %24 = sbr.rel (%p22) target = $region8
    $region5: #{tpu_custom_call.1} parent=1 // loop_body
      %s26 = ssub.s32 %s21, 1
      %s27 = ssub.s32 %s21, 2
      %s28 = sadd.s32 %s21, 1
      %s29 = ssub.s32 %s21, %s28
      %p30 = scmp.eq.s32.totalorder %s29, 0
      %s32 = sadd.s32 %s31, 1
      %s33 = scalar_select %p30, %s31, %s32
      %p36 = pneg %p30
      %p37 = scmp.eq.s32.totalorder %s21, 1
      %p38 = por %p36, %p37
      %p39 = scmp.ne.s32.totalorder %s31, %s34
      %p40 = scmp.eq.s32.totalorder %s21, 0
      %p41 = por %p39, %p40
      %p42 = scmp.ne.s32.totalorder %s31, %s34
      %p43 = scmp.eq.s32.totalorder %s26, 1
      %p44 = por %p42, %p43
      %p45 = scmp.ne.s32.totalorder %s34, %s35
      %p46 = scmp.eq.s32.totalorder %s26, 0
      %p47 = por %p45, %p46
      %p48 = scmp.ne.s32.totalorder %s34, %s35
      %p49 = scmp.eq.s32.totalorder %s27, 1
      %p50 = por %p48, %p49
      %p52 = scmp.ne.s32.totalorder %s35, %s51
      %p53 = scmp.eq.s32.totalorder %s27, 0
      %p54 = por %p52, %p53
      %s55 = ssub.s32 %s21, %s28
      %p56 = scmp.eq.s32.totalorder %s55, 0
      %s58 = sadd.s32 %s57, 1
      %s59 = scalar_select %p56, %s57, %s58
      %p62 = pneg %p56
      %p63 = scmp.eq.s32.totalorder %s21, 1
      %p64 = por %p62, %p63
      %p65 = scmp.ne.s32.totalorder %s57, %s60
      %p66 = scmp.eq.s32.totalorder %s21, 0
      %p67 = por %p65, %p66
      %p68 = scmp.ne.s32.totalorder %s57, %s60
      %p69 = scmp.eq.s32.totalorder %s26, 1
      %p70 = por %p68, %p69
      %p71 = scmp.ne.s32.totalorder %s60, %s61
      %p72 = scmp.eq.s32.totalorder %s26, 0
      %p73 = por %p71, %p72
      %p74 = scmp.ne.s32.totalorder %s60, %s61
      %p75 = scmp.eq.s32.totalorder %s27, 1
      %p76 = por %p74, %p75
      %p78 = scmp.ne.s32.totalorder %s61, %s77
      %p79 = scmp.eq.s32.totalorder %s27, 0
      %p80 = por %p78, %p79
      %s82 = sadd.s32 %s81, 1
      %p85 = scmp.eq.s32.totalorder %s21, 1
      %p86 = scmp.ne.s32.totalorder %s81, %s83
      %p87 = scmp.eq.s32.totalorder %s21, 0
      %p88 = por %p86, %p87
      %p89 = scmp.ne.s32.totalorder %s81, %s83
      %p90 = scmp.eq.s32.totalorder %s26, 1
      %p91 = por %p89, %p90
      %p92 = scmp.ne.s32.totalorder %s83, %s84
      %p93 = scmp.eq.s32.totalorder %s26, 0
      %p94 = por %p92, %p93
      %p95 = scmp.ne.s32.totalorder %s83, %s84
      %p96 = scmp.eq.s32.totalorder %s27, 1
      %p97 = por %p95, %p96
      %p99 = scmp.ne.s32.totalorder %s84, %s98
      %p100 = scmp.eq.s32.totalorder %s27, 0
      %p101 = por %p99, %p100
      %s103 = sadd.s32 %s102, 1
      %p106 = scmp.eq.s32.totalorder %s21, 1
      %p107 = scmp.ne.s32.totalorder %s102, %s104
      %p108 = scmp.eq.s32.totalorder %s21, 0
      %p109 = por %p107, %p108
      %p110 = scmp.ne.s32.totalorder %s102, %s104
      %p111 = scmp.eq.s32.totalorder %s26, 1
      %p112 = por %p110, %p111
      %p113 = scmp.ne.s32.totalorder %s104, %s105
      %p114 = scmp.eq.s32.totalorder %s26, 0
      %p115 = por %p113, %p114
      %p116 = scmp.ne.s32.totalorder %s104, %s105
      %p117 = scmp.eq.s32.totalorder %s27, 1
      %p118 = por %p116, %p117
      %p120 = scmp.ne.s32.totalorder %s105, %s119
      %p121 = scmp.eq.s32.totalorder %s27, 0
      %p122 = por %p120, %p121
      %s124 = sadd.s32 %s123, 1
      %p127 = scmp.eq.s32.totalorder %s21, 1
      %p128 = scmp.ne.s32.totalorder %s123, %s125
      %p129 = scmp.eq.s32.totalorder %s21, 0
      %p130 = por %p128, %p129
      %p131 = scmp.ne.s32.totalorder %s123, %s125
      %p132 = scmp.eq.s32.totalorder %s26, 1
      %p133 = por %p131, %p132
      %p134 = scmp.ne.s32.totalorder %s125, %s126
      %p135 = scmp.eq.s32.totalorder %s26, 0
      %p136 = por %p134, %p135
      %p137 = scmp.ne.s32.totalorder %s125, %s126
      %p138 = scmp.eq.s32.totalorder %s27, 1
      %p139 = por %p137, %p138
      %p141 = scmp.ne.s32.totalorder %s126, %s140
      %p142 = scmp.eq.s32.totalorder %s27, 0
      %p143 = por %p141, %p142
      %s145 = sadd.s32 %s144, 1
      %p148 = scmp.eq.s32.totalorder %s21, 1
      %p149 = scmp.ne.s32.totalorder %s144, %s146
      %p150 = scmp.eq.s32.totalorder %s21, 0
      %p151 = por %p149, %p150
      %p152 = scmp.ne.s32.totalorder %s144, %s146
      %p153 = scmp.eq.s32.totalorder %s26, 1
      %p154 = por %p152, %p153
      %p155 = scmp.ne.s32.totalorder %s146, %s147
      %p156 = scmp.eq.s32.totalorder %s26, 0
      %p157 = por %p155, %p156
      %p158 = scmp.ne.s32.totalorder %s146, %s147
      %p159 = scmp.eq.s32.totalorder %s27, 1
      %p160 = por %p158, %p159
      %p162 = scmp.ne.s32.totalorder %s147, %s161
      %p163 = scmp.eq.s32.totalorder %s27, 0
      %p164 = por %p162, %p163
      %s166 = sadd.s32 %s165, 1
      %p169 = scmp.eq.s32.totalorder %s21, 1
      %p170 = scmp.ne.s32.totalorder %s165, %s167
      %p171 = scmp.eq.s32.totalorder %s21, 0
      %p172 = por %p170, %p171
      %p173 = scmp.ne.s32.totalorder %s165, %s167
      %p174 = scmp.eq.s32.totalorder %s26, 1
      %p175 = por %p173, %p174
      %p176 = scmp.ne.s32.totalorder %s167, %s168
      %p177 = scmp.eq.s32.totalorder %s26, 0
      %p178 = por %p176, %p177
      %p179 = scmp.ne.s32.totalorder %s167, %s168
      %p180 = scmp.eq.s32.totalorder %s27, 1
      %p181 = por %p179, %p180
      %p183 = scmp.ne.s32.totalorder %s168, %s182
      %p184 = scmp.eq.s32.totalorder %s27, 0
      %p185 = por %p183, %p184
      %s187 = sadd.s32 %s186, 1
      %p190 = scmp.eq.s32.totalorder %s21, 1
      %p191 = scmp.ne.s32.totalorder %s186, %s188
      %p192 = scmp.eq.s32.totalorder %s21, 0
      %p193 = por %p191, %p192
      %p194 = scmp.ne.s32.totalorder %s186, %s188
      %p195 = scmp.eq.s32.totalorder %s26, 1
      %p196 = por %p194, %p195
      %p197 = scmp.ne.s32.totalorder %s188, %s189
      %p198 = scmp.eq.s32.totalorder %s26, 0
      %p199 = por %p197, %p198
      %p200 = scmp.ne.s32.totalorder %s188, %s189
      %p201 = scmp.eq.s32.totalorder %s27, 1
      %p202 = por %p200, %p201
      %p204 = scmp.ne.s32.totalorder %s189, %s203
      %p205 = scmp.eq.s32.totalorder %s27, 0
      %p206 = por %p204, %p205
      %s208 = sadd.s32 %s207, 1
      %p211 = scmp.eq.s32.totalorder %s21, 1
      %p212 = scmp.ne.s32.totalorder %s207, %s209
      %p213 = scmp.eq.s32.totalorder %s21, 0
      %p214 = por %p212, %p213
      %p215 = scmp.ne.s32.totalorder %s207, %s209
      %p216 = scmp.eq.s32.totalorder %s26, 1
      %p217 = por %p215, %p216
      %p218 = scmp.ne.s32.totalorder %s209, %s210
      %p219 = scmp.eq.s32.totalorder %s26, 0
      %p220 = por %p218, %p219
      %p221 = scmp.ne.s32.totalorder %s209, %s210
      %p222 = scmp.eq.s32.totalorder %s27, 1
      %p223 = por %p221, %p222
      %p225 = scmp.ne.s32.totalorder %s210, %s224
      %p226 = scmp.eq.s32.totalorder %s27, 0
      %p227 = por %p225, %p226
      %s229 = sadd.s32 %s228, 1
      %p232 = scmp.eq.s32.totalorder %s21, 1
      %p233 = scmp.ne.s32.totalorder %s228, %s230
      %p234 = scmp.eq.s32.totalorder %s21, 0
      %p235 = por %p233, %p234
      %p236 = scmp.ne.s32.totalorder %s228, %s230
      %p237 = scmp.eq.s32.totalorder %s26, 1
      %p238 = por %p236, %p237
      %p239 = scmp.ne.s32.totalorder %s230, %s231
      %p240 = scmp.eq.s32.totalorder %s26, 0
      %p241 = por %p239, %p240
      %p242 = scmp.ne.s32.totalorder %s230, %s231
      %p243 = scmp.eq.s32.totalorder %s27, 1
      %p244 = por %p242, %p243
      %p246 = scmp.ne.s32.totalorder %s231, %s245
      %p247 = scmp.eq.s32.totalorder %s27, 0
      %p248 = por %p246, %p247
      %s250 = sadd.s32 %s249, 1
      %p253 = scmp.eq.s32.totalorder %s21, 1
      %p254 = scmp.ne.s32.totalorder %s249, %s251
      %p255 = scmp.eq.s32.totalorder %s21, 0
      %p256 = por %p254, %p255
      %p257 = scmp.ne.s32.totalorder %s249, %s251
      %p258 = scmp.eq.s32.totalorder %s26, 1
      %p259 = por %p257, %p258
      %p260 = scmp.ne.s32.totalorder %s251, %s252
      %p261 = scmp.eq.s32.totalorder %s26, 0
      %p262 = por %p260, %p261
      %p263 = scmp.ne.s32.totalorder %s251, %s252
      %p264 = scmp.eq.s32.totalorder %s27, 1
      %p265 = por %p263, %p264
      %p267 = scmp.ne.s32.totalorder %s252, %s266
      %p268 = scmp.eq.s32.totalorder %s27, 0
      %p269 = por %p267, %p268
      %s271 = sadd.s32 %s270, 1
      %p274 = scmp.eq.s32.totalorder %s21, 1
      %p275 = scmp.ne.s32.totalorder %s270, %s272
      %p276 = scmp.eq.s32.totalorder %s21, 0
      %p277 = por %p275, %p276
      %p278 = scmp.ne.s32.totalorder %s270, %s272
      %p279 = scmp.eq.s32.totalorder %s26, 1
      %p280 = por %p278, %p279
      %p281 = scmp.ne.s32.totalorder %s272, %s273
      %p282 = scmp.eq.s32.totalorder %s26, 0
      %p283 = por %p281, %p282
      %p284 = scmp.ne.s32.totalorder %s272, %s273
      %p285 = scmp.eq.s32.totalorder %s27, 1
      %p286 = por %p284, %p285
      %p288 = scmp.ne.s32.totalorder %s273, %s287
      %p289 = scmp.eq.s32.totalorder %s27, 0
      %p290 = por %p288, %p289
      %s291 = ssub.s32 %s21, %s28
      %p292 = scmp.eq.s32.totalorder %s291, 0
      %s294 = sadd.s32 %s293, 1
      %s295 = scalar_select %p292, %s293, %s294
      %p298 = pneg %p292
      %p299 = scmp.eq.s32.totalorder %s21, 1
      %p300 = por %p298, %p299
      %p301 = scmp.ne.s32.totalorder %s293, %s296
      %p302 = scmp.eq.s32.totalorder %s21, 0
      %p303 = por %p301, %p302
      %p304 = scmp.ne.s32.totalorder %s293, %s296
      %p305 = scmp.eq.s32.totalorder %s26, 1
      %p306 = por %p304, %p305
      %p307 = scmp.ne.s32.totalorder %s296, %s297
      %p308 = scmp.eq.s32.totalorder %s26, 0
      %p309 = por %p307, %p308
      %p310 = scmp.ne.s32.totalorder %s296, %s297
      %p311 = scmp.eq.s32.totalorder %s27, 1
      %p312 = por %p310, %p311
      %p314 = scmp.ne.s32.totalorder %s297, %s313
      %p315 = scmp.eq.s32.totalorder %s27, 0
      %p316 = por %p314, %p315
      %p317 = scmp.le.s32.totalorder 1, %s21
      %p318 = scmp.lt.s32.totalorder %s21, 3
      %p319 = pnand %p317, %p318
      %p320 = pneg %p319
      // Predicated region
      $region9: #{tpu_custom_call.1} parent=5 // pred_check
        _
      $region10: #{tpu_custom_call.1} parent=5 // pred_check_branch
        %322 = sbr.rel (%p319) target = $region12
      $region11: #{tpu_custom_call.1} parent=5 // pred_region
        %s323 = ssub.s32 %s21, 1
        // Predicated region
        $region13: #{tpu_custom_call.1} parent=11 // pred_check
          %p324 = pneg %p94
        $region14: #{tpu_custom_call.1} parent=11 // pred_check_branch
          %326 = sbr.rel (%p324) target = $region16
        $region15: #{tpu_custom_call.1} parent=11 // pred_region
          _
        $region16: #{tpu_custom_call.1} parent=11 // pred_fallthru
          _
        // Predicated region
        $region17: #{tpu_custom_call.1} parent=11 // pred_check
          %p327 = pneg %p115
        $region18: #{tpu_custom_call.1} parent=11 // pred_check_branch
          %329 = sbr.rel (%p327) target = $region20
        $region19: #{tpu_custom_call.1} parent=11 // pred_region
          _
        $region20: #{tpu_custom_call.1} parent=11 // pred_fallthru
          _
        // Predicated region
        $region21: #{tpu_custom_call.1} parent=11 // pred_check
          %p330 = pneg %p136
        $region22: #{tpu_custom_call.1} parent=11 // pred_check_branch
          %332 = sbr.rel (%p330) target = $region24
        $region23: #{tpu_custom_call.1} parent=11 // pred_region
          _
        $region24: #{tpu_custom_call.1} parent=11 // pred_fallthru
          _
        // Predicated region
        $region25: #{tpu_custom_call.1} parent=11 // pred_check
          %p333 = pneg %p157
        $region26: #{tpu_custom_call.1} parent=11 // pred_check_branch
          %335 = sbr.rel (%p333) target = $region28
        $region27: #{tpu_custom_call.1} parent=11 // pred_region
          _
        $region28: #{tpu_custom_call.1} parent=11 // pred_fallthru
          _
        // Predicated region
        $region29: #{tpu_custom_call.1} parent=11 // pred_check
          %p336 = pneg %p178
        $region30: #{tpu_custom_call.1} parent=11 // pred_check_branch
          %338 = sbr.rel (%p336) target = $region32
        $region31: #{tpu_custom_call.1} parent=11 // pred_region
          _
        $region32: #{tpu_custom_call.1} parent=11 // pred_fallthru
          _
        // Predicated region
        $region33: #{tpu_custom_call.1} parent=11 // pred_check
          %p339 = pneg %p199
        $region34: #{tpu_custom_call.1} parent=11 // pred_check_branch
          %341 = sbr.rel (%p339) target = $region36
        $region35: #{tpu_custom_call.1} parent=11 // pred_region
          _
        $region36: #{tpu_custom_call.1} parent=11 // pred_fallthru
          _
        // Predicated region
        $region37: #{tpu_custom_call.1} parent=11 // pred_check
          %p342 = pneg %p220
        $region38: #{tpu_custom_call.1} parent=11 // pred_check_branch
          %344 = sbr.rel (%p342) target = $region40
        $region39: #{tpu_custom_call.1} parent=11 // pred_region
          _
        $region40: #{tpu_custom_call.1} parent=11 // pred_fallthru
          _
        // Predicated region
        $region41: #{tpu_custom_call.1} parent=11 // pred_check
          %p345 = pneg %p241
        $region42: #{tpu_custom_call.1} parent=11 // pred_check_branch
          %347 = sbr.rel (%p345) target = $region44
        $region43: #{tpu_custom_call.1} parent=11 // pred_region
          _
        $region44: #{tpu_custom_call.1} parent=11 // pred_fallthru
          _
        // Predicated region
        $region45: #{tpu_custom_call.1} parent=11 // pred_check
          %p348 = pneg %p262
        $region46: #{tpu_custom_call.1} parent=11 // pred_check_branch
          %350 = sbr.rel (%p348) target = $region48
        $region47: #{tpu_custom_call.1} parent=11 // pred_region
          _
        $region48: #{tpu_custom_call.1} parent=11 // pred_fallthru
          _
        // Predicated region
        $region49: #{tpu_custom_call.1} parent=11 // pred_check
          %p351 = pneg %p283
        $region50: #{tpu_custom_call.1} parent=11 // pred_check_branch
          %353 = sbr.rel (%p351) target = $region52
        $region51: #{tpu_custom_call.1} parent=11 // pred_region
          _
        $region52: #{tpu_custom_call.1} parent=11 // pred_fallthru
          _
      $region12: #{tpu_custom_call.1} parent=5 // pred_fallthru
        _
      %p354 = scmp.lt.s32.totalorder %s21, 2
      // Predicated region
      $region53: #{tpu_custom_call.1} parent=5 // pred_check
        %p355 = pneg %p354
      $region54: #{tpu_custom_call.1} parent=5 // pred_check_branch
        %357 = sbr.rel (%p355) target = $region56
      $region55: #{tpu_custom_call.1} parent=5 // pred_region
        // Predicated region
        $region57: #{tpu_custom_call.1} parent=55 // pred_check
          %p358 = pneg %p41
        $region58: #{tpu_custom_call.1} parent=55 // pred_check_branch
          %360 = sbr.rel (%p358) target = $region60
        $region59: #{tpu_custom_call.1} parent=55 // pred_region
          %p361 = scmp.lt.s32.totalorder %s21, 1
          %s362 = scalar_select %p361, %s21, 1
          %s363 = smul.addr %s362, 8
          %s364 = scalar_lea.vmem %s0, %s363
        $region60: #{tpu_custom_call.1} parent=55 // pred_fallthru
          _
        // Predicated region
        $region61: #{tpu_custom_call.1} parent=55 // pred_check
          %p365 = pneg %p67
        $region62: #{tpu_custom_call.1} parent=55 // pred_check_branch
          %367 = sbr.rel (%p365) target = $region64
        $region63: #{tpu_custom_call.1} parent=55 // pred_region
          %p368 = scmp.lt.s32.totalorder %s21, 1
          %s369 = scalar_select %p368, %s21, 1
          %s370 = scalar_lea.vmem %s1, %s369
        $region64: #{tpu_custom_call.1} parent=55 // pred_fallthru
          _
      $region56: #{tpu_custom_call.1} parent=5 // pred_fallthru
        _
      %p371 = scmp.le.s32.totalorder 1, %s21
      %p372 = scmp.lt.s32.totalorder %s21, 3
      %p373 = pnand %p371, %p372
      %p374 = pneg %p373
      // Predicated region
      $region65: #{tpu_custom_call.1} parent=5 // pred_check
        _
      $region66: #{tpu_custom_call.1} parent=5 // pred_check_branch
        %376 = sbr.rel (%p373) target = $region68
      $region67: #{tpu_custom_call.1} parent=5 // pred_region
        %s377 = ssub.s32 %s21, 1
        %p378 = scmp.lt.s32.totalorder %s26, 1
        %s379 = scalar_select %p378, %s26, 1
        %s380 = smul.addr %s379, 8
        %s381 = scalar_lea.vmem %s0, %s380
        %p382 = pneg %p47
        %p383 = pneg %p44
        %p384 = scmp.lt.s32.totalorder %s26, 1
        %s385 = scalar_select %p384, %s26, 1
        %s386 = scalar_lea.vmem %s1, %s385
        %p387 = pneg %p73
        %p388 = pneg %p70
        %p389 = pneg %p94
        %p390 = pneg %p91
        %p391 = pneg %p115
        %p392 = pneg %p112
        %p393 = pneg %p136
        %p394 = pneg %p133
        %p395 = pneg %p157
        %p396 = pneg %p154
        %p397 = pneg %p178
        %p398 = pneg %p175
        %p399 = pneg %p199
        %p400 = pneg %p196
        %p401 = pneg %p220
        %p402 = pneg %p217
        %p403 = pneg %p241
        %p404 = pneg %p238
        %p405 = pneg %p262
        %p406 = pneg %p259
        %p407 = pneg %p283
        %p408 = pneg %p280
        %p409 = pneg %p309
        %p410 = pneg %p306
        %s411 = sand.u32 %s296, 1
        %s412 = scalar_lea.sflag [#allocation3], %s411
        %s413 = sand.u32 %s296, 1
        %s414 = smul.addr %s413, 8
        %s415 = scalar_lea.vmem [#allocation2], %s414
        %p416 = scmp.lt.s32.totalorder %s26, 1
        %s417 = scalar_select %p416, %s26, 1
        %s418 = smul.addr %s417, 8
        %s419 = scalar_lea.vmem %s0, %s418
        %p420 = scmp.lt.s32.totalorder %s26, 1
        %s421 = scalar_select %p420, %s26, 1
        %s422 = scalar_lea.vmem %s1, %s421
        %v424 = vld [vmem:[%s419] sm:$0xff]
        %v425 = vld [vmem:[%s422] sm:$0x1]
        %v426 = vmul.f32 %v425, -1e+30
        %v427 = vpack.c.bf16 %v424, %v424
        %v428 = vld [vmem:[%s2] sm:$0xf]
        %v429 = vld [vmem:[%s2 + $0x4] sm:$0xf]
        %v430 = vld [vmem:[%s2 + $0x8] sm:$0xf]
        %v431 = vld [vmem:[%s2 + $0xc] sm:$0xf]
        %v432 = vld [vmem:[%s2 + $0x10] sm:$0xf]
        %v433 = vld [vmem:[%s2 + $0x14] sm:$0xf]
        %v434 = vld [vmem:[%s2 + $0x18] sm:$0xf]
        %v435 = vld [vmem:[%s2 + $0x1c] sm:$0xf]
        %v436 = vld [vmem:[%s2 + $0x20] sm:$0xf]
        %v437 = vld [vmem:[%s2 + $0x24] sm:$0xf]
        %v438 = vld [vmem:[%s2 + $0x28] sm:$0xf]
        %v439 = vld [vmem:[%s2 + $0x2c] sm:$0xf]
        %v440 = vld [vmem:[%s2 + $0x30] sm:$0xf]
        %v441 = vld [vmem:[%s2 + $0x34] sm:$0xf]
        %v442 = vld [vmem:[%s2 + $0x38] sm:$0xf]
        %v443 = vld [vmem:[%s2 + $0x3c] sm:$0xf]
        %v444 = vld [vmem:[%s2 + $0x40] sm:$0xf]
        %v445 = vld [vmem:[%s2 + $0x44] sm:$0xf]
        %v446 = vld [vmem:[%s2 + $0x48] sm:$0xf]
        %v447 = vld [vmem:[%s2 + $0x4c] sm:$0xf]
        %v448 = vld [vmem:[%s2 + $0x50] sm:$0xf]
        %v449 = vld [vmem:[%s2 + $0x54] sm:$0xf]
        %v450 = vld [vmem:[%s2 + $0x58] sm:$0xf]
        %v451 = vld [vmem:[%s2 + $0x5c] sm:$0xf]
        %v452 = vld [vmem:[%s2 + $0x60] sm:$0xf]
        %v453 = vld [vmem:[%s2 + $0x64] sm:$0xf]
        %v454 = vld [vmem:[%s2 + $0x68] sm:$0xf]
        %v455 = vld [vmem:[%s2 + $0x6c] sm:$0xf]
        %v456 = vld [vmem:[%s2 + $0x70] sm:$0xf]
        %v457 = vld [vmem:[%s2 + $0x74] sm:$0xf]
        %v458 = vld [vmem:[%s2 + $0x78] sm:$0xf]
        %v459 = vld [vmem:[%s2 + $0x7c] sm:$0xf]
        %v464 = vunpack.c.l.b16 %v428
        %v465 = vunpack.c.l.b16 %v429
        %v466 = vunpack.c.l.b16 %v430
        %v467 = vunpack.c.l.b16 %v431
        %v468 = vpack.c.b16 %v465, %v464
        %v469 = vpack.c.b16 %v467, %v466
        %vm472 = vcmask 261120
        %v474 = vsel %vm472, %v427, 0
        %476 = vmatprep.subr.bf16.mxu0 0
        %477 = vmatpush1.bf16.msra.mxu0 0
        %478 = vmatprep.subr.bf16.mxu0 0
        %479 = vmatpush1.bf16.msra.mxu0 0
        %480 = vmatprep.subr.bf16.mxu0 0
        %481 = vmatpush1.bf16.msra.mxu0 0
        %482 = vmatprep.subr.bf16.mxu0 0
        %483 = vmatpush1.bf16.msra.mxu0 0
        %484 = vmatprep.subr.bf16.mxu0 0
        %485 = vmatpush1.bf16.msra.mxu0 0
        %486 = vmatprep.subr.bf16.mxu0 0
        %487 = vmatpush1.bf16.msra.mxu0 0
        %488 = vmatprep.subr.bf16.mxu0 0
        %489 = vmatpush1.bf16.msra.mxu0 %v469
        %490 = vmatprep.subr.bf16.mxu0 0
        %491 = vmatpush1.bf16.msra.mxu0 %v468
        %492 = vmatprep.subr.bf16.mxu0 0
        %493 = vmatpush2.bf16.msra.mxu0 0
        %494 = vmatprep.subr.bf16.mxu0 0
        %495 = vmatpush2.bf16.msra.mxu0 0
        %496 = vmatprep.subr.bf16.mxu0 0
        %497 = vmatpush2.bf16.msra.mxu0 0
        %498 = vmatprep.subr.bf16.mxu0 0
        %499 = vmatpush2.bf16.msra.mxu0 0
        %500 = vmatprep.subr.bf16.mxu0 0
        %501 = vmatpush2.bf16.msra.mxu0 0
        %502 = vmatprep.subr.bf16.mxu0 0
        %503 = vmatpush2.bf16.msra.mxu0 0
        %504 = vmatprep.subr.bf16.mxu0 0
        %505 = vmatpush2.bf16.msra.mxu0 0
        %506 = vmatprep.subr.bf16.mxu0 0
        %507 = vmatpush2.bf16.msra.mxu0 0
        %508 = vmatprep.mubr.bf16.mxu0 0
        %509 = vmatmul.mubr.bf16.gmra.mxu0 %v474
        %v510 = vpop.f32.mrf.mxu0
        %v511 = vadd.f32 0.0, %v510
        %v512 = vpop.f32.mrf.mxu0
        %v513 = vpop.f32.mrf.mxu0
        %v514 = vpop.f32.mrf.mxu0
        %515 = vdwg.mxu0
        %v520 = vunpack.c.l.b16 %v432
        %v521 = vunpack.c.l.b16 %v433
        %v522 = vunpack.c.l.b16 %v434
        %v523 = vunpack.c.l.b16 %v435
        %v524 = vpack.c.b16 %v521, %v520
        %v525 = vpack.c.b16 %v523, %v522
        %528 = vmatprep.subr.bf16.mxu0 0
        %529 = vmatpush1.bf16.msra.mxu0 0
        %530 = vmatprep.subr.bf16.mxu0 0
        %531 = vmatpush1.bf16.msra.mxu0 0
        %532 = vmatprep.subr.bf16.mxu0 0
        %533 = vmatpush1.bf16.msra.mxu0 0
        %534 = vmatprep.subr.bf16.mxu0 0
        %535 = vmatpush1.bf16.msra.mxu0 0
        %536 = vmatprep.subr.bf16.mxu0 0
        %537 = vmatpush1.bf16.msra.mxu0 0
        %538 = vmatprep.subr.bf16.mxu0 0
        %539 = vmatpush1.bf16.msra.mxu0 0
        %540 = vmatprep.subr.bf16.mxu0 0
        %541 = vmatpush1.bf16.msra.mxu0 %v525
        %542 = vmatprep.subr.bf16.mxu0 0
        %543 = vmatpush1.bf16.msra.mxu0 %v524
        %544 = vmatprep.subr.bf16.mxu0 0
        %545 = vmatpush2.bf16.msra.mxu0 0
        %546 = vmatprep.subr.bf16.mxu0 0
        %547 = vmatpush2.bf16.msra.mxu0 0
        %548 = vmatprep.subr.bf16.mxu0 0
        %549 = vmatpush2.bf16.msra.mxu0 0
        %550 = vmatprep.subr.bf16.mxu0 0
        %551 = vmatpush2.bf16.msra.mxu0 0
        %552 = vmatprep.subr.bf16.mxu0 0
        %553 = vmatpush2.bf16.msra.mxu0 0
        %554 = vmatprep.subr.bf16.mxu0 0
        %555 = vmatpush2.bf16.msra.mxu0 0
        %556 = vmatprep.subr.bf16.mxu0 0
        %557 = vmatpush2.bf16.msra.mxu0 0
        %558 = vmatprep.subr.bf16.mxu0 0
        %559 = vmatpush2.bf16.msra.mxu0 0
        %560 = vmatprep.mubr.bf16.mxu0 0
        %561 = vmatmul.mubr.bf16.gmra.mxu0 %v474
        %v562 = vpop.f32.mrf.mxu0
        %v563 = vadd.f32 0.0, %v562
        %v564 = vpop.f32.mrf.mxu0
        %v565 = vpop.f32.mrf.mxu0
        %v566 = vpop.f32.mrf.mxu0
        %567 = vdwg.mxu0
        %v572 = vunpack.c.l.b16 %v436
        %v573 = vunpack.c.l.b16 %v437
        %v574 = vunpack.c.l.b16 %v438
        %v575 = vunpack.c.l.b16 %v439
        %v576 = vpack.c.b16 %v573, %v572
        %v577 = vpack.c.b16 %v575, %v574
        %580 = vmatprep.subr.bf16.mxu0 0
        %581 = vmatpush1.bf16.msra.mxu0 0
        %582 = vmatprep.subr.bf16.mxu0 0
        %583 = vmatpush1.bf16.msra.mxu0 0
        %584 = vmatprep.subr.bf16.mxu0 0
        %585 = vmatpush1.bf16.msra.mxu0 0
        %586 = vmatprep.subr.bf16.mxu0 0
        %587 = vmatpush1.bf16.msra.mxu0 0
        %588 = vmatprep.subr.bf16.mxu0 0
        %589 = vmatpush1.bf16.msra.mxu0 0
        %590 = vmatprep.subr.bf16.mxu0 0
        %591 = vmatpush1.bf16.msra.mxu0 0
        %592 = vmatprep.subr.bf16.mxu0 0
        %593 = vmatpush1.bf16.msra.mxu0 %v577
        %594 = vmatprep.subr.bf16.mxu0 0
        %595 = vmatpush1.bf16.msra.mxu0 %v576
        %596 = vmatprep.subr.bf16.mxu0 0
        %597 = vmatpush2.bf16.msra.mxu0 0
        %598 = vmatprep.subr.bf16.mxu0 0
        %599 = vmatpush2.bf16.msra.mxu0 0
        %600 = vmatprep.subr.bf16.mxu0 0
        %601 = vmatpush2.bf16.msra.mxu0 0
        %602 = vmatprep.subr.bf16.mxu0 0
        %603 = vmatpush2.bf16.msra.mxu0 0
        %604 = vmatprep.subr.bf16.mxu0 0
        %605 = vmatpush2.bf16.msra.mxu0 0
        %606 = vmatprep.subr.bf16.mxu0 0
        %607 = vmatpush2.bf16.msra.mxu0 0
        %608 = vmatprep.subr.bf16.mxu0 0
        %609 = vmatpush2.bf16.msra.mxu0 0
        %610 = vmatprep.subr.bf16.mxu0 0
        %611 = vmatpush2.bf16.msra.mxu0 0
        %612 = vmatprep.mubr.bf16.mxu0 0
        %613 = vmatmul.mubr.bf16.gmra.mxu0 %v474
        %v614 = vpop.f32.mrf.mxu0
        %v615 = vadd.f32 0.0, %v614
        %v616 = vpop.f32.mrf.mxu0
        %v617 = vpop.f32.mrf.mxu0
        %v618 = vpop.f32.mrf.mxu0
        %619 = vdwg.mxu0
        %v624 = vunpack.c.l.b16 %v440
        %v625 = vunpack.c.l.b16 %v441
        %v626 = vunpack.c.l.b16 %v442
        %v627 = vunpack.c.l.b16 %v443
        %v628 = vpack.c.b16 %v625, %v624
        %v629 = vpack.c.b16 %v627, %v626
        %632 = vmatprep.subr.bf16.mxu0 0
        %633 = vmatpush1.bf16.msra.mxu0 0
        %634 = vmatprep.subr.bf16.mxu0 0
        %635 = vmatpush1.bf16.msra.mxu0 0
        %636 = vmatprep.subr.bf16.mxu0 0
        %637 = vmatpush1.bf16.msra.mxu0 0
        %638 = vmatprep.subr.bf16.mxu0 0
        %639 = vmatpush1.bf16.msra.mxu0 0
        %640 = vmatprep.subr.bf16.mxu0 0
        %641 = vmatpush1.bf16.msra.mxu0 0
        %642 = vmatprep.subr.bf16.mxu0 0
        %643 = vmatpush1.bf16.msra.mxu0 0
        %644 = vmatprep.subr.bf16.mxu0 0
        %645 = vmatpush1.bf16.msra.mxu0 %v629
        %646 = vmatprep.subr.bf16.mxu0 0
        %647 = vmatpush1.bf16.msra.mxu0 %v628
        %648 = vmatprep.subr.bf16.mxu0 0
        %649 = vmatpush2.bf16.msra.mxu0 0
        %650 = vmatprep.subr.bf16.mxu0 0
        %651 = vmatpush2.bf16.msra.mxu0 0
        %652 = vmatprep.subr.bf16.mxu0 0
        %653 = vmatpush2.bf16.msra.mxu0 0
        %654 = vmatprep.subr.bf16.mxu0 0
        %655 = vmatpush2.bf16.msra.mxu0 0
        %656 = vmatprep.subr.bf16.mxu0 0
        %657 = vmatpush2.bf16.msra.mxu0 0
        %658 = vmatprep.subr.bf16.mxu0 0
        %659 = vmatpush2.bf16.msra.mxu0 0
        %660 = vmatprep.subr.bf16.mxu0 0
        %661 = vmatpush2.bf16.msra.mxu0 0
        %662 = vmatprep.subr.bf16.mxu0 0
        %663 = vmatpush2.bf16.msra.mxu0 0
        %664 = vmatprep.mubr.bf16.mxu0 0
        %665 = vmatmul.mubr.bf16.gmra.mxu0 %v474
        %v666 = vpop.f32.mrf.mxu0
        %v667 = vadd.f32 0.0, %v666
        %v668 = vpop.f32.mrf.mxu0
        %v669 = vpop.f32.mrf.mxu0
        %v670 = vpop.f32.mrf.mxu0
        %671 = vdwg.mxu0
        %v676 = vunpack.c.l.b16 %v444
        %v677 = vunpack.c.l.b16 %v445
        %v678 = vunpack.c.l.b16 %v446
        %v679 = vunpack.c.l.b16 %v447
        %v680 = vpack.c.b16 %v677, %v676
        %v681 = vpack.c.b16 %v679, %v678
        %684 = vmatprep.subr.bf16.mxu0 0
        %685 = vmatpush1.bf16.msra.mxu0 0
        %686 = vmatprep.subr.bf16.mxu0 0
        %687 = vmatpush1.bf16.msra.mxu0 0
        %688 = vmatprep.subr.bf16.mxu0 0
        %689 = vmatpush1.bf16.msra.mxu0 0
        %690 = vmatprep.subr.bf16.mxu0 0
        %691 = vmatpush1.bf16.msra.mxu0 0
        %692 = vmatprep.subr.bf16.mxu0 0
        %693 = vmatpush1.bf16.msra.mxu0 0
        %694 = vmatprep.subr.bf16.mxu0 0
        %695 = vmatpush1.bf16.msra.mxu0 0
        %696 = vmatprep.subr.bf16.mxu0 0
        %697 = vmatpush1.bf16.msra.mxu0 %v681
        %698 = vmatprep.subr.bf16.mxu0 0
        %699 = vmatpush1.bf16.msra.mxu0 %v680
        %700 = vmatprep.subr.bf16.mxu0 0
        %701 = vmatpush2.bf16.msra.mxu0 0
        %702 = vmatprep.subr.bf16.mxu0 0
        %703 = vmatpush2.bf16.msra.mxu0 0
        %704 = vmatprep.subr.bf16.mxu0 0
        %705 = vmatpush2.bf16.msra.mxu0 0
        %706 = vmatprep.subr.bf16.mxu0 0
        %707 = vmatpush2.bf16.msra.mxu0 0
        %708 = vmatprep.subr.bf16.mxu0 0
        %709 = vmatpush2.bf16.msra.mxu0 0
        %710 = vmatprep.subr.bf16.mxu0 0
        %711 = vmatpush2.bf16.msra.mxu0 0
        %712 = vmatprep.subr.bf16.mxu0 0
        %713 = vmatpush2.bf16.msra.mxu0 0
        %714 = vmatprep.subr.bf16.mxu0 0
        %715 = vmatpush2.bf16.msra.mxu0 0
        %716 = vmatprep.mubr.bf16.mxu0 0
        %717 = vmatmul.mubr.bf16.gmra.mxu0 %v474
        %v718 = vpop.f32.mrf.mxu0
        %v719 = vadd.f32 0.0, %v718
        %v720 = vpop.f32.mrf.mxu0
        %v721 = vpop.f32.mrf.mxu0
        %v722 = vpop.f32.mrf.mxu0
        %723 = vdwg.mxu0
        %v728 = vunpack.c.l.b16 %v448
        %v729 = vunpack.c.l.b16 %v449
        %v730 = vunpack.c.l.b16 %v450
        %v731 = vunpack.c.l.b16 %v451
        %v732 = vpack.c.b16 %v729, %v728
        %v733 = vpack.c.b16 %v731, %v730
        %736 = vmatprep.subr.bf16.mxu0 0
        %737 = vmatpush1.bf16.msra.mxu0 0
        %738 = vmatprep.subr.bf16.mxu0 0
        %739 = vmatpush1.bf16.msra.mxu0 0
        %740 = vmatprep.subr.bf16.mxu0 0
        %741 = vmatpush1.bf16.msra.mxu0 0
        %742 = vmatprep.subr.bf16.mxu0 0
        %743 = vmatpush1.bf16.msra.mxu0 0
        %744 = vmatprep.subr.bf16.mxu0 0
        %745 = vmatpush1.bf16.msra.mxu0 0
        %746 = vmatprep.subr.bf16.mxu0 0
        %747 = vmatpush1.bf16.msra.mxu0 0
        %748 = vmatprep.subr.bf16.mxu0 0
        %749 = vmatpush1.bf16.msra.mxu0 %v733
        %750 = vmatprep.subr.bf16.mxu0 0
        %751 = vmatpush1.bf16.msra.mxu0 %v732
        %752 = vmatprep.subr.bf16.mxu0 0
        %753 = vmatpush2.bf16.msra.mxu0 0
        %754 = vmatprep.subr.bf16.mxu0 0
        %755 = vmatpush2.bf16.msra.mxu0 0
        %756 = vmatprep.subr.bf16.mxu0 0
        %757 = vmatpush2.bf16.msra.mxu0 0
        %758 = vmatprep.subr.bf16.mxu0 0
        %759 = vmatpush2.bf16.msra.mxu0 0
        %760 = vmatprep.subr.bf16.mxu0 0
        %761 = vmatpush2.bf16.msra.mxu0 0
        %762 = vmatprep.subr.bf16.mxu0 0
        %763 = vmatpush2.bf16.msra.mxu0 0
        %764 = vmatprep.subr.bf16.mxu0 0
        %765 = vmatpush2.bf16.msra.mxu0 0
        %766 = vmatprep.subr.bf16.mxu0 0
        %767 = vmatpush2.bf16.msra.mxu0 0
        %768 = vmatprep.mubr.bf16.mxu0 0
        %769 = vmatmul.mubr.bf16.gmra.mxu0 %v474
        %v770 = vpop.f32.mrf.mxu0
        %v771 = vadd.f32 0.0, %v770
        %v772 = vpop.f32.mrf.mxu0
        %v773 = vpop.f32.mrf.mxu0
        %v774 = vpop.f32.mrf.mxu0
        %775 = vdwg.mxu0
        %v780 = vunpack.c.l.b16 %v452
        %v781 = vunpack.c.l.b16 %v453
        %v782 = vunpack.c.l.b16 %v454
        %v783 = vunpack.c.l.b16 %v455
        %v784 = vpack.c.b16 %v781, %v780
        %v785 = vpack.c.b16 %v783, %v782
        %788 = vmatprep.subr.bf16.mxu0 0
        %789 = vmatpush1.bf16.msra.mxu0 0
        %790 = vmatprep.subr.bf16.mxu0 0
        %791 = vmatpush1.bf16.msra.mxu0 0
        %792 = vmatprep.subr.bf16.mxu0 0
        %793 = vmatpush1.bf16.msra.mxu0 0
        %794 = vmatprep.subr.bf16.mxu0 0
        %795 = vmatpush1.bf16.msra.mxu0 0
        %796 = vmatprep.subr.bf16.mxu0 0
        %797 = vmatpush1.bf16.msra.mxu0 0
        %798 = vmatprep.subr.bf16.mxu0 0
        %799 = vmatpush1.bf16.msra.mxu0 0
        %800 = vmatprep.subr.bf16.mxu0 0
        %801 = vmatpush1.bf16.msra.mxu0 %v785
        %802 = vmatprep.subr.bf16.mxu0 0
        %803 = vmatpush1.bf16.msra.mxu0 %v784
        %804 = vmatprep.subr.bf16.mxu0 0
        %805 = vmatpush2.bf16.msra.mxu0 0
        %806 = vmatprep.subr.bf16.mxu0 0
        %807 = vmatpush2.bf16.msra.mxu0 0
        %808 = vmatprep.subr.bf16.mxu0 0
        %809 = vmatpush2.bf16.msra.mxu0 0
        %810 = vmatprep.subr.bf16.mxu0 0
        %811 = vmatpush2.bf16.msra.mxu0 0
        %812 = vmatprep.subr.bf16.mxu0 0
        %813 = vmatpush2.bf16.msra.mxu0 0
        %814 = vmatprep.subr.bf16.mxu0 0
        %815 = vmatpush2.bf16.msra.mxu0 0
        %816 = vmatprep.subr.bf16.mxu0 0
        %817 = vmatpush2.bf16.msra.mxu0 0
        %818 = vmatprep.subr.bf16.mxu0 0
        %819 = vmatpush2.bf16.msra.mxu0 0
        %820 = vmatprep.mubr.bf16.mxu0 0
        %821 = vmatmul.mubr.bf16.gmra.mxu0 %v474
        %v822 = vpop.f32.mrf.mxu0
        %v823 = vadd.f32 0.0, %v822
        %v824 = vpop.f32.mrf.mxu0
        %v825 = vpop.f32.mrf.mxu0
        %v826 = vpop.f32.mrf.mxu0
        %827 = vdwg.mxu0
        %v832 = vunpack.c.l.b16 %v456
        %v833 = vunpack.c.l.b16 %v457
        %v834 = vunpack.c.l.b16 %v458
        %v835 = vunpack.c.l.b16 %v459
        %v836 = vpack.c.b16 %v833, %v832
        %v837 = vpack.c.b16 %v835, %v834
        %840 = vmatprep.subr.bf16.mxu0 0
        %841 = vmatpush1.bf16.msra.mxu0 0
        %842 = vmatprep.subr.bf16.mxu0 0
        %843 = vmatpush1.bf16.msra.mxu0 0
        %844 = vmatprep.subr.bf16.mxu0 0
        %845 = vmatpush1.bf16.msra.mxu0 0
        %846 = vmatprep.subr.bf16.mxu0 0
        %847 = vmatpush1.bf16.msra.mxu0 0
        %848 = vmatprep.subr.bf16.mxu0 0
        %849 = vmatpush1.bf16.msra.mxu0 0
        %850 = vmatprep.subr.bf16.mxu0 0
        %851 = vmatpush1.bf16.msra.mxu0 0
        %852 = vmatprep.subr.bf16.mxu0 0
        %853 = vmatpush1.bf16.msra.mxu0 %v837
        %854 = vmatprep.subr.bf16.mxu0 0
        %855 = vmatpush1.bf16.msra.mxu0 %v836
        %856 = vmatprep.subr.bf16.mxu0 0
        %857 = vmatpush2.bf16.msra.mxu0 0
        %858 = vmatprep.subr.bf16.mxu0 0
        %859 = vmatpush2.bf16.msra.mxu0 0
        %860 = vmatprep.subr.bf16.mxu0 0
        %861 = vmatpush2.bf16.msra.mxu0 0
        %862 = vmatprep.subr.bf16.mxu0 0
        %863 = vmatpush2.bf16.msra.mxu0 0
        %864 = vmatprep.subr.bf16.mxu0 0
        %865 = vmatpush2.bf16.msra.mxu0 0
        %866 = vmatprep.subr.bf16.mxu0 0
        %867 = vmatpush2.bf16.msra.mxu0 0
        %868 = vmatprep.subr.bf16.mxu0 0
        %869 = vmatpush2.bf16.msra.mxu0 0
        %870 = vmatprep.subr.bf16.mxu0 0
        %871 = vmatpush2.bf16.msra.mxu0 0
        %872 = vmatprep.mubr.bf16.mxu0 0
        %873 = vmatmul.mubr.bf16.gmra.mxu0 %v474
        %v874 = vpop.f32.mrf.mxu0
        %v875 = vadd.f32 0.0, %v874
        %v876 = vpop.f32.mrf.mxu0
        %v877 = vpop.f32.mrf.mxu0
        %v878 = vpop.f32.mrf.mxu0
        %879 = vdwg.mxu0
        %v880 = vpack.c.bf16 %v511, %v511
        %v881 = vpack.c.bf16 %v563, %v563
        %v882 = vpack.c.bf16 %v615, %v615
        %v883 = vpack.c.bf16 %v667, %v667
        %v884 = vpack.c.bf16 %v719, %v719
        %v885 = vpack.c.bf16 %v771, %v771
        %v886 = vpack.c.bf16 %v823, %v823
        %v887 = vpack.c.bf16 %v875, %v875
        %vm888 = vcmask 31744
        %v890 = vsel %vm888, %v880, 0
        %892 = vmatprep.subr.bf16.mxu0 0
        %893 = vmatpush1.bf16.xpose.msra.mxu0 0
        %894 = vmatprep.subr.bf16.mxu0 0
        %895 = vmatpush1.bf16.xpose.msra.mxu0 0
        %896 = vmatprep.subr.bf16.mxu0 0
        %897 = vmatpush1.bf16.xpose.msra.mxu0 0
        %898 = vmatprep.subr.bf16.mxu0 0
        %899 = vmatpush1.bf16.xpose.msra.mxu0 0
        %900 = vmatprep.subr.bf16.mxu0 0
        %901 = vmatpush1.bf16.xpose.msra.mxu0 0
        %902 = vmatprep.subr.bf16.mxu0 0
        %903 = vmatpush1.bf16.xpose.msra.mxu0 0
        %904 = vmatprep.subr.bf16.mxu0 0
        %905 = vmatpush1.bf16.xpose.msra.mxu0 0
        %906 = vmatprep.subr.bf16.mxu0 0
        %907 = vmatpush1.bf16.xpose.msra.mxu0 %v890
        %908 = vmatprep.subr.bf16.mxu0 0
        %909 = vmatpush2.bf16.xpose.msra.mxu0 0
        %910 = vmatprep.subr.bf16.mxu0 0
        %911 = vmatpush2.bf16.xpose.msra.mxu0 0
        %912 = vmatprep.subr.bf16.mxu0 0
        %913 = vmatpush2.bf16.xpose.msra.mxu0 0
        %914 = vmatprep.subr.bf16.mxu0 0
        %915 = vmatpush2.bf16.xpose.msra.mxu0 0
        %916 = vmatprep.subr.bf16.mxu0 0
        %917 = vmatpush2.bf16.xpose.msra.mxu0 0
        %918 = vmatprep.subr.bf16.mxu0 0
        %919 = vmatpush2.bf16.xpose.msra.mxu0 0
        %920 = vmatprep.subr.bf16.mxu0 0
        %921 = vmatpush2.bf16.xpose.msra.mxu0 0
        %922 = vmatprep.subr.bf16.mxu0 0
        %923 = vmatpush2.bf16.xpose.msra.mxu0 0
        %924 = vmatprep.mubr.bf16.mxu0 0
        %925 = vmatmul.mubr.bf16.gmra.mxu0 %v890
        %v926 = vpop.f32.mrf.mxu0
        %v927 = vadd.f32 0.0, %v926
        %v928 = vpop.f32.mrf.mxu0
        %v929 = vpop.f32.mrf.mxu0
        %v930 = vpop.f32.mrf.mxu0
        %931 = vdwg.mxu0
        %v933 = vsel %vm888, %v881, 0
        %935 = vmatprep.subr.bf16.mxu0 0
        %936 = vmatpush1.bf16.xpose.msra.mxu0 0
        %937 = vmatprep.subr.bf16.mxu0 0
        %938 = vmatpush1.bf16.xpose.msra.mxu0 0
        %939 = vmatprep.subr.bf16.mxu0 0
        %940 = vmatpush1.bf16.xpose.msra.mxu0 0
        %941 = vmatprep.subr.bf16.mxu0 0
        %942 = vmatpush1.bf16.xpose.msra.mxu0 0
        %943 = vmatprep.subr.bf16.mxu0 0
        %944 = vmatpush1.bf16.xpose.msra.mxu0 0
        %945 = vmatprep.subr.bf16.mxu0 0
        %946 = vmatpush1.bf16.xpose.msra.mxu0 0
        %947 = vmatprep.subr.bf16.mxu0 0
        %948 = vmatpush1.bf16.xpose.msra.mxu0 0
        %949 = vmatprep.subr.bf16.mxu0 0
        %950 = vmatpush1.bf16.xpose.msra.mxu0 %v933
        %951 = vmatprep.subr.bf16.mxu0 0
        %952 = vmatpush2.bf16.xpose.msra.mxu0 0
        %953 = vmatprep.subr.bf16.mxu0 0
        %954 = vmatpush2.bf16.xpose.msra.mxu0 0
        %955 = vmatprep.subr.bf16.mxu0 0
        %956 = vmatpush2.bf16.xpose.msra.mxu0 0
        %957 = vmatprep.subr.bf16.mxu0 0
        %958 = vmatpush2.bf16.xpose.msra.mxu0 0
        %959 = vmatprep.subr.bf16.mxu0 0
        %960 = vmatpush2.bf16.xpose.msra.mxu0 0
        %961 = vmatprep.subr.bf16.mxu0 0
        %962 = vmatpush2.bf16.xpose.msra.mxu0 0
        %963 = vmatprep.subr.bf16.mxu0 0
        %964 = vmatpush2.bf16.xpose.msra.mxu0 0
        %965 = vmatprep.subr.bf16.mxu0 0
        %966 = vmatpush2.bf16.xpose.msra.mxu0 0
        %967 = vmatprep.mubr.bf16.mxu0 0
        %968 = vmatmul.mubr.bf16.gmra.mxu0 %v933
        %v969 = vpop.f32.mrf.mxu0
        %v970 = vadd.f32 0.0, %v969
        %v971 = vpop.f32.mrf.mxu0
        %v972 = vpop.f32.mrf.mxu0
        %v973 = vpop.f32.mrf.mxu0
        %974 = vdwg.mxu0
        %v976 = vsel %vm888, %v882, 0
        %978 = vmatprep.subr.bf16.mxu0 0
        %979 = vmatpush1.bf16.xpose.msra.mxu0 0
        %980 = vmatprep.subr.bf16.mxu0 0
        %981 = vmatpush1.bf16.xpose.msra.mxu0 0
        %982 = vmatprep.subr.bf16.mxu0 0
        %983 = vmatpush1.bf16.xpose.msra.mxu0 0
        %984 = vmatprep.subr.bf16.mxu0 0
        %985 = vmatpush1.bf16.xpose.msra.mxu0 0
        %986 = vmatprep.subr.bf16.mxu0 0
        %987 = vmatpush1.bf16.xpose.msra.mxu0 0
        %988 = vmatprep.subr.bf16.mxu0 0
        %989 = vmatpush1.bf16.xpose.msra.mxu0 0
        %990 = vmatprep.subr.bf16.mxu0 0
        %991 = vmatpush1.bf16.xpose.msra.mxu0 0
        %992 = vmatprep.subr.bf16.mxu0 0
        %993 = vmatpush1.bf16.xpose.msra.mxu0 %v976
        %994 = vmatprep.subr.bf16.mxu0 0
        %995 = vmatpush2.bf16.xpose.msra.mxu0 0
        %996 = vmatprep.subr.bf16.mxu0 0
        %997 = vmatpush2.bf16.xpose.msra.mxu0 0
        %998 = vmatprep.subr.bf16.mxu0 0
        %999 = vmatpush2.bf16.xpose.msra.mxu0 0
        %1000 = vmatprep.subr.bf16.mxu0 0
        %1001 = vmatpush2.bf16.xpose.msra.mxu0 0
        %1002 = vmatprep.subr.bf16.mxu0 0
        %1003 = vmatpush2.bf16.xpose.msra.mxu0 0
        %1004 = vmatprep.subr.bf16.mxu0 0
        %1005 = vmatpush2.bf16.xpose.msra.mxu0 0
        %1006 = vmatprep.subr.bf16.mxu0 0
        %1007 = vmatpush2.bf16.xpose.msra.mxu0 0
        %1008 = vmatprep.subr.bf16.mxu0 0
        %1009 = vmatpush2.bf16.xpose.msra.mxu0 0
        %1010 = vmatprep.mubr.bf16.mxu0 0
        %1011 = vmatmul.mubr.bf16.gmra.mxu0 %v976
        %v1012 = vpop.f32.mrf.mxu0
        %v1013 = vadd.f32 0.0, %v1012
        %v1014 = vpop.f32.mrf.mxu0
        %v1015 = vpop.f32.mrf.mxu0
        %v1016 = vpop.f32.mrf.mxu0
        %1017 = vdwg.mxu0
        %v1019 = vsel %vm888, %v883, 0
        %1021 = vmatprep.subr.bf16.mxu0 0
        %1022 = vmatpush1.bf16.xpose.msra.mxu0 0
        %1023 = vmatprep.subr.bf16.mxu0 0
        %1024 = vmatpush1.bf16.xpose.msra.mxu0 0
        %1025 = vmatprep.subr.bf16.mxu0 0
        %1026 = vmatpush1.bf16.xpose.msra.mxu0 0
        %1027 = vmatprep.subr.bf16.mxu0 0
        %1028 = vmatpush1.bf16.xpose.msra.mxu0 0
        %1029 = vmatprep.subr.bf16.mxu0 0
        %1030 = vmatpush1.bf16.xpose.msra.mxu0 0
        %1031 = vmatprep.subr.bf16.mxu0 0
        %1032 = vmatpush1.bf16.xpose.msra.mxu0 0
        %1033 = vmatprep.subr.bf16.mxu0 0
        %1034 = vmatpush1.bf16.xpose.msra.mxu0 0
        %1035 = vmatprep.subr.bf16.mxu0 0
        %1036 = vmatpush1.bf16.xpose.msra.mxu0 %v1019
        %1037 = vmatprep.subr.bf16.mxu0 0
        %1038 = vmatpush2.bf16.xpose.msra.mxu0 0
        %1039 = vmatprep.subr.bf16.mxu0 0
        %1040 = vmatpush2.bf16.xpose.msra.mxu0 0
        %1041 = vmatprep.subr.bf16.mxu0 0
        %1042 = vmatpush2.bf16.xpose.msra.mxu0 0
        %1043 = vmatprep.subr.bf16.mxu0 0
        %1044 = vmatpush2.bf16.xpose.msra.mxu0 0
        %1045 = vmatprep.subr.bf16.mxu0 0
        %1046 = vmatpush2.bf16.xpose.msra.mxu0 0
        %1047 = vmatprep.subr.bf16.mxu0 0
        %1048 = vmatpush2.bf16.xpose.msra.mxu0 0
        %1049 = vmatprep.subr.bf16.mxu0 0
        %1050 = vmatpush2.bf16.xpose.msra.mxu0 0
        %1051 = vmatprep.subr.bf16.mxu0 0
        %1052 = vmatpush2.bf16.xpose.msra.mxu0 0
        %1053 = vmatprep.mubr.bf16.mxu0 0
        %1054 = vmatmul.mubr.bf16.gmra.mxu0 %v1019
        %v1055 = vpop.f32.mrf.mxu0
        %v1056 = vadd.f32 0.0, %v1055
        %v1057 = vpop.f32.mrf.mxu0
        %v1058 = vpop.f32.mrf.mxu0
        %v1059 = vpop.f32.mrf.mxu0
        %1060 = vdwg.mxu0
        %v1062 = vsel %vm888, %v884, 0
        %1064 = vmatprep.subr.bf16.mxu0 0
        %1065 = vmatpush1.bf16.xpose.msra.mxu0 0
        %1066 = vmatprep.subr.bf16.mxu0 0
        %1067 = vmatpush1.bf16.xpose.msra.mxu0 0
        %1068 = vmatprep.subr.bf16.mxu0 0
        %1069 = vmatpush1.bf16.xpose.msra.mxu0 0
        %1070 = vmatprep.subr.bf16.mxu0 0
        %1071 = vmatpush1.bf16.xpose.msra.mxu0 0
        %1072 = vmatprep.subr.bf16.mxu0 0
        %1073 = vmatpush1.bf16.xpose.msra.mxu0 0
        %1074 = vmatprep.subr.bf16.mxu0 0
        %1075 = vmatpush1.bf16.xpose.msra.mxu0 0
        %1076 = vmatprep.subr.bf16.mxu0 0
        %1077 = vmatpush1.bf16.xpose.msra.mxu0 0
        %1078 = vmatprep.subr.bf16.mxu0 0
        %1079 = vmatpush1.bf16.xpose.msra.mxu0 %v1062
        %1080 = vmatprep.subr.bf16.mxu0 0
        %1081 = vmatpush2.bf16.xpose.msra.mxu0 0
        %1082 = vmatprep.subr.bf16.mxu0 0
        %1083 = vmatpush2.bf16.xpose.msra.mxu0 0
        %1084 = vmatprep.subr.bf16.mxu0 0
        %1085 = vmatpush2.bf16.xpose.msra.mxu0 0
        %1086 = vmatprep.subr.bf16.mxu0 0
        %1087 = vmatpush2.bf16.xpose.msra.mxu0 0
        %1088 = vmatprep.subr.bf16.mxu0 0
        %1089 = vmatpush2.bf16.xpose.msra.mxu0 0
        %1090 = vmatprep.subr.bf16.mxu0 0
        %1091 = vmatpush2.bf16.xpose.msra.mxu0 0
        %1092 = vmatprep.subr.bf16.mxu0 0
        %1093 = vmatpush2.bf16.xpose.msra.mxu0 0
        %1094 = vmatprep.subr.bf16.mxu0 0
        %1095 = vmatpush2.bf16.xpose.msra.mxu0 0
        %1096 = vmatprep.mubr.bf16.mxu0 0
        %1097 = vmatmul.mubr.bf16.gmra.mxu0 %v1062
        %v1098 = vpop.f32.mrf.mxu0
        %v1099 = vadd.f32 0.0, %v1098
        %v1100 = vpop.f32.mrf.mxu0
        %v1101 = vpop.f32.mrf.mxu0
        %v1102 = vpop.f32.mrf.mxu0
        %1103 = vdwg.mxu0
        %v1105 = vsel %vm888, %v885, 0
        %1107 = vmatprep.subr.bf16.mxu0 0
        %1108 = vmatpush1.bf16.xpose.msra.mxu0 0
        %1109 = vmatprep.subr.bf16.mxu0 0
        %1110 = vmatpush1.bf16.xpose.msra.mxu0 0
        %1111 = vmatprep.subr.bf16.mxu0 0
        %1112 = vmatpush1.bf16.xpose.msra.mxu0 0
        %1113 = vmatprep.subr.bf16.mxu0 0
        %1114 = vmatpush1.bf16.xpose.msra.mxu0 0
        %1115 = vmatprep.subr.bf16.mxu0 0
        %1116 = vmatpush1.bf16.xpose.msra.mxu0 0
        %1117 = vmatprep.subr.bf16.mxu0 0
        %1118 = vmatpush1.bf16.xpose.msra.mxu0 0
        %1119 = vmatprep.subr.bf16.mxu0 0
        %1120 = vmatpush1.bf16.xpose.msra.mxu0 0
        %1121 = vmatprep.subr.bf16.mxu0 0
        %1122 = vmatpush1.bf16.xpose.msra.mxu0 %v1105
        %1123 = vmatprep.subr.bf16.mxu0 0
        %1124 = vmatpush2.bf16.xpose.msra.mxu0 0
        %1125 = vmatprep.subr.bf16.mxu0 0
        %1126 = vmatpush2.bf16.xpose.msra.mxu0 0
        %1127 = vmatprep.subr.bf16.mxu0 0
        %1128 = vmatpush2.bf16.xpose.msra.mxu0 0
        %1129 = vmatprep.subr.bf16.mxu0 0
        %1130 = vmatpush2.bf16.xpose.msra.mxu0 0
        %1131 = vmatprep.subr.bf16.mxu0 0
        %1132 = vmatpush2.bf16.xpose.msra.mxu0 0
        %1133 = vmatprep.subr.bf16.mxu0 0
        %1134 = vmatpush2.bf16.xpose.msra.mxu0 0
        %1135 = vmatprep.subr.bf16.mxu0 0
        %1136 = vmatpush2.bf16.xpose.msra.mxu0 0
        %1137 = vmatprep.subr.bf16.mxu0 0
        %1138 = vmatpush2.bf16.xpose.msra.mxu0 0
        %1139 = vmatprep.mubr.bf16.mxu0 0
        %1140 = vmatmul.mubr.bf16.gmra.mxu0 %v1105
        %v1141 = vpop.f32.mrf.mxu0
        %v1142 = vadd.f32 0.0, %v1141
        %v1143 = vpop.f32.mrf.mxu0
        %v1144 = vpop.f32.mrf.mxu0
        %v1145 = vpop.f32.mrf.mxu0
        %1146 = vdwg.mxu0
        %v1148 = vsel %vm888, %v886, 0
        %1150 = vmatprep.subr.bf16.mxu0 0
        %1151 = vmatpush1.bf16.xpose.msra.mxu0 0
        %1152 = vmatprep.subr.bf16.mxu0 0
        %1153 = vmatpush1.bf16.xpose.msra.mxu0 0
        %1154 = vmatprep.subr.bf16.mxu0 0
        %1155 = vmatpush1.bf16.xpose.msra.mxu0 0
        %1156 = vmatprep.subr.bf16.mxu0 0
        %1157 = vmatpush1.bf16.xpose.msra.mxu0 0
        %1158 = vmatprep.subr.bf16.mxu0 0
        %1159 = vmatpush1.bf16.xpose.msra.mxu0 0
        %1160 = vmatprep.subr.bf16.mxu0 0
        %1161 = vmatpush1.bf16.xpose.msra.mxu0 0
        %1162 = vmatprep.subr.bf16.mxu0 0
        %1163 = vmatpush1.bf16.xpose.msra.mxu0 0
        %1164 = vmatprep.subr.bf16.mxu0 0
        %1165 = vmatpush1.bf16.xpose.msra.mxu0 %v1148
        %1166 = vmatprep.subr.bf16.mxu0 0
        %1167 = vmatpush2.bf16.xpose.msra.mxu0 0
        %1168 = vmatprep.subr.bf16.mxu0 0
        %1169 = vmatpush2.bf16.xpose.msra.mxu0 0
        %1170 = vmatprep.subr.bf16.mxu0 0
        %1171 = vmatpush2.bf16.xpose.msra.mxu0 0
        %1172 = vmatprep.subr.bf16.mxu0 0
        %1173 = vmatpush2.bf16.xpose.msra.mxu0 0
        %1174 = vmatprep.subr.bf16.mxu0 0
        %1175 = vmatpush2.bf16.xpose.msra.mxu0 0
        %1176 = vmatprep.subr.bf16.mxu0 0
        %1177 = vmatpush2.bf16.xpose.msra.mxu0 0
        %1178 = vmatprep.subr.bf16.mxu0 0
        %1179 = vmatpush2.bf16.xpose.msra.mxu0 0
        %1180 = vmatprep.subr.bf16.mxu0 0
        %1181 = vmatpush2.bf16.xpose.msra.mxu0 0
        %1182 = vmatprep.mubr.bf16.mxu0 0
        %1183 = vmatmul.mubr.bf16.gmra.mxu0 %v1148
        %v1184 = vpop.f32.mrf.mxu0
        %v1185 = vadd.f32 0.0, %v1184
        %v1186 = vpop.f32.mrf.mxu0
        %v1187 = vpop.f32.mrf.mxu0
        %v1188 = vpop.f32.mrf.mxu0
        %1189 = vdwg.mxu0
        %v1191 = vsel %vm888, %v887, 0
        %1193 = vmatprep.subr.bf16.mxu0 0
        %1194 = vmatpush1.bf16.xpose.msra.mxu0 0
        %1195 = vmatprep.subr.bf16.mxu0 0
        %1196 = vmatpush1.bf16.xpose.msra.mxu0 0
        %1197 = vmatprep.subr.bf16.mxu0 0
        %1198 = vmatpush1.bf16.xpose.msra.mxu0 0
        %1199 = vmatprep.subr.bf16.mxu0 0
        %1200 = vmatpush1.bf16.xpose.msra.mxu0 0
        %1201 = vmatprep.subr.bf16.mxu0 0
        %1202 = vmatpush1.bf16.xpose.msra.mxu0 0
        %1203 = vmatprep.subr.bf16.mxu0 0
        %1204 = vmatpush1.bf16.xpose.msra.mxu0 0
        %1205 = vmatprep.subr.bf16.mxu0 0
        %1206 = vmatpush1.bf16.xpose.msra.mxu0 0
        %1207 = vmatprep.subr.bf16.mxu0 0
        %1208 = vmatpush1.bf16.xpose.msra.mxu0 %v1191
        %1209 = vmatprep.subr.bf16.mxu0 0
        %1210 = vmatpush2.bf16.xpose.msra.mxu0 0
        %1211 = vmatprep.subr.bf16.mxu0 0
        %1212 = vmatpush2.bf16.xpose.msra.mxu0 0
        %1213 = vmatprep.subr.bf16.mxu0 0
        %1214 = vmatpush2.bf16.xpose.msra.mxu0 0
        %1215 = vmatprep.subr.bf16.mxu0 0
        %1216 = vmatpush2.bf16.xpose.msra.mxu0 0
        %1217 = vmatprep.subr.bf16.mxu0 0
        %1218 = vmatpush2.bf16.xpose.msra.mxu0 0
        %1219 = vmatprep.subr.bf16.mxu0 0
        %1220 = vmatpush2.bf16.xpose.msra.mxu0 0
        %1221 = vmatprep.subr.bf16.mxu0 0
        %1222 = vmatpush2.bf16.xpose.msra.mxu0 0
        %1223 = vmatprep.subr.bf16.mxu0 0
        %1224 = vmatpush2.bf16.xpose.msra.mxu0 0
        %1225 = vmatprep.mubr.bf16.mxu0 0
        %1226 = vmatmul.mubr.bf16.gmra.mxu0 %v1191
        %v1227 = vpop.f32.mrf.mxu0
        %v1228 = vadd.f32 0.0, %v1227
        %v1229 = vpop.f32.mrf.mxu0
        %v1230 = vpop.f32.mrf.mxu0
        %v1231 = vpop.f32.mrf.mxu0
        %1232 = vdwg.mxu0
        %v1233 = vmul.f32 %v927, 0.5
        %v1234 = vmul.f32 %v970, 0.5
        %v1235 = vmul.f32 %v1013, 0.5
        %v1236 = vmul.f32 %v1056, 0.5
        %v1237 = vmul.f32 %v1099, 0.5
        %v1238 = vmul.f32 %v1142, 0.5
        %v1239 = vmul.f32 %v1185, 0.5
        %v1240 = vmul.f32 %v1228, 0.5
        %v1242 = vlaneseq
        %v1243 = vshrl.u32 %v1242, 7
        %v1244 = vsub.s32 0, %v1243
        %v1245 = vrot.slane %v426, %v1244
        %v1247 = vadd.f32 %v1233, %v1245
        %v1248 = vadd.f32 %v1234, %v1245
        %v1249 = vadd.f32 %v1235, %v1245
        %v1250 = vadd.f32 %v1236, %v1245
        %v1251 = vadd.f32 %v1237, %v1245
        %v1252 = vadd.f32 %v1238, %v1245
        %v1253 = vadd.f32 %v1239, %v1245
        %v1254 = vadd.f32 %v1240, %v1245
        %vm1255 = vcmask 64512
        %v1256 = vsel %vm1255, %v1247, -inf
        %1257 = vmax.xlane.f32.xlu0 %v1256
        %v1258 = vpop.xlane.xlu0 %1257
        %v1259 = vsel %vm1255, %v1248, -inf
        %1260 = vmax.xlane.f32.xlu0 %v1259
        %v1261 = vpop.xlane.xlu0 %1260
        %v1262 = vsel %vm1255, %v1249, -inf
        %1263 = vmax.xlane.f32.xlu0 %v1262
        %v1264 = vpop.xlane.xlu0 %1263
        %v1265 = vsel %vm1255, %v1250, -inf
        %1266 = vmax.xlane.f32.xlu0 %v1265
        %v1267 = vpop.xlane.xlu0 %1266
        %v1268 = vsel %vm1255, %v1251, -inf
        %1269 = vmax.xlane.f32.xlu0 %v1268
        %v1270 = vpop.xlane.xlu0 %1269
        %v1271 = vsel %vm1255, %v1252, -inf
        %1272 = vmax.xlane.f32.xlu0 %v1271
        %v1273 = vpop.xlane.xlu0 %1272
        %v1274 = vsel %vm1255, %v1253, -inf
        %1275 = vmax.xlane.f32.xlu0 %v1274
        %v1276 = vpop.xlane.xlu0 %1275
        %v1277 = vsel %vm1255, %v1254, -inf
        %1278 = vmax.xlane.f32.xlu0 %v1277
        %v1279 = vpop.xlane.xlu0 %1278
        %v1280 = vsub.f32 %v1247, %v1258
        %v1281 = vsub.f32 %v1248, %v1261
        %v1282 = vsub.f32 %v1249, %v1264
        %v1283 = vsub.f32 %v1250, %v1267
        %v1284 = vsub.f32 %v1251, %v1270
        %v1285 = vsub.f32 %v1252, %v1273
        %v1286 = vsub.f32 %v1253, %v1276
        %v1287 = vsub.f32 %v1254, %v1279
        %v1288 = vmul.f32 %v1280, 1.442695
        %v1289 = vpow.pop %v1288
        %v1290 = vmul.f32 %v1281, 1.442695
        %v1291 = vpow.pop %v1290
        %v1292 = vmul.f32 %v1282, 1.442695
        %v1293 = vpow.pop %v1292
        %v1294 = vmul.f32 %v1283, 1.442695
        %v1295 = vpow.pop %v1294
        %v1296 = vmul.f32 %v1284, 1.442695
        %v1297 = vpow.pop %v1296
        %v1298 = vmul.f32 %v1285, 1.442695
        %v1299 = vpow.pop %v1298
        %v1300 = vmul.f32 %v1286, 1.442695
        %v1301 = vpow.pop %v1300
        %v1302 = vmul.f32 %v1287, 1.442695
        %v1303 = vpow.pop %v1302
        %v1304 = vsel %vm1255, %v1289, 0.0
        %1305 = vadd.xlane.f32.xlu0 %v1304
        %v1306 = vpop.xlane.xlu0 %1305
        %v1307 = vsel %vm1255, %v1291, 0.0
        %1308 = vadd.xlane.f32.xlu0 %v1307
        %v1309 = vpop.xlane.xlu0 %1308
        %v1310 = vsel %vm1255, %v1293, 0.0
        %1311 = vadd.xlane.f32.xlu0 %v1310
        %v1312 = vpop.xlane.xlu0 %1311
        %v1313 = vsel %vm1255, %v1295, 0.0
        %1314 = vadd.xlane.f32.xlu0 %v1313
        %v1315 = vpop.xlane.xlu0 %1314
        %v1316 = vsel %vm1255, %v1297, 0.0
        %1317 = vadd.xlane.f32.xlu0 %v1316
        %v1318 = vpop.xlane.xlu0 %1317
        %v1319 = vsel %vm1255, %v1299, 0.0
        %1320 = vadd.xlane.f32.xlu0 %v1319
        %v1321 = vpop.xlane.xlu0 %1320
        %v1322 = vsel %vm1255, %v1301, 0.0
        %1323 = vadd.xlane.f32.xlu0 %v1322
        %v1324 = vpop.xlane.xlu0 %1323
        %v1325 = vsel %vm1255, %v1303, 0.0
        %1326 = vadd.xlane.f32.xlu0 %v1325
        %v1327 = vpop.xlane.xlu0 %1326
        %v1328 = vrcp.pop %v1306
        %v1329 = vrcp.pop %v1309
        %v1330 = vrcp.pop %v1312
        %v1331 = vrcp.pop %v1315
        %v1332 = vrcp.pop %v1318
        %v1333 = vrcp.pop %v1321
        %v1334 = vrcp.pop %v1324
        %v1335 = vrcp.pop %v1327
        %v1336 = vmul.f32 %v1289, %v1328
        %v1337 = vmul.f32 %v1291, %v1329
        %v1338 = vmul.f32 %v1293, %v1330
        %v1339 = vmul.f32 %v1295, %v1331
        %v1340 = vmul.f32 %v1297, %v1332
        %v1341 = vmul.f32 %v1299, %v1333
        %v1342 = vmul.f32 %v1301, %v1334
        %v1343 = vmul.f32 %v1303, %v1335
        %v1344 = vpack.c.bf16 %v1336, %v1336
        %v1345 = vpack.c.bf16 %v1337, %v1337
        %v1346 = vpack.c.bf16 %v1338, %v1338
        %v1347 = vpack.c.bf16 %v1339, %v1339
        %v1348 = vpack.c.bf16 %v1340, %v1340
        %v1349 = vpack.c.bf16 %v1341, %v1341
        %v1350 = vpack.c.bf16 %v1342, %v1342
        %v1351 = vpack.c.bf16 %v1343, %v1343
        %v1353 = vsel %vm1255, %v1344, 0
        %vm1355 = vcmask 1043456
        %v1356 = vsel %vm1355, %v880, 0
        %1358 = vmatprep.subr.bf16.mxu0 0
        %1359 = vmatpush1.bf16.msra.mxu0 0
        %1360 = vmatprep.subr.bf16.mxu0 0
        %1361 = vmatpush1.bf16.msra.mxu0 0
        %1362 = vmatprep.subr.bf16.mxu0 0
        %1363 = vmatpush1.bf16.msra.mxu0 0
        %1364 = vmatprep.subr.bf16.mxu0 0
        %1365 = vmatpush1.bf16.msra.mxu0 0
        %1366 = vmatprep.subr.bf16.mxu0 0
        %1367 = vmatpush1.bf16.msra.mxu0 0
        %1368 = vmatprep.subr.bf16.mxu0 0
        %1369 = vmatpush1.bf16.msra.mxu0 0
        %1370 = vmatprep.subr.bf16.mxu0 0
        %1371 = vmatpush1.bf16.msra.mxu0 0
        %1372 = vmatprep.subr.bf16.mxu0 0
        %1373 = vmatpush1.bf16.msra.mxu0 %v1356
        %1374 = vmatprep.subr.bf16.mxu0 0
        %1375 = vmatpush2.bf16.msra.mxu0 0
        %1376 = vmatprep.subr.bf16.mxu0 0
        %1377 = vmatpush2.bf16.msra.mxu0 0
        %1378 = vmatprep.subr.bf16.mxu0 0
        %1379 = vmatpush2.bf16.msra.mxu0 0
        %1380 = vmatprep.subr.bf16.mxu0 0
        %1381 = vmatpush2.bf16.msra.mxu0 0
        %1382 = vmatprep.subr.bf16.mxu0 0
        %1383 = vmatpush2.bf16.msra.mxu0 0
        %1384 = vmatprep.subr.bf16.mxu0 0
        %1385 = vmatpush2.bf16.msra.mxu0 0
        %1386 = vmatprep.subr.bf16.mxu0 0
        %1387 = vmatpush2.bf16.msra.mxu0 0
        %1388 = vmatprep.subr.bf16.mxu0 0
        %1389 = vmatpush2.bf16.msra.mxu0 0
        %1390 = vmatprep.mubr.bf16.mxu0 0
        %1391 = vmatmul.mubr.bf16.gmra.mxu0 %v1353
        %v1392 = vpop.f32.mrf.mxu0
        %v1393 = vadd.f32 0.0, %v1392
        %v1394 = vpop.f32.mrf.mxu0
        %v1395 = vpop.f32.mrf.mxu0
        %v1396 = vpop.f32.mrf.mxu0
        %1397 = vdwg.mxu0
        %v1399 = vsel %vm1255, %v1345, 0
        %v1401 = vsel %vm1355, %v881, 0
        %1403 = vmatprep.subr.bf16.mxu0 0
        %1404 = vmatpush1.bf16.msra.mxu0 0
        %1405 = vmatprep.subr.bf16.mxu0 0
        %1406 = vmatpush1.bf16.msra.mxu0 0
        %1407 = vmatprep.subr.bf16.mxu0 0
        %1408 = vmatpush1.bf16.msra.mxu0 0
        %1409 = vmatprep.subr.bf16.mxu0 0
        %1410 = vmatpush1.bf16.msra.mxu0 0
        %1411 = vmatprep.subr.bf16.mxu0 0
        %1412 = vmatpush1.bf16.msra.mxu0 0
        %1413 = vmatprep.subr.bf16.mxu0 0
        %1414 = vmatpush1.bf16.msra.mxu0 0
        %1415 = vmatprep.subr.bf16.mxu0 0
        %1416 = vmatpush1.bf16.msra.mxu0 0
        %1417 = vmatprep.subr.bf16.mxu0 0
        %1418 = vmatpush1.bf16.msra.mxu0 %v1401
        %1419 = vmatprep.subr.bf16.mxu0 0
        %1420 = vmatpush2.bf16.msra.mxu0 0
        %1421 = vmatprep.subr.bf16.mxu0 0
        %1422 = vmatpush2.bf16.msra.mxu0 0
        %1423 = vmatprep.subr.bf16.mxu0 0
        %1424 = vmatpush2.bf16.msra.mxu0 0
        %1425 = vmatprep.subr.bf16.mxu0 0
        %1426 = vmatpush2.bf16.msra.mxu0 0
        %1427 = vmatprep.subr.bf16.mxu0 0
        %1428 = vmatpush2.bf16.msra.mxu0 0
        %1429 = vmatprep.subr.bf16.mxu0 0
        %1430 = vmatpush2.bf16.msra.mxu0 0
        %1431 = vmatprep.subr.bf16.mxu0 0
        %1432 = vmatpush2.bf16.msra.mxu0 0
        %1433 = vmatprep.subr.bf16.mxu0 0
        %1434 = vmatpush2.bf16.msra.mxu0 0
        %1435 = vmatprep.mubr.bf16.mxu0 0
        %1436 = vmatmul.mubr.bf16.gmra.mxu0 %v1399
        %v1437 = vpop.f32.mrf.mxu0
        %v1438 = vadd.f32 0.0, %v1437
        %v1439 = vpop.f32.mrf.mxu0
        %v1440 = vpop.f32.mrf.mxu0
        %v1441 = vpop.f32.mrf.mxu0
        %1442 = vdwg.mxu0
        %v1444 = vsel %vm1255, %v1346, 0
        %v1446 = vsel %vm1355, %v882, 0
        %1448 = vmatprep.subr.bf16.mxu0 0
        %1449 = vmatpush1.bf16.msra.mxu0 0
        %1450 = vmatprep.subr.bf16.mxu0 0
        %1451 = vmatpush1.bf16.msra.mxu0 0
        %1452 = vmatprep.subr.bf16.mxu0 0
        %1453 = vmatpush1.bf16.msra.mxu0 0
        %1454 = vmatprep.subr.bf16.mxu0 0
        %1455 = vmatpush1.bf16.msra.mxu0 0
        %1456 = vmatprep.subr.bf16.mxu0 0
        %1457 = vmatpush1.bf16.msra.mxu0 0
        %1458 = vmatprep.subr.bf16.mxu0 0
        %1459 = vmatpush1.bf16.msra.mxu0 0
        %1460 = vmatprep.subr.bf16.mxu0 0
        %1461 = vmatpush1.bf16.msra.mxu0 0
        %1462 = vmatprep.subr.bf16.mxu0 0
        %1463 = vmatpush1.bf16.msra.mxu0 %v1446
        %1464 = vmatprep.subr.bf16.mxu0 0
        %1465 = vmatpush2.bf16.msra.mxu0 0
        %1466 = vmatprep.subr.bf16.mxu0 0
        %1467 = vmatpush2.bf16.msra.mxu0 0
        %1468 = vmatprep.subr.bf16.mxu0 0
        %1469 = vmatpush2.bf16.msra.mxu0 0
        %1470 = vmatprep.subr.bf16.mxu0 0
        %1471 = vmatpush2.bf16.msra.mxu0 0
        %1472 = vmatprep.subr.bf16.mxu0 0
        %1473 = vmatpush2.bf16.msra.mxu0 0
        %1474 = vmatprep.subr.bf16.mxu0 0
        %1475 = vmatpush2.bf16.msra.mxu0 0
        %1476 = vmatprep.subr.bf16.mxu0 0
        %1477 = vmatpush2.bf16.msra.mxu0 0
        %1478 = vmatprep.subr.bf16.mxu0 0
        %1479 = vmatpush2.bf16.msra.mxu0 0
        %1480 = vmatprep.mubr.bf16.mxu0 0
        %1481 = vmatmul.mubr.bf16.gmra.mxu0 %v1444
        %v1482 = vpop.f32.mrf.mxu0
        %v1483 = vadd.f32 0.0, %v1482
        %v1484 = vpop.f32.mrf.mxu0
        %v1485 = vpop.f32.mrf.mxu0
        %v1486 = vpop.f32.mrf.mxu0
        %1487 = vdwg.mxu0
        %v1489 = vsel %vm1255, %v1347, 0
        %v1491 = vsel %vm1355, %v883, 0
        %1493 = vmatprep.subr.bf16.mxu0 0
        %1494 = vmatpush1.bf16.msra.mxu0 0
        %1495 = vmatprep.subr.bf16.mxu0 0
        %1496 = vmatpush1.bf16.msra.mxu0 0
        %1497 = vmatprep.subr.bf16.mxu0 0
        %1498 = vmatpush1.bf16.msra.mxu0 0
        %1499 = vmatprep.subr.bf16.mxu0 0
        %1500 = vmatpush1.bf16.msra.mxu0 0
        %1501 = vmatprep.subr.bf16.mxu0 0
        %1502 = vmatpush1.bf16.msra.mxu0 0
        %1503 = vmatprep.subr.bf16.mxu0 0
        %1504 = vmatpush1.bf16.msra.mxu0 0
        %1505 = vmatprep.subr.bf16.mxu0 0
        %1506 = vmatpush1.bf16.msra.mxu0 0
        %1507 = vmatprep.subr.bf16.mxu0 0
        %1508 = vmatpush1.bf16.msra.mxu0 %v1491
        %1509 = vmatprep.subr.bf16.mxu0 0
        %1510 = vmatpush2.bf16.msra.mxu0 0
        %1511 = vmatprep.subr.bf16.mxu0 0
        %1512 = vmatpush2.bf16.msra.mxu0 0
        %1513 = vmatprep.subr.bf16.mxu0 0
        %1514 = vmatpush2.bf16.msra.mxu0 0
        %1515 = vmatprep.subr.bf16.mxu0 0
        %1516 = vmatpush2.bf16.msra.mxu0 0
        %1517 = vmatprep.subr.bf16.mxu0 0
        %1518 = vmatpush2.bf16.msra.mxu0 0
        %1519 = vmatprep.subr.bf16.mxu0 0
        %1520 = vmatpush2.bf16.msra.mxu0 0
        %1521 = vmatprep.subr.bf16.mxu0 0
        %1522 = vmatpush2.bf16.msra.mxu0 0
        %1523 = vmatprep.subr.bf16.mxu0 0
        %1524 = vmatpush2.bf16.msra.mxu0 0
        %1525 = vmatprep.mubr.bf16.mxu0 0
        %1526 = vmatmul.mubr.bf16.gmra.mxu0 %v1489
        %v1527 = vpop.f32.mrf.mxu0
        %v1528 = vadd.f32 0.0, %v1527
        %v1529 = vpop.f32.mrf.mxu0
        %v1530 = vpop.f32.mrf.mxu0
        %v1531 = vpop.f32.mrf.mxu0
        %1532 = vdwg.mxu0
        %v1534 = vsel %vm1255, %v1348, 0
        %v1536 = vsel %vm1355, %v884, 0
        %1538 = vmatprep.subr.bf16.mxu0 0
        %1539 = vmatpush1.bf16.msra.mxu0 0
        %1540 = vmatprep.subr.bf16.mxu0 0
        %1541 = vmatpush1.bf16.msra.mxu0 0
        %1542 = vmatprep.subr.bf16.mxu0 0
        %1543 = vmatpush1.bf16.msra.mxu0 0
        %1544 = vmatprep.subr.bf16.mxu0 0
        %1545 = vmatpush1.bf16.msra.mxu0 0
        %1546 = vmatprep.subr.bf16.mxu0 0
        %1547 = vmatpush1.bf16.msra.mxu0 0
        %1548 = vmatprep.subr.bf16.mxu0 0
        %1549 = vmatpush1.bf16.msra.mxu0 0
        %1550 = vmatprep.subr.bf16.mxu0 0
        %1551 = vmatpush1.bf16.msra.mxu0 0
        %1552 = vmatprep.subr.bf16.mxu0 0
        %1553 = vmatpush1.bf16.msra.mxu0 %v1536
        %1554 = vmatprep.subr.bf16.mxu0 0
        %1555 = vmatpush2.bf16.msra.mxu0 0
        %1556 = vmatprep.subr.bf16.mxu0 0
        %1557 = vmatpush2.bf16.msra.mxu0 0
        %1558 = vmatprep.subr.bf16.mxu0 0
        %1559 = vmatpush2.bf16.msra.mxu0 0
        %1560 = vmatprep.subr.bf16.mxu0 0
        %1561 = vmatpush2.bf16.msra.mxu0 0
        %1562 = vmatprep.subr.bf16.mxu0 0
        %1563 = vmatpush2.bf16.msra.mxu0 0
        %1564 = vmatprep.subr.bf16.mxu0 0
        %1565 = vmatpush2.bf16.msra.mxu0 0
        %1566 = vmatprep.subr.bf16.mxu0 0
        %1567 = vmatpush2.bf16.msra.mxu0 0
        %1568 = vmatprep.subr.bf16.mxu0 0
        %1569 = vmatpush2.bf16.msra.mxu0 0
        %1570 = vmatprep.mubr.bf16.mxu0 0
        %1571 = vmatmul.mubr.bf16.gmra.mxu0 %v1534
        %v1572 = vpop.f32.mrf.mxu0
        %v1573 = vadd.f32 0.0, %v1572
        %v1574 = vpop.f32.mrf.mxu0
        %v1575 = vpop.f32.mrf.mxu0
        %v1576 = vpop.f32.mrf.mxu0
        %1577 = vdwg.mxu0
        %v1579 = vsel %vm1255, %v1349, 0
        %v1581 = vsel %vm1355, %v885, 0
        %1583 = vmatprep.subr.bf16.mxu0 0
        %1584 = vmatpush1.bf16.msra.mxu0 0
        %1585 = vmatprep.subr.bf16.mxu0 0
        %1586 = vmatpush1.bf16.msra.mxu0 0
        %1587 = vmatprep.subr.bf16.mxu0 0
        %1588 = vmatpush1.bf16.msra.mxu0 0
        %1589 = vmatprep.subr.bf16.mxu0 0
        %1590 = vmatpush1.bf16.msra.mxu0 0
        %1591 = vmatprep.subr.bf16.mxu0 0
        %1592 = vmatpush1.bf16.msra.mxu0 0
        %1593 = vmatprep.subr.bf16.mxu0 0
        %1594 = vmatpush1.bf16.msra.mxu0 0
        %1595 = vmatprep.subr.bf16.mxu0 0
        %1596 = vmatpush1.bf16.msra.mxu0 0
        %1597 = vmatprep.subr.bf16.mxu0 0
        %1598 = vmatpush1.bf16.msra.mxu0 %v1581
        %1599 = vmatprep.subr.bf16.mxu0 0
        %1600 = vmatpush2.bf16.msra.mxu0 0
        %1601 = vmatprep.subr.bf16.mxu0 0
        %1602 = vmatpush2.bf16.msra.mxu0 0
        %1603 = vmatprep.subr.bf16.mxu0 0
        %1604 = vmatpush2.bf16.msra.mxu0 0
        %1605 = vmatprep.subr.bf16.mxu0 0
        %1606 = vmatpush2.bf16.msra.mxu0 0
        %1607 = vmatprep.subr.bf16.mxu0 0
        %1608 = vmatpush2.bf16.msra.mxu0 0
        %1609 = vmatprep.subr.bf16.mxu0 0
        %1610 = vmatpush2.bf16.msra.mxu0 0
        %1611 = vmatprep.subr.bf16.mxu0 0
        %1612 = vmatpush2.bf16.msra.mxu0 0
        %1613 = vmatprep.subr.bf16.mxu0 0
        %1614 = vmatpush2.bf16.msra.mxu0 0
        %1615 = vmatprep.mubr.bf16.mxu0 0
        %1616 = vmatmul.mubr.bf16.gmra.mxu0 %v1579
        %v1617 = vpop.f32.mrf.mxu0
        %v1618 = vadd.f32 0.0, %v1617
        %v1619 = vpop.f32.mrf.mxu0
        %v1620 = vpop.f32.mrf.mxu0
        %v1621 = vpop.f32.mrf.mxu0
        %1622 = vdwg.mxu0
        %v1624 = vsel %vm1255, %v1350, 0
        %v1626 = vsel %vm1355, %v886, 0
        %1628 = vmatprep.subr.bf16.mxu0 0
        %1629 = vmatpush1.bf16.msra.mxu0 0
        %1630 = vmatprep.subr.bf16.mxu0 0
        %1631 = vmatpush1.bf16.msra.mxu0 0
        %1632 = vmatprep.subr.bf16.mxu0 0
        %1633 = vmatpush1.bf16.msra.mxu0 0
        %1634 = vmatprep.subr.bf16.mxu0 0
        %1635 = vmatpush1.bf16.msra.mxu0 0
        %1636 = vmatprep.subr.bf16.mxu0 0
        %1637 = vmatpush1.bf16.msra.mxu0 0
        %1638 = vmatprep.subr.bf16.mxu0 0
        %1639 = vmatpush1.bf16.msra.mxu0 0
        %1640 = vmatprep.subr.bf16.mxu0 0
        %1641 = vmatpush1.bf16.msra.mxu0 0
        %1642 = vmatprep.subr.bf16.mxu0 0
        %1643 = vmatpush1.bf16.msra.mxu0 %v1626
        %1644 = vmatprep.subr.bf16.mxu0 0
        %1645 = vmatpush2.bf16.msra.mxu0 0
        %1646 = vmatprep.subr.bf16.mxu0 0
        %1647 = vmatpush2.bf16.msra.mxu0 0
        %1648 = vmatprep.subr.bf16.mxu0 0
        %1649 = vmatpush2.bf16.msra.mxu0 0
        %1650 = vmatprep.subr.bf16.mxu0 0
        %1651 = vmatpush2.bf16.msra.mxu0 0
        %1652 = vmatprep.subr.bf16.mxu0 0
        %1653 = vmatpush2.bf16.msra.mxu0 0
        %1654 = vmatprep.subr.bf16.mxu0 0
        %1655 = vmatpush2.bf16.msra.mxu0 0
        %1656 = vmatprep.subr.bf16.mxu0 0
        %1657 = vmatpush2.bf16.msra.mxu0 0
        %1658 = vmatprep.subr.bf16.mxu0 0
        %1659 = vmatpush2.bf16.msra.mxu0 0
        %1660 = vmatprep.mubr.bf16.mxu0 0
        %1661 = vmatmul.mubr.bf16.gmra.mxu0 %v1624
        %v1662 = vpop.f32.mrf.mxu0
        %v1663 = vadd.f32 0.0, %v1662
        %v1664 = vpop.f32.mrf.mxu0
        %v1665 = vpop.f32.mrf.mxu0
        %v1666 = vpop.f32.mrf.mxu0
        %1667 = vdwg.mxu0
        %v1669 = vsel %vm1255, %v1351, 0
        %v1671 = vsel %vm1355, %v887, 0
        %1673 = vmatprep.subr.bf16.mxu0 0
        %1674 = vmatpush1.bf16.msra.mxu0 0
        %1675 = vmatprep.subr.bf16.mxu0 0
        %1676 = vmatpush1.bf16.msra.mxu0 0
        %1677 = vmatprep.subr.bf16.mxu0 0
        %1678 = vmatpush1.bf16.msra.mxu0 0
        %1679 = vmatprep.subr.bf16.mxu0 0
        %1680 = vmatpush1.bf16.msra.mxu0 0
        %1681 = vmatprep.subr.bf16.mxu0 0
        %1682 = vmatpush1.bf16.msra.mxu0 0
        %1683 = vmatprep.subr.bf16.mxu0 0
        %1684 = vmatpush1.bf16.msra.mxu0 0
        %1685 = vmatprep.subr.bf16.mxu0 0
        %1686 = vmatpush1.bf16.msra.mxu0 0
        %1687 = vmatprep.subr.bf16.mxu0 0
        %1688 = vmatpush1.bf16.msra.mxu0 %v1671
        %1689 = vmatprep.subr.bf16.mxu0 0
        %1690 = vmatpush2.bf16.msra.mxu0 0
        %1691 = vmatprep.subr.bf16.mxu0 0
        %1692 = vmatpush2.bf16.msra.mxu0 0
        %1693 = vmatprep.subr.bf16.mxu0 0
        %1694 = vmatpush2.bf16.msra.mxu0 0
        %1695 = vmatprep.subr.bf16.mxu0 0
        %1696 = vmatpush2.bf16.msra.mxu0 0
        %1697 = vmatprep.subr.bf16.mxu0 0
        %1698 = vmatpush2.bf16.msra.mxu0 0
        %1699 = vmatprep.subr.bf16.mxu0 0
        %1700 = vmatpush2.bf16.msra.mxu0 0
        %1701 = vmatprep.subr.bf16.mxu0 0
        %1702 = vmatpush2.bf16.msra.mxu0 0
        %1703 = vmatprep.subr.bf16.mxu0 0
        %1704 = vmatpush2.bf16.msra.mxu0 0
        %1705 = vmatprep.mubr.bf16.mxu0 0
        %1706 = vmatmul.mubr.bf16.gmra.mxu0 %v1669
        %v1707 = vpop.f32.mrf.mxu0
        %v1708 = vadd.f32 0.0, %v1707
        %v1709 = vpop.f32.mrf.mxu0
        %v1710 = vpop.f32.mrf.mxu0
        %v1711 = vpop.f32.mrf.mxu0
        %1712 = vdwg.mxu0
        %v1713 = vpack.c.bf16 %v1393, %v1393
        %v1714 = vpack.c.bf16 %v1438, %v1438
        %v1715 = vpack.c.bf16 %v1483, %v1483
        %v1716 = vpack.c.bf16 %v1528, %v1528
        %v1717 = vpack.c.bf16 %v1573, %v1573
        %v1718 = vpack.c.bf16 %v1618, %v1618
        %v1719 = vpack.c.bf16 %v1663, %v1663
        %v1720 = vpack.c.bf16 %v1708, %v1708
        %v1721 = vld [vmem:[%s3] sm:$0x3]
        %v1722 = vld [vmem:[%s3 + $0x2] sm:$0x3]
        %v1723 = vld [vmem:[%s3 + $0x4] sm:$0x3]
        %v1724 = vld [vmem:[%s3 + $0x6] sm:$0x3]
        %v1725 = vld [vmem:[%s3 + $0x8] sm:$0x3]
        %v1726 = vld [vmem:[%s3 + $0xa] sm:$0x3]
        %v1727 = vld [vmem:[%s3 + $0xc] sm:$0x3]
        %v1728 = vld [vmem:[%s3 + $0xe] sm:$0x3]
        %v1730 = vsel %vm888, %v1713, 0
        %vm1732 = vcmask 1041408
        %v1734 = vsel %vm1732, %v1721, 0
        %1736 = vmatprep.subr.bf16.mxu0 0
        %1737 = vmatpush1.bf16.msra.mxu0 0
        %1738 = vmatprep.subr.bf16.mxu0 0
        %1739 = vmatpush1.bf16.msra.mxu0 0
        %1740 = vmatprep.subr.bf16.mxu0 0
        %1741 = vmatpush1.bf16.msra.mxu0 0
        %1742 = vmatprep.subr.bf16.mxu0 0
        %1743 = vmatpush1.bf16.msra.mxu0 0
        %1744 = vmatprep.subr.bf16.mxu0 0
        %1745 = vmatpush1.bf16.msra.mxu0 0
        %1746 = vmatprep.subr.bf16.mxu0 0
        %1747 = vmatpush1.bf16.msra.mxu0 0
        %1748 = vmatprep.subr.bf16.mxu0 0
        %1749 = vmatpush1.bf16.msra.mxu0 0
        %1750 = vmatprep.subr.bf16.mxu0 0
        %1751 = vmatpush1.bf16.msra.mxu0 %v1734
        %1752 = vmatprep.subr.bf16.mxu0 0
        %1753 = vmatpush2.bf16.msra.mxu0 0
        %1754 = vmatprep.subr.bf16.mxu0 0
        %1755 = vmatpush2.bf16.msra.mxu0 0
        %1756 = vmatprep.subr.bf16.mxu0 0
        %1757 = vmatpush2.bf16.msra.mxu0 0
        %1758 = vmatprep.subr.bf16.mxu0 0
        %1759 = vmatpush2.bf16.msra.mxu0 0
        %1760 = vmatprep.subr.bf16.mxu0 0
        %1761 = vmatpush2.bf16.msra.mxu0 0
        %1762 = vmatprep.subr.bf16.mxu0 0
        %1763 = vmatpush2.bf16.msra.mxu0 0
        %1764 = vmatprep.subr.bf16.mxu0 0
        %1765 = vmatpush2.bf16.msra.mxu0 0
        %1766 = vmatprep.subr.bf16.mxu0 0
        %1767 = vmatpush2.bf16.msra.mxu0 0
        %1768 = vmatprep.mubr.bf16.mxu0 0
        %1769 = vmatmul.mubr.bf16.gmra.mxu0 %v1730
        %v1770 = vpop.f32.mrf.mxu0
        %v1771 = vadd.f32 0.0, %v1770
        %v1772 = vpop.f32.mrf.mxu0
        %v1773 = vpop.f32.mrf.mxu0
        %v1774 = vpop.f32.mrf.mxu0
        %1775 = vdwg.mxu0
        %v1777 = vsel %vm888, %v1714, 0
        %v1780 = vsel %vm1732, %v1722, 0
        %1782 = vmatprep.subr.bf16.mxu0 0
        %1783 = vmatpush1.bf16.msra.mxu0 0
        %1784 = vmatprep.subr.bf16.mxu0 0
        %1785 = vmatpush1.bf16.msra.mxu0 0
        %1786 = vmatprep.subr.bf16.mxu0 0
        %1787 = vmatpush1.bf16.msra.mxu0 0
        %1788 = vmatprep.subr.bf16.mxu0 0
        %1789 = vmatpush1.bf16.msra.mxu0 0
        %1790 = vmatprep.subr.bf16.mxu0 0
        %1791 = vmatpush1.bf16.msra.mxu0 0
        %1792 = vmatprep.subr.bf16.mxu0 0
        %1793 = vmatpush1.bf16.msra.mxu0 0
        %1794 = vmatprep.subr.bf16.mxu0 0
        %1795 = vmatpush1.bf16.msra.mxu0 0
        %1796 = vmatprep.subr.bf16.mxu0 0
        %1797 = vmatpush1.bf16.msra.mxu0 %v1780
        %1798 = vmatprep.subr.bf16.mxu0 0
        %1799 = vmatpush2.bf16.msra.mxu0 0
        %1800 = vmatprep.subr.bf16.mxu0 0
        %1801 = vmatpush2.bf16.msra.mxu0 0
        %1802 = vmatprep.subr.bf16.mxu0 0
        %1803 = vmatpush2.bf16.msra.mxu0 0
        %1804 = vmatprep.subr.bf16.mxu0 0
        %1805 = vmatpush2.bf16.msra.mxu0 0
        %1806 = vmatprep.subr.bf16.mxu0 0
        %1807 = vmatpush2.bf16.msra.mxu0 0
        %1808 = vmatprep.subr.bf16.mxu0 0
        %1809 = vmatpush2.bf16.msra.mxu0 0
        %1810 = vmatprep.subr.bf16.mxu0 0
        %1811 = vmatpush2.bf16.msra.mxu0 0
        %1812 = vmatprep.subr.bf16.mxu0 0
        %1813 = vmatpush2.bf16.msra.mxu0 0
        %1814 = vmatprep.mubr.bf16.mxu0 0
        %1815 = vmatmul.mubr.bf16.gmra.mxu0 %v1777
        %v1816 = vpop.f32.mrf.mxu0
        %v1817 = vadd.f32 0.0, %v1816
        %v1818 = vpop.f32.mrf.mxu0
        %v1819 = vpop.f32.mrf.mxu0
        %v1820 = vpop.f32.mrf.mxu0
        %1821 = vdwg.mxu0
        %v1823 = vsel %vm888, %v1715, 0
        %v1826 = vsel %vm1732, %v1723, 0
        %1828 = vmatprep.subr.bf16.mxu0 0
        %1829 = vmatpush1.bf16.msra.mxu0 0
        %1830 = vmatprep.subr.bf16.mxu0 0
        %1831 = vmatpush1.bf16.msra.mxu0 0
        %1832 = vmatprep.subr.bf16.mxu0 0
        %1833 = vmatpush1.bf16.msra.mxu0 0
        %1834 = vmatprep.subr.bf16.mxu0 0
        %1835 = vmatpush1.bf16.msra.mxu0 0
        %1836 = vmatprep.subr.bf16.mxu0 0
        %1837 = vmatpush1.bf16.msra.mxu0 0
        %1838 = vmatprep.subr.bf16.mxu0 0
        %1839 = vmatpush1.bf16.msra.mxu0 0
        %1840 = vmatprep.subr.bf16.mxu0 0
        %1841 = vmatpush1.bf16.msra.mxu0 0
        %1842 = vmatprep.subr.bf16.mxu0 0
        %1843 = vmatpush1.bf16.msra.mxu0 %v1826
        %1844 = vmatprep.subr.bf16.mxu0 0
        %1845 = vmatpush2.bf16.msra.mxu0 0
        %1846 = vmatprep.subr.bf16.mxu0 0
        %1847 = vmatpush2.bf16.msra.mxu0 0
        %1848 = vmatprep.subr.bf16.mxu0 0
        %1849 = vmatpush2.bf16.msra.mxu0 0
        %1850 = vmatprep.subr.bf16.mxu0 0
        %1851 = vmatpush2.bf16.msra.mxu0 0
        %1852 = vmatprep.subr.bf16.mxu0 0
        %1853 = vmatpush2.bf16.msra.mxu0 0
        %1854 = vmatprep.subr.bf16.mxu0 0
        %1855 = vmatpush2.bf16.msra.mxu0 0
        %1856 = vmatprep.subr.bf16.mxu0 0
        %1857 = vmatpush2.bf16.msra.mxu0 0
        %1858 = vmatprep.subr.bf16.mxu0 0
        %1859 = vmatpush2.bf16.msra.mxu0 0
        %1860 = vmatprep.mubr.bf16.mxu0 0
        %1861 = vmatmul.mubr.bf16.gmra.mxu0 %v1823
        %v1862 = vpop.f32.mrf.mxu0
        %v1863 = vadd.f32 0.0, %v1862
        %v1864 = vpop.f32.mrf.mxu0
        %v1865 = vpop.f32.mrf.mxu0
        %v1866 = vpop.f32.mrf.mxu0
        %1867 = vdwg.mxu0
        %v1869 = vsel %vm888, %v1716, 0
        %v1872 = vsel %vm1732, %v1724, 0
        %1874 = vmatprep.subr.bf16.mxu0 0
        %1875 = vmatpush1.bf16.msra.mxu0 0
        %1876 = vmatprep.subr.bf16.mxu0 0
        %1877 = vmatpush1.bf16.msra.mxu0 0
        %1878 = vmatprep.subr.bf16.mxu0 0
        %1879 = vmatpush1.bf16.msra.mxu0 0
        %1880 = vmatprep.subr.bf16.mxu0 0
        %1881 = vmatpush1.bf16.msra.mxu0 0
        %1882 = vmatprep.subr.bf16.mxu0 0
        %1883 = vmatpush1.bf16.msra.mxu0 0
        %1884 = vmatprep.subr.bf16.mxu0 0
        %1885 = vmatpush1.bf16.msra.mxu0 0
        %1886 = vmatprep.subr.bf16.mxu0 0
        %1887 = vmatpush1.bf16.msra.mxu0 0
        %1888 = vmatprep.subr.bf16.mxu0 0
        %1889 = vmatpush1.bf16.msra.mxu0 %v1872
        %1890 = vmatprep.subr.bf16.mxu0 0
        %1891 = vmatpush2.bf16.msra.mxu0 0
        %1892 = vmatprep.subr.bf16.mxu0 0
        %1893 = vmatpush2.bf16.msra.mxu0 0
        %1894 = vmatprep.subr.bf16.mxu0 0
        %1895 = vmatpush2.bf16.msra.mxu0 0
        %1896 = vmatprep.subr.bf16.mxu0 0
        %1897 = vmatpush2.bf16.msra.mxu0 0
        %1898 = vmatprep.subr.bf16.mxu0 0
        %1899 = vmatpush2.bf16.msra.mxu0 0
        %1900 = vmatprep.subr.bf16.mxu0 0
        %1901 = vmatpush2.bf16.msra.mxu0 0
        %1902 = vmatprep.subr.bf16.mxu0 0
        %1903 = vmatpush2.bf16.msra.mxu0 0
        %1904 = vmatprep.subr.bf16.mxu0 0
        %1905 = vmatpush2.bf16.msra.mxu0 0
        %1906 = vmatprep.mubr.bf16.mxu0 0
        %1907 = vmatmul.mubr.bf16.gmra.mxu0 %v1869
        %v1908 = vpop.f32.mrf.mxu0
        %v1909 = vadd.f32 0.0, %v1908
        %v1910 = vpop.f32.mrf.mxu0
        %v1911 = vpop.f32.mrf.mxu0
        %v1912 = vpop.f32.mrf.mxu0
        %1913 = vdwg.mxu0
        %v1915 = vsel %vm888, %v1717, 0
        %v1918 = vsel %vm1732, %v1725, 0
        %1920 = vmatprep.subr.bf16.mxu0 0
        %1921 = vmatpush1.bf16.msra.mxu0 0
        %1922 = vmatprep.subr.bf16.mxu0 0
        %1923 = vmatpush1.bf16.msra.mxu0 0
        %1924 = vmatprep.subr.bf16.mxu0 0
        %1925 = vmatpush1.bf16.msra.mxu0 0
        %1926 = vmatprep.subr.bf16.mxu0 0
        %1927 = vmatpush1.bf16.msra.mxu0 0
        %1928 = vmatprep.subr.bf16.mxu0 0
        %1929 = vmatpush1.bf16.msra.mxu0 0
        %1930 = vmatprep.subr.bf16.mxu0 0
        %1931 = vmatpush1.bf16.msra.mxu0 0
        %1932 = vmatprep.subr.bf16.mxu0 0
        %1933 = vmatpush1.bf16.msra.mxu0 0
        %1934 = vmatprep.subr.bf16.mxu0 0
        %1935 = vmatpush1.bf16.msra.mxu0 %v1918
        %1936 = vmatprep.subr.bf16.mxu0 0
        %1937 = vmatpush2.bf16.msra.mxu0 0
        %1938 = vmatprep.subr.bf16.mxu0 0
        %1939 = vmatpush2.bf16.msra.mxu0 0
        %1940 = vmatprep.subr.bf16.mxu0 0
        %1941 = vmatpush2.bf16.msra.mxu0 0
        %1942 = vmatprep.subr.bf16.mxu0 0
        %1943 = vmatpush2.bf16.msra.mxu0 0
        %1944 = vmatprep.subr.bf16.mxu0 0
        %1945 = vmatpush2.bf16.msra.mxu0 0
        %1946 = vmatprep.subr.bf16.mxu0 0
        %1947 = vmatpush2.bf16.msra.mxu0 0
        %1948 = vmatprep.subr.bf16.mxu0 0
        %1949 = vmatpush2.bf16.msra.mxu0 0
        %1950 = vmatprep.subr.bf16.mxu0 0
        %1951 = vmatpush2.bf16.msra.mxu0 0
        %1952 = vmatprep.mubr.bf16.mxu0 0
        %1953 = vmatmul.mubr.bf16.gmra.mxu0 %v1915
        %v1954 = vpop.f32.mrf.mxu0
        %v1955 = vadd.f32 0.0, %v1954
        %v1956 = vpop.f32.mrf.mxu0
        %v1957 = vpop.f32.mrf.mxu0
        %v1958 = vpop.f32.mrf.mxu0
        %1959 = vdwg.mxu0
        %v1961 = vsel %vm888, %v1718, 0
        %v1964 = vsel %vm1732, %v1726, 0
        %1966 = vmatprep.subr.bf16.mxu0 0
        %1967 = vmatpush1.bf16.msra.mxu0 0
        %1968 = vmatprep.subr.bf16.mxu0 0
        %1969 = vmatpush1.bf16.msra.mxu0 0
        %1970 = vmatprep.subr.bf16.mxu0 0
        %1971 = vmatpush1.bf16.msra.mxu0 0
        %1972 = vmatprep.subr.bf16.mxu0 0
        %1973 = vmatpush1.bf16.msra.mxu0 0
        %1974 = vmatprep.subr.bf16.mxu0 0
        %1975 = vmatpush1.bf16.msra.mxu0 0
        %1976 = vmatprep.subr.bf16.mxu0 0
        %1977 = vmatpush1.bf16.msra.mxu0 0
        %1978 = vmatprep.subr.bf16.mxu0 0
        %1979 = vmatpush1.bf16.msra.mxu0 0
        %1980 = vmatprep.subr.bf16.mxu0 0
        %1981 = vmatpush1.bf16.msra.mxu0 %v1964
        %1982 = vmatprep.subr.bf16.mxu0 0
        %1983 = vmatpush2.bf16.msra.mxu0 0
        %1984 = vmatprep.subr.bf16.mxu0 0
        %1985 = vmatpush2.bf16.msra.mxu0 0
        %1986 = vmatprep.subr.bf16.mxu0 0
        %1987 = vmatpush2.bf16.msra.mxu0 0
        %1988 = vmatprep.subr.bf16.mxu0 0
        %1989 = vmatpush2.bf16.msra.mxu0 0
        %1990 = vmatprep.subr.bf16.mxu0 0
        %1991 = vmatpush2.bf16.msra.mxu0 0
        %1992 = vmatprep.subr.bf16.mxu0 0
        %1993 = vmatpush2.bf16.msra.mxu0 0
        %1994 = vmatprep.subr.bf16.mxu0 0
        %1995 = vmatpush2.bf16.msra.mxu0 0
        %1996 = vmatprep.subr.bf16.mxu0 0
        %1997 = vmatpush2.bf16.msra.mxu0 0
        %1998 = vmatprep.mubr.bf16.mxu0 0
        %1999 = vmatmul.mubr.bf16.gmra.mxu0 %v1961
        %v2000 = vpop.f32.mrf.mxu0
        %v2001 = vadd.f32 0.0, %v2000
        %v2002 = vpop.f32.mrf.mxu0
        %v2003 = vpop.f32.mrf.mxu0
        %v2004 = vpop.f32.mrf.mxu0
        %2005 = vdwg.mxu0
        %v2007 = vsel %vm888, %v1719, 0
        %v2010 = vsel %vm1732, %v1727, 0
        %2012 = vmatprep.subr.bf16.mxu0 0
        %2013 = vmatpush1.bf16.msra.mxu0 0
        %2014 = vmatprep.subr.bf16.mxu0 0
        %2015 = vmatpush1.bf16.msra.mxu0 0
        %2016 = vmatprep.subr.bf16.mxu0 0
        %2017 = vmatpush1.bf16.msra.mxu0 0
        %2018 = vmatprep.subr.bf16.mxu0 0
        %2019 = vmatpush1.bf16.msra.mxu0 0
        %2020 = vmatprep.subr.bf16.mxu0 0
        %2021 = vmatpush1.bf16.msra.mxu0 0
        %2022 = vmatprep.subr.bf16.mxu0 0
        %2023 = vmatpush1.bf16.msra.mxu0 0
        %2024 = vmatprep.subr.bf16.mxu0 0
        %2025 = vmatpush1.bf16.msra.mxu0 0
        %2026 = vmatprep.subr.bf16.mxu0 0
        %2027 = vmatpush1.bf16.msra.mxu0 %v2010
        %2028 = vmatprep.subr.bf16.mxu0 0
        %2029 = vmatpush2.bf16.msra.mxu0 0
        %2030 = vmatprep.subr.bf16.mxu0 0
        %2031 = vmatpush2.bf16.msra.mxu0 0
        %2032 = vmatprep.subr.bf16.mxu0 0
        %2033 = vmatpush2.bf16.msra.mxu0 0
        %2034 = vmatprep.subr.bf16.mxu0 0
        %2035 = vmatpush2.bf16.msra.mxu0 0
        %2036 = vmatprep.subr.bf16.mxu0 0
        %2037 = vmatpush2.bf16.msra.mxu0 0
        %2038 = vmatprep.subr.bf16.mxu0 0
        %2039 = vmatpush2.bf16.msra.mxu0 0
        %2040 = vmatprep.subr.bf16.mxu0 0
        %2041 = vmatpush2.bf16.msra.mxu0 0
        %2042 = vmatprep.subr.bf16.mxu0 0
        %2043 = vmatpush2.bf16.msra.mxu0 0
        %2044 = vmatprep.mubr.bf16.mxu0 0
        %2045 = vmatmul.mubr.bf16.gmra.mxu0 %v2007
        %v2046 = vpop.f32.mrf.mxu0
        %v2047 = vadd.f32 0.0, %v2046
        %v2048 = vpop.f32.mrf.mxu0
        %v2049 = vpop.f32.mrf.mxu0
        %v2050 = vpop.f32.mrf.mxu0
        %2051 = vdwg.mxu0
        %v2053 = vsel %vm888, %v1720, 0
        %v2056 = vsel %vm1732, %v1728, 0
        %2058 = vmatprep.subr.bf16.mxu0 0
        %2059 = vmatpush1.bf16.msra.mxu0 0
        %2060 = vmatprep.subr.bf16.mxu0 0
        %2061 = vmatpush1.bf16.msra.mxu0 0
        %2062 = vmatprep.subr.bf16.mxu0 0
        %2063 = vmatpush1.bf16.msra.mxu0 0
        %2064 = vmatprep.subr.bf16.mxu0 0
        %2065 = vmatpush1.bf16.msra.mxu0 0
        %2066 = vmatprep.subr.bf16.mxu0 0
        %2067 = vmatpush1.bf16.msra.mxu0 0
        %2068 = vmatprep.subr.bf16.mxu0 0
        %2069 = vmatpush1.bf16.msra.mxu0 0
        %2070 = vmatprep.subr.bf16.mxu0 0
        %2071 = vmatpush1.bf16.msra.mxu0 0
        %2072 = vmatprep.subr.bf16.mxu0 0
        %2073 = vmatpush1.bf16.msra.mxu0 %v2056
        %2074 = vmatprep.subr.bf16.mxu0 0
        %2075 = vmatpush2.bf16.msra.mxu0 0
        %2076 = vmatprep.subr.bf16.mxu0 0
        %2077 = vmatpush2.bf16.msra.mxu0 0
        %2078 = vmatprep.subr.bf16.mxu0 0
        %2079 = vmatpush2.bf16.msra.mxu0 0
        %2080 = vmatprep.subr.bf16.mxu0 0
        %2081 = vmatpush2.bf16.msra.mxu0 0
        %2082 = vmatprep.subr.bf16.mxu0 0
        %2083 = vmatpush2.bf16.msra.mxu0 0
        %2084 = vmatprep.subr.bf16.mxu0 0
        %2085 = vmatpush2.bf16.msra.mxu0 0
        %2086 = vmatprep.subr.bf16.mxu0 0
        %2087 = vmatpush2.bf16.msra.mxu0 0
        %2088 = vmatprep.subr.bf16.mxu0 0
        %2089 = vmatpush2.bf16.msra.mxu0 0
        %2090 = vmatprep.mubr.bf16.mxu0 0
        %2091 = vmatmul.mubr.bf16.gmra.mxu0 %v2053
        %v2092 = vpop.f32.mrf.mxu0
        %v2093 = vadd.f32 0.0, %v2092
        %v2094 = vpop.f32.mrf.mxu0
        %v2095 = vpop.f32.mrf.mxu0
        %v2096 = vpop.f32.mrf.mxu0
        %2097 = vdwg.mxu0
        %v2098 = vsel %vm472, %v1771, 0.0
        %v2099 = vsel %vm472, %v1817, 0.0
        %v2100 = vadd.f32 %v2098, %v2099
        %v2101 = vsel %vm472, %v1863, 0.0
        %v2102 = vadd.f32 %v2100, %v2101
        %v2103 = vsel %vm472, %v1909, 0.0
        %v2104 = vadd.f32 %v2102, %v2103
        %v2105 = vsel %vm472, %v1955, 0.0
        %v2106 = vadd.f32 %v2104, %v2105
        %v2107 = vsel %vm472, %v2001, 0.0
        %v2108 = vadd.f32 %v2106, %v2107
        %v2109 = vsel %vm472, %v2047, 0.0
        %v2110 = vadd.f32 %v2108, %v2109
        %v2111 = vsel %vm472, %v2093, 0.0
        %v2112 = vadd.f32 %v2110, %v2111
        %v2113 = vadd.f32 %v424, %v2112
        %v2114 = vsel %vm472, %v2113, 0.0
        %2115 = vadd.xlane.f32.xlu0 %v2114
        %v2116 = vpop.xlane.xlu0 %2115
        %v2117 = vrcp.pop 32.0
        %v2118 = vmul.f32 %v2116, %v2117
        %v2119 = vsub.f32 %v2113, %v2118
        %v2120 = vmul.f32 %v2119, %v2119
        %v2121 = vsel %vm472, %v2120, 0.0
        %2122 = vadd.xlane.f32.xlu0 %v2121
        %v2123 = vpop.xlane.xlu0 %2122
        %v2124 = vmul.f32 %v2123, %v2117
        %v2125 = vadd.f32 %v2124, 1e-05
        %v2126 = vrsqrt.pop %v2125
        %v2127 = vmul.f32 %v2119, %v2126
        %v2128 = vld [vmem:[%s8] sm:$0x1]
        %v2130 = vlaneseq
        %v2131 = vshrl.u32 %v2130, 7
        %v2132 = vsub.s32 0, %v2131
        %v2133 = vrot.slane %v2128, %v2132
        %v2135 = vmul.f32 %v2127, %v2133
        %v2136 = vld [vmem:[%s9] sm:$0x1]
        %v2138 = vlaneseq
        %v2139 = vshrl.u32 %v2138, 7
        %v2140 = vsub.s32 0, %v2139
        %v2141 = vrot.slane %v2136, %v2140
        %v2143 = vadd.f32 %v2135, %v2141
        %v2144 = vpack.c.bf16 %v2143, %v2143
        %v2145 = vld [vmem:[%s4] sm:$0xf]
        %v2146 = vld [vmem:[%s4 + $0x4] sm:$0xf]
        %v2147 = vld [vmem:[%s4 + $0x8] sm:$0xf]
        %v2148 = vld [vmem:[%s4 + $0xc] sm:$0xf]
        %v2149 = vld [vmem:[%s5] sm:$0x1]
        %v2151 = vlaneseq
        %v2152 = vshrl.u32 %v2151, 7
        %v2153 = vsub.s32 0, %v2152
        %v2154 = vrot.slane %v2149, %v2153
        %v2160 = vunpack.c.l.b16 %v2145
        %v2161 = vunpack.c.l.b16 %v2146
        %v2162 = vunpack.c.l.b16 %v2147
        %v2163 = vunpack.c.l.b16 %v2148
        %v2164 = vpack.c.b16 %v2161, %v2160
        %v2165 = vpack.c.b16 %v2163, %v2162
        %v2169 = vsel %vm472, %v2144, 0
        %2171 = vmatprep.subr.bf16.mxu0 0
        %2172 = vmatpush1.bf16.msra.mxu0 0
        %2173 = vmatprep.subr.bf16.mxu0 0
        %2174 = vmatpush1.bf16.msra.mxu0 0
        %2175 = vmatprep.subr.bf16.mxu0 0
        %2176 = vmatpush1.bf16.msra.mxu0 0
        %2177 = vmatprep.subr.bf16.mxu0 0
        %2178 = vmatpush1.bf16.msra.mxu0 0
        %2179 = vmatprep.subr.bf16.mxu0 0
        %2180 = vmatpush1.bf16.msra.mxu0 0
        %2181 = vmatprep.subr.bf16.mxu0 0
        %2182 = vmatpush1.bf16.msra.mxu0 0
        %2183 = vmatprep.subr.bf16.mxu0 0
        %2184 = vmatpush1.bf16.msra.mxu0 %v2165
        %2185 = vmatprep.subr.bf16.mxu0 0
        %2186 = vmatpush1.bf16.msra.mxu0 %v2164
        %2187 = vmatprep.subr.bf16.mxu0 0
        %2188 = vmatpush2.bf16.msra.mxu0 0
        %2189 = vmatprep.subr.bf16.mxu0 0
        %2190 = vmatpush2.bf16.msra.mxu0 0
        %2191 = vmatprep.subr.bf16.mxu0 0
        %2192 = vmatpush2.bf16.msra.mxu0 0
        %2193 = vmatprep.subr.bf16.mxu0 0
        %2194 = vmatpush2.bf16.msra.mxu0 0
        %2195 = vmatprep.subr.bf16.mxu0 0
        %2196 = vmatpush2.bf16.msra.mxu0 0
        %2197 = vmatprep.subr.bf16.mxu0 0
        %2198 = vmatpush2.bf16.msra.mxu0 0
        %2199 = vmatprep.subr.bf16.mxu0 0
        %2200 = vmatpush2.bf16.msra.mxu0 0
        %2201 = vmatprep.subr.bf16.mxu0 0
        %2202 = vmatpush2.bf16.msra.mxu0 0
        %2203 = vmatprep.mubr.bf16.mxu0 0
        %2204 = vmatmul.mubr.bf16.gmra.mxu0 %v2169
        %v2205 = vpop.f32.mrf.mxu0
        %v2206 = vadd.f32 %v2154, %v2205
        %v2207 = vpop.f32.mrf.mxu0
        %v2208 = vpop.f32.mrf.mxu0
        %v2209 = vpop.f32.mrf.mxu0
        %2210 = vdwg.mxu0
        %vm2211 = vcmp.ge.f32.partialorder %v2206, 0.0
        %v2212 = vmul.f32 %v2206, 0.1
        %v2213 = vsel %vm2211, %v2206, %v2212
        %v2214 = vpack.c.bf16 %v2213, %v2213
        %v2215 = vld [vmem:[%s6] sm:$0xf]
        %v2216 = vld [vmem:[%s6 + $0x4] sm:$0xf]
        %v2217 = vld [vmem:[%s6 + $0x8] sm:$0xf]
        %v2218 = vld [vmem:[%s6 + $0xc] sm:$0xf]
        %v2219 = vld [vmem:[%s7] sm:$0x1]
        %v2221 = vlaneseq
        %v2222 = vshrl.u32 %v2221, 7
        %v2223 = vsub.s32 0, %v2222
        %v2224 = vrot.slane %v2219, %v2223
        %v2230 = vunpack.c.l.b16 %v2215
        %v2231 = vunpack.c.l.b16 %v2216
        %v2232 = vunpack.c.l.b16 %v2217
        %v2233 = vunpack.c.l.b16 %v2218
        %v2234 = vpack.c.b16 %v2231, %v2230
        %v2235 = vpack.c.b16 %v2233, %v2232
        %v2239 = vsel %vm472, %v2214, 0
        %2241 = vmatprep.subr.bf16.mxu0 0
        %2242 = vmatpush1.bf16.msra.mxu0 0
        %2243 = vmatprep.subr.bf16.mxu0 0
        %2244 = vmatpush1.bf16.msra.mxu0 0
        %2245 = vmatprep.subr.bf16.mxu0 0
        %2246 = vmatpush1.bf16.msra.mxu0 0
        %2247 = vmatprep.subr.bf16.mxu0 0
        %2248 = vmatpush1.bf16.msra.mxu0 0
        %2249 = vmatprep.subr.bf16.mxu0 0
        %2250 = vmatpush1.bf16.msra.mxu0 0
        %2251 = vmatprep.subr.bf16.mxu0 0
        %2252 = vmatpush1.bf16.msra.mxu0 0
        %2253 = vmatprep.subr.bf16.mxu0 0
        %2254 = vmatpush1.bf16.msra.mxu0 %v2235
        %2255 = vmatprep.subr.bf16.mxu0 0
        %2256 = vmatpush1.bf16.msra.mxu0 %v2234
        %2257 = vmatprep.subr.bf16.mxu0 0
        %2258 = vmatpush2.bf16.msra.mxu0 0
        %2259 = vmatprep.subr.bf16.mxu0 0
        %2260 = vmatpush2.bf16.msra.mxu0 0
        %2261 = vmatprep.subr.bf16.mxu0 0
        %2262 = vmatpush2.bf16.msra.mxu0 0
        %2263 = vmatprep.subr.bf16.mxu0 0
        %2264 = vmatpush2.bf16.msra.mxu0 0
        %2265 = vmatprep.subr.bf16.mxu0 0
        %2266 = vmatpush2.bf16.msra.mxu0 0
        %2267 = vmatprep.subr.bf16.mxu0 0
        %2268 = vmatpush2.bf16.msra.mxu0 0
        %2269 = vmatprep.subr.bf16.mxu0 0
        %2270 = vmatpush2.bf16.msra.mxu0 0
        %2271 = vmatprep.subr.bf16.mxu0 0
        %2272 = vmatpush2.bf16.msra.mxu0 0
        %2273 = vmatprep.mubr.bf16.mxu0 0
        %2274 = vmatmul.mubr.bf16.gmra.mxu0 %v2239
        %v2275 = vpop.f32.mrf.mxu0
        %v2276 = vadd.f32 %v2224, %v2275
        %v2277 = vpop.f32.mrf.mxu0
        %v2278 = vpop.f32.mrf.mxu0
        %v2279 = vpop.f32.mrf.mxu0
        %2280 = vdwg.mxu0
        %v2281 = vadd.f32 %v2143, %v2276
        %v2282 = vsel %vm472, %v2281, 0.0
        %2283 = vadd.xlane.f32.xlu0 %v2282
        %v2284 = vpop.xlane.xlu0 %2283
        %v2285 = vmul.f32 %v2284, %v2117
        %v2286 = vsub.f32 %v2281, %v2285
        %v2287 = vmul.f32 %v2286, %v2286
        %v2288 = vsel %vm472, %v2287, 0.0
        %2289 = vadd.xlane.f32.xlu0 %v2288
        %v2290 = vpop.xlane.xlu0 %2289
        %v2291 = vmul.f32 %v2290, %v2117
        %v2292 = vadd.f32 %v2291, 1e-05
        %v2293 = vrsqrt.pop %v2292
        %v2294 = vmul.f32 %v2286, %v2293
        %v2295 = vld [vmem:[%s10] sm:$0x1]
        %v2297 = vlaneseq
        %v2298 = vshrl.u32 %v2297, 7
        %v2299 = vsub.s32 0, %v2298
        %v2300 = vrot.slane %v2295, %v2299
        %v2302 = vmul.f32 %v2294, %v2300
        %v2303 = vld [vmem:[%s11] sm:$0x1]
        %v2305 = vlaneseq
        %v2306 = vshrl.u32 %v2305, 7
        %v2307 = vsub.s32 0, %v2306
        %v2308 = vrot.slane %v2303, %v2307
        %v2310 = vadd.f32 %v2302, %v2308
        %v2311 = vpack.c.bf16 %v2310, %v2310
        %s2312 = scalar_lea.vmem %s2, 128
        %v2313 = vld [vmem:[%s2312] sm:$0xf]
        %v2314 = vld [vmem:[%s2312 + $0x4] sm:$0xf]
        %v2315 = vld [vmem:[%s2312 + $0x8] sm:$0xf]
        %v2316 = vld [vmem:[%s2312 + $0xc] sm:$0xf]
        %v2317 = vld [vmem:[%s2312 + $0x10] sm:$0xf]
        %v2318 = vld [vmem:[%s2312 + $0x14] sm:$0xf]
        %v2319 = vld [vmem:[%s2312 + $0x18] sm:$0xf]
        %v2320 = vld [vmem:[%s2312 + $0x1c] sm:$0xf]
        %v2321 = vld [vmem:[%s2312 + $0x20] sm:$0xf]
        %v2322 = vld [vmem:[%s2312 + $0x24] sm:$0xf]
        %v2323 = vld [vmem:[%s2312 + $0x28] sm:$0xf]
        %v2324 = vld [vmem:[%s2312 + $0x2c] sm:$0xf]
        %v2325 = vld [vmem:[%s2312 + $0x30] sm:$0xf]
        %v2326 = vld [vmem:[%s2312 + $0x34] sm:$0xf]
        %v2327 = vld [vmem:[%s2312 + $0x38] sm:$0xf]
        %v2328 = vld [vmem:[%s2312 + $0x3c] sm:$0xf]
        %v2329 = vld [vmem:[%s2312 + $0x40] sm:$0xf]
        %v2330 = vld [vmem:[%s2312 + $0x44] sm:$0xf]
        %v2331 = vld [vmem:[%s2312 + $0x48] sm:$0xf]
        %v2332 = vld [vmem:[%s2312 + $0x4c] sm:$0xf]
        %v2333 = vld [vmem:[%s2312 + $0x50] sm:$0xf]
        %v2334 = vld [vmem:[%s2312 + $0x54] sm:$0xf]
        %v2335 = vld [vmem:[%s2312 + $0x58] sm:$0xf]
        %v2336 = vld [vmem:[%s2312 + $0x5c] sm:$0xf]
        %v2337 = vld [vmem:[%s2312 + $0x60] sm:$0xf]
        %v2338 = vld [vmem:[%s2312 + $0x64] sm:$0xf]
        %v2339 = vld [vmem:[%s2312 + $0x68] sm:$0xf]
        %v2340 = vld [vmem:[%s2312 + $0x6c] sm:$0xf]
        %v2341 = vld [vmem:[%s2312 + $0x70] sm:$0xf]
        %v2342 = vld [vmem:[%s2312 + $0x74] sm:$0xf]
        %v2343 = vld [vmem:[%s2312 + $0x78] sm:$0xf]
        %v2344 = vld [vmem:[%s2312 + $0x7c] sm:$0xf]
        %v2349 = vunpack.c.l.b16 %v2313
        %v2350 = vunpack.c.l.b16 %v2314
        %v2351 = vunpack.c.l.b16 %v2315
        %v2352 = vunpack.c.l.b16 %v2316
        %v2353 = vpack.c.b16 %v2350, %v2349
        %v2354 = vpack.c.b16 %v2352, %v2351
        %v2358 = vsel %vm472, %v2311, 0
        %2360 = vmatprep.subr.bf16.mxu0 0
        %2361 = vmatpush1.bf16.msra.mxu0 0
        %2362 = vmatprep.subr.bf16.mxu0 0
        %2363 = vmatpush1.bf16.msra.mxu0 0
        %2364 = vmatprep.subr.bf16.mxu0 0
        %2365 = vmatpush1.bf16.msra.mxu0 0
        %2366 = vmatprep.subr.bf16.mxu0 0
        %2367 = vmatpush1.bf16.msra.mxu0 0
        %2368 = vmatprep.subr.bf16.mxu0 0
        %2369 = vmatpush1.bf16.msra.mxu0 0
        %2370 = vmatprep.subr.bf16.mxu0 0
        %2371 = vmatpush1.bf16.msra.mxu0 0
        %2372 = vmatprep.subr.bf16.mxu0 0
        %2373 = vmatpush1.bf16.msra.mxu0 %v2354
        %2374 = vmatprep.subr.bf16.mxu0 0
        %2375 = vmatpush1.bf16.msra.mxu0 %v2353
        %2376 = vmatprep.subr.bf16.mxu0 0
        %2377 = vmatpush2.bf16.msra.mxu0 0
        %2378 = vmatprep.subr.bf16.mxu0 0
        %2379 = vmatpush2.bf16.msra.mxu0 0
        %2380 = vmatprep.subr.bf16.mxu0 0
        %2381 = vmatpush2.bf16.msra.mxu0 0
        %2382 = vmatprep.subr.bf16.mxu0 0
        %2383 = vmatpush2.bf16.msra.mxu0 0
        %2384 = vmatprep.subr.bf16.mxu0 0
        %2385 = vmatpush2.bf16.msra.mxu0 0
        %2386 = vmatprep.subr.bf16.mxu0 0
        %2387 = vmatpush2.bf16.msra.mxu0 0
        %2388 = vmatprep.subr.bf16.mxu0 0
        %2389 = vmatpush2.bf16.msra.mxu0 0
        %2390 = vmatprep.subr.bf16.mxu0 0
        %2391 = vmatpush2.bf16.msra.mxu0 0
        %2392 = vmatprep.mubr.bf16.mxu0 0
        %2393 = vmatmul.mubr.bf16.gmra.mxu0 %v2358
        %v2394 = vpop.f32.mrf.mxu0
        %v2395 = vadd.f32 0.0, %v2394
        %v2396 = vpop.f32.mrf.mxu0
        %v2397 = vpop.f32.mrf.mxu0
        %v2398 = vpop.f32.mrf.mxu0
        %2399 = vdwg.mxu0
        %v2404 = vunpack.c.l.b16 %v2317
        %v2405 = vunpack.c.l.b16 %v2318
        %v2406 = vunpack.c.l.b16 %v2319
        %v2407 = vunpack.c.l.b16 %v2320
        %v2408 = vpack.c.b16 %v2405, %v2404
        %v2409 = vpack.c.b16 %v2407, %v2406
        %2412 = vmatprep.subr.bf16.mxu0 0
        %2413 = vmatpush1.bf16.msra.mxu0 0
        %2414 = vmatprep.subr.bf16.mxu0 0
        %2415 = vmatpush1.bf16.msra.mxu0 0
        %2416 = vmatprep.subr.bf16.mxu0 0
        %2417 = vmatpush1.bf16.msra.mxu0 0
        %2418 = vmatprep.subr.bf16.mxu0 0
        %2419 = vmatpush1.bf16.msra.mxu0 0
        %2420 = vmatprep.subr.bf16.mxu0 0
        %2421 = vmatpush1.bf16.msra.mxu0 0
        %2422 = vmatprep.subr.bf16.mxu0 0
        %2423 = vmatpush1.bf16.msra.mxu0 0
        %2424 = vmatprep.subr.bf16.mxu0 0
        %2425 = vmatpush1.bf16.msra.mxu0 %v2409
        %2426 = vmatprep.subr.bf16.mxu0 0
        %2427 = vmatpush1.bf16.msra.mxu0 %v2408
        %2428 = vmatprep.subr.bf16.mxu0 0
        %2429 = vmatpush2.bf16.msra.mxu0 0
        %2430 = vmatprep.subr.bf16.mxu0 0
        %2431 = vmatpush2.bf16.msra.mxu0 0
        %2432 = vmatprep.subr.bf16.mxu0 0
        %2433 = vmatpush2.bf16.msra.mxu0 0
        %2434 = vmatprep.subr.bf16.mxu0 0
        %2435 = vmatpush2.bf16.msra.mxu0 0
        %2436 = vmatprep.subr.bf16.mxu0 0
        %2437 = vmatpush2.bf16.msra.mxu0 0
        %2438 = vmatprep.subr.bf16.mxu0 0
        %2439 = vmatpush2.bf16.msra.mxu0 0
        %2440 = vmatprep.subr.bf16.mxu0 0
        %2441 = vmatpush2.bf16.msra.mxu0 0
        %2442 = vmatprep.subr.bf16.mxu0 0
        %2443 = vmatpush2.bf16.msra.mxu0 0
        %2444 = vmatprep.mubr.bf16.mxu0 0
        %2445 = vmatmul.mubr.bf16.gmra.mxu0 %v2358
        %v2446 = vpop.f32.mrf.mxu0
        %v2447 = vadd.f32 0.0, %v2446
        %v2448 = vpop.f32.mrf.mxu0
        %v2449 = vpop.f32.mrf.mxu0
        %v2450 = vpop.f32.mrf.mxu0
        %2451 = vdwg.mxu0
        %v2456 = vunpack.c.l.b16 %v2321
        %v2457 = vunpack.c.l.b16 %v2322
        %v2458 = vunpack.c.l.b16 %v2323
        %v2459 = vunpack.c.l.b16 %v2324
        %v2460 = vpack.c.b16 %v2457, %v2456
        %v2461 = vpack.c.b16 %v2459, %v2458
        %2464 = vmatprep.subr.bf16.mxu0 0
        %2465 = vmatpush1.bf16.msra.mxu0 0
        %2466 = vmatprep.subr.bf16.mxu0 0
        %2467 = vmatpush1.bf16.msra.mxu0 0
        %2468 = vmatprep.subr.bf16.mxu0 0
        %2469 = vmatpush1.bf16.msra.mxu0 0
        %2470 = vmatprep.subr.bf16.mxu0 0
        %2471 = vmatpush1.bf16.msra.mxu0 0
        %2472 = vmatprep.subr.bf16.mxu0 0
        %2473 = vmatpush1.bf16.msra.mxu0 0
        %2474 = vmatprep.subr.bf16.mxu0 0
        %2475 = vmatpush1.bf16.msra.mxu0 0
        %2476 = vmatprep.subr.bf16.mxu0 0
        %2477 = vmatpush1.bf16.msra.mxu0 %v2461
        %2478 = vmatprep.subr.bf16.mxu0 0
        %2479 = vmatpush1.bf16.msra.mxu0 %v2460
        %2480 = vmatprep.subr.bf16.mxu0 0
        %2481 = vmatpush2.bf16.msra.mxu0 0
        %2482 = vmatprep.subr.bf16.mxu0 0
        %2483 = vmatpush2.bf16.msra.mxu0 0
        %2484 = vmatprep.subr.bf16.mxu0 0
        %2485 = vmatpush2.bf16.msra.mxu0 0
        %2486 = vmatprep.subr.bf16.mxu0 0
        %2487 = vmatpush2.bf16.msra.mxu0 0
        %2488 = vmatprep.subr.bf16.mxu0 0
        %2489 = vmatpush2.bf16.msra.mxu0 0
        %2490 = vmatprep.subr.bf16.mxu0 0
        %2491 = vmatpush2.bf16.msra.mxu0 0
        %2492 = vmatprep.subr.bf16.mxu0 0
        %2493 = vmatpush2.bf16.msra.mxu0 0
        %2494 = vmatprep.subr.bf16.mxu0 0
        %2495 = vmatpush2.bf16.msra.mxu0 0
        %2496 = vmatprep.mubr.bf16.mxu0 0
        %2497 = vmatmul.mubr.bf16.gmra.mxu0 %v2358
        %v2498 = vpop.f32.mrf.mxu0
        %v2499 = vadd.f32 0.0, %v2498
        %v2500 = vpop.f32.mrf.mxu0
        %v2501 = vpop.f32.mrf.mxu0
        %v2502 = vpop.f32.mrf.mxu0
        %2503 = vdwg.mxu0
        %v2508 = vunpack.c.l.b16 %v2325
        %v2509 = vunpack.c.l.b16 %v2326
        %v2510 = vunpack.c.l.b16 %v2327
        %v2511 = vunpack.c.l.b16 %v2328
        %v2512 = vpack.c.b16 %v2509, %v2508
        %v2513 = vpack.c.b16 %v2511, %v2510
        %2516 = vmatprep.subr.bf16.mxu0 0
        %2517 = vmatpush1.bf16.msra.mxu0 0
        %2518 = vmatprep.subr.bf16.mxu0 0
        %2519 = vmatpush1.bf16.msra.mxu0 0
        %2520 = vmatprep.subr.bf16.mxu0 0
        %2521 = vmatpush1.bf16.msra.mxu0 0
        %2522 = vmatprep.subr.bf16.mxu0 0
        %2523 = vmatpush1.bf16.msra.mxu0 0
        %2524 = vmatprep.subr.bf16.mxu0 0
        %2525 = vmatpush1.bf16.msra.mxu0 0
        %2526 = vmatprep.subr.bf16.mxu0 0
        %2527 = vmatpush1.bf16.msra.mxu0 0
        %2528 = vmatprep.subr.bf16.mxu0 0
        %2529 = vmatpush1.bf16.msra.mxu0 %v2513
        %2530 = vmatprep.subr.bf16.mxu0 0
        %2531 = vmatpush1.bf16.msra.mxu0 %v2512
        %2532 = vmatprep.subr.bf16.mxu0 0
        %2533 = vmatpush2.bf16.msra.mxu0 0
        %2534 = vmatprep.subr.bf16.mxu0 0
        %2535 = vmatpush2.bf16.msra.mxu0 0
        %2536 = vmatprep.subr.bf16.mxu0 0
        %2537 = vmatpush2.bf16.msra.mxu0 0
        %2538 = vmatprep.subr.bf16.mxu0 0
        %2539 = vmatpush2.bf16.msra.mxu0 0
        %2540 = vmatprep.subr.bf16.mxu0 0
        %2541 = vmatpush2.bf16.msra.mxu0 0
        %2542 = vmatprep.subr.bf16.mxu0 0
        %2543 = vmatpush2.bf16.msra.mxu0 0
        %2544 = vmatprep.subr.bf16.mxu0 0
        %2545 = vmatpush2.bf16.msra.mxu0 0
        %2546 = vmatprep.subr.bf16.mxu0 0
        %2547 = vmatpush2.bf16.msra.mxu0 0
        %2548 = vmatprep.mubr.bf16.mxu0 0
        %2549 = vmatmul.mubr.bf16.gmra.mxu0 %v2358
        %v2550 = vpop.f32.mrf.mxu0
        %v2551 = vadd.f32 0.0, %v2550
        %v2552 = vpop.f32.mrf.mxu0
        %v2553 = vpop.f32.mrf.mxu0
        %v2554 = vpop.f32.mrf.mxu0
        %2555 = vdwg.mxu0
        %v2560 = vunpack.c.l.b16 %v2329
        %v2561 = vunpack.c.l.b16 %v2330
        %v2562 = vunpack.c.l.b16 %v2331
        %v2563 = vunpack.c.l.b16 %v2332
        %v2564 = vpack.c.b16 %v2561, %v2560
        %v2565 = vpack.c.b16 %v2563, %v2562
        %2568 = vmatprep.subr.bf16.mxu0 0
        %2569 = vmatpush1.bf16.msra.mxu0 0
        %2570 = vmatprep.subr.bf16.mxu0 0
        %2571 = vmatpush1.bf16.msra.mxu0 0
        %2572 = vmatprep.subr.bf16.mxu0 0
        %2573 = vmatpush1.bf16.msra.mxu0 0
        %2574 = vmatprep.subr.bf16.mxu0 0
        %2575 = vmatpush1.bf16.msra.mxu0 0
        %2576 = vmatprep.subr.bf16.mxu0 0
        %2577 = vmatpush1.bf16.msra.mxu0 0
        %2578 = vmatprep.subr.bf16.mxu0 0
        %2579 = vmatpush1.bf16.msra.mxu0 0
        %2580 = vmatprep.subr.bf16.mxu0 0
        %2581 = vmatpush1.bf16.msra.mxu0 %v2565
        %2582 = vmatprep.subr.bf16.mxu0 0
        %2583 = vmatpush1.bf16.msra.mxu0 %v2564
        %2584 = vmatprep.subr.bf16.mxu0 0
        %2585 = vmatpush2.bf16.msra.mxu0 0
        %2586 = vmatprep.subr.bf16.mxu0 0
        %2587 = vmatpush2.bf16.msra.mxu0 0
        %2588 = vmatprep.subr.bf16.mxu0 0
        %2589 = vmatpush2.bf16.msra.mxu0 0
        %2590 = vmatprep.subr.bf16.mxu0 0
        %2591 = vmatpush2.bf16.msra.mxu0 0
        %2592 = vmatprep.subr.bf16.mxu0 0
        %2593 = vmatpush2.bf16.msra.mxu0 0
        %2594 = vmatprep.subr.bf16.mxu0 0
        %2595 = vmatpush2.bf16.msra.mxu0 0
        %2596 = vmatprep.subr.bf16.mxu0 0
        %2597 = vmatpush2.bf16.msra.mxu0 0
        %2598 = vmatprep.subr.bf16.mxu0 0
        %2599 = vmatpush2.bf16.msra.mxu0 0
        %2600 = vmatprep.mubr.bf16.mxu0 0
        %2601 = vmatmul.mubr.bf16.gmra.mxu0 %v2358
        %v2602 = vpop.f32.mrf.mxu0
        %v2603 = vadd.f32 0.0, %v2602
        %v2604 = vpop.f32.mrf.mxu0
        %v2605 = vpop.f32.mrf.mxu0
        %v2606 = vpop.f32.mrf.mxu0
        %2607 = vdwg.mxu0
        %v2612 = vunpack.c.l.b16 %v2333
        %v2613 = vunpack.c.l.b16 %v2334
        %v2614 = vunpack.c.l.b16 %v2335
        %v2615 = vunpack.c.l.b16 %v2336
        %v2616 = vpack.c.b16 %v2613, %v2612
        %v2617 = vpack.c.b16 %v2615, %v2614
        %2620 = vmatprep.subr.bf16.mxu0 0
        %2621 = vmatpush1.bf16.msra.mxu0 0
        %2622 = vmatprep.subr.bf16.mxu0 0
        %2623 = vmatpush1.bf16.msra.mxu0 0
        %2624 = vmatprep.subr.bf16.mxu0 0
        %2625 = vmatpush1.bf16.msra.mxu0 0
        %2626 = vmatprep.subr.bf16.mxu0 0
        %2627 = vmatpush1.bf16.msra.mxu0 0
        %2628 = vmatprep.subr.bf16.mxu0 0
        %2629 = vmatpush1.bf16.msra.mxu0 0
        %2630 = vmatprep.subr.bf16.mxu0 0
        %2631 = vmatpush1.bf16.msra.mxu0 0
        %2632 = vmatprep.subr.bf16.mxu0 0
        %2633 = vmatpush1.bf16.msra.mxu0 %v2617
        %2634 = vmatprep.subr.bf16.mxu0 0
        %2635 = vmatpush1.bf16.msra.mxu0 %v2616
        %2636 = vmatprep.subr.bf16.mxu0 0
        %2637 = vmatpush2.bf16.msra.mxu0 0
        %2638 = vmatprep.subr.bf16.mxu0 0
        %2639 = vmatpush2.bf16.msra.mxu0 0
        %2640 = vmatprep.subr.bf16.mxu0 0
        %2641 = vmatpush2.bf16.msra.mxu0 0
        %2642 = vmatprep.subr.bf16.mxu0 0
        %2643 = vmatpush2.bf16.msra.mxu0 0
        %2644 = vmatprep.subr.bf16.mxu0 0
        %2645 = vmatpush2.bf16.msra.mxu0 0
        %2646 = vmatprep.subr.bf16.mxu0 0
        %2647 = vmatpush2.bf16.msra.mxu0 0
        %2648 = vmatprep.subr.bf16.mxu0 0
        %2649 = vmatpush2.bf16.msra.mxu0 0
        %2650 = vmatprep.subr.bf16.mxu0 0
        %2651 = vmatpush2.bf16.msra.mxu0 0
        %2652 = vmatprep.mubr.bf16.mxu0 0
        %2653 = vmatmul.mubr.bf16.gmra.mxu0 %v2358
        %v2654 = vpop.f32.mrf.mxu0
        %v2655 = vadd.f32 0.0, %v2654
        %v2656 = vpop.f32.mrf.mxu0
        %v2657 = vpop.f32.mrf.mxu0
        %v2658 = vpop.f32.mrf.mxu0
        %2659 = vdwg.mxu0
        %v2664 = vunpack.c.l.b16 %v2337
        %v2665 = vunpack.c.l.b16 %v2338
        %v2666 = vunpack.c.l.b16 %v2339
        %v2667 = vunpack.c.l.b16 %v2340
        %v2668 = vpack.c.b16 %v2665, %v2664
        %v2669 = vpack.c.b16 %v2667, %v2666
        %2672 = vmatprep.subr.bf16.mxu0 0
        %2673 = vmatpush1.bf16.msra.mxu0 0
        %2674 = vmatprep.subr.bf16.mxu0 0
        %2675 = vmatpush1.bf16.msra.mxu0 0
        %2676 = vmatprep.subr.bf16.mxu0 0
        %2677 = vmatpush1.bf16.msra.mxu0 0
        %2678 = vmatprep.subr.bf16.mxu0 0
        %2679 = vmatpush1.bf16.msra.mxu0 0
        %2680 = vmatprep.subr.bf16.mxu0 0
        %2681 = vmatpush1.bf16.msra.mxu0 0
        %2682 = vmatprep.subr.bf16.mxu0 0
        %2683 = vmatpush1.bf16.msra.mxu0 0
        %2684 = vmatprep.subr.bf16.mxu0 0
        %2685 = vmatpush1.bf16.msra.mxu0 %v2669
        %2686 = vmatprep.subr.bf16.mxu0 0
        %2687 = vmatpush1.bf16.msra.mxu0 %v2668
        %2688 = vmatprep.subr.bf16.mxu0 0
        %2689 = vmatpush2.bf16.msra.mxu0 0
        %2690 = vmatprep.subr.bf16.mxu0 0
        %2691 = vmatpush2.bf16.msra.mxu0 0
        %2692 = vmatprep.subr.bf16.mxu0 0
        %2693 = vmatpush2.bf16.msra.mxu0 0
        %2694 = vmatprep.subr.bf16.mxu0 0
        %2695 = vmatpush2.bf16.msra.mxu0 0
        %2696 = vmatprep.subr.bf16.mxu0 0
        %2697 = vmatpush2.bf16.msra.mxu0 0
        %2698 = vmatprep.subr.bf16.mxu0 0
        %2699 = vmatpush2.bf16.msra.mxu0 0
        %2700 = vmatprep.subr.bf16.mxu0 0
        %2701 = vmatpush2.bf16.msra.mxu0 0
        %2702 = vmatprep.subr.bf16.mxu0 0
        %2703 = vmatpush2.bf16.msra.mxu0 0
        %2704 = vmatprep.mubr.bf16.mxu0 0
        %2705 = vmatmul.mubr.bf16.gmra.mxu0 %v2358
        %v2706 = vpop.f32.mrf.mxu0
        %v2707 = vadd.f32 0.0, %v2706
        %v2708 = vpop.f32.mrf.mxu0
        %v2709 = vpop.f32.mrf.mxu0
        %v2710 = vpop.f32.mrf.mxu0
        %2711 = vdwg.mxu0
        %v2716 = vunpack.c.l.b16 %v2341
        %v2717 = vunpack.c.l.b16 %v2342
        %v2718 = vunpack.c.l.b16 %v2343
        %v2719 = vunpack.c.l.b16 %v2344
        %v2720 = vpack.c.b16 %v2717, %v2716
        %v2721 = vpack.c.b16 %v2719, %v2718
        %2724 = vmatprep.subr.bf16.mxu0 0
        %2725 = vmatpush1.bf16.msra.mxu0 0
        %2726 = vmatprep.subr.bf16.mxu0 0
        %2727 = vmatpush1.bf16.msra.mxu0 0
        %2728 = vmatprep.subr.bf16.mxu0 0
        %2729 = vmatpush1.bf16.msra.mxu0 0
        %2730 = vmatprep.subr.bf16.mxu0 0
        %2731 = vmatpush1.bf16.msra.mxu0 0
        %2732 = vmatprep.subr.bf16.mxu0 0
        %2733 = vmatpush1.bf16.msra.mxu0 0
        %2734 = vmatprep.subr.bf16.mxu0 0
        %2735 = vmatpush1.bf16.msra.mxu0 0
        %2736 = vmatprep.subr.bf16.mxu0 0
        %2737 = vmatpush1.bf16.msra.mxu0 %v2721
        %2738 = vmatprep.subr.bf16.mxu0 0
        %2739 = vmatpush1.bf16.msra.mxu0 %v2720
        %2740 = vmatprep.subr.bf16.mxu0 0
        %2741 = vmatpush2.bf16.msra.mxu0 0
        %2742 = vmatprep.subr.bf16.mxu0 0
        %2743 = vmatpush2.bf16.msra.mxu0 0
        %2744 = vmatprep.subr.bf16.mxu0 0
        %2745 = vmatpush2.bf16.msra.mxu0 0
        %2746 = vmatprep.subr.bf16.mxu0 0
        %2747 = vmatpush2.bf16.msra.mxu0 0
        %2748 = vmatprep.subr.bf16.mxu0 0
        %2749 = vmatpush2.bf16.msra.mxu0 0
        %2750 = vmatprep.subr.bf16.mxu0 0
        %2751 = vmatpush2.bf16.msra.mxu0 0
        %2752 = vmatprep.subr.bf16.mxu0 0
        %2753 = vmatpush2.bf16.msra.mxu0 0
        %2754 = vmatprep.subr.bf16.mxu0 0
        %2755 = vmatpush2.bf16.msra.mxu0 0
        %2756 = vmatprep.mubr.bf16.mxu0 0
        %2757 = vmatmul.mubr.bf16.gmra.mxu0 %v2358
        %v2758 = vpop.f32.mrf.mxu0
        %v2759 = vadd.f32 0.0, %v2758
        %v2760 = vpop.f32.mrf.mxu0
        %v2761 = vpop.f32.mrf.mxu0
        %v2762 = vpop.f32.mrf.mxu0
        %2763 = vdwg.mxu0
        %v2764 = vpack.c.bf16 %v2395, %v2395
        %v2765 = vpack.c.bf16 %v2447, %v2447
        %v2766 = vpack.c.bf16 %v2499, %v2499
        %v2767 = vpack.c.bf16 %v2551, %v2551
        %v2768 = vpack.c.bf16 %v2603, %v2603
        %v2769 = vpack.c.bf16 %v2655, %v2655
        %v2770 = vpack.c.bf16 %v2707, %v2707
        %v2771 = vpack.c.bf16 %v2759, %v2759
        %v2773 = vsel %vm888, %v2764, 0
        %2775 = vmatprep.subr.bf16.mxu0 0
        %2776 = vmatpush1.bf16.xpose.msra.mxu0 0
        %2777 = vmatprep.subr.bf16.mxu0 0
        %2778 = vmatpush1.bf16.xpose.msra.mxu0 0
        %2779 = vmatprep.subr.bf16.mxu0 0
        %2780 = vmatpush1.bf16.xpose.msra.mxu0 0
        %2781 = vmatprep.subr.bf16.mxu0 0
        %2782 = vmatpush1.bf16.xpose.msra.mxu0 0
        %2783 = vmatprep.subr.bf16.mxu0 0
        %2784 = vmatpush1.bf16.xpose.msra.mxu0 0
        %2785 = vmatprep.subr.bf16.mxu0 0
        %2786 = vmatpush1.bf16.xpose.msra.mxu0 0
        %2787 = vmatprep.subr.bf16.mxu0 0
        %2788 = vmatpush1.bf16.xpose.msra.mxu0 0
        %2789 = vmatprep.subr.bf16.mxu0 0
        %2790 = vmatpush1.bf16.xpose.msra.mxu0 %v2773
        %2791 = vmatprep.subr.bf16.mxu0 0
        %2792 = vmatpush2.bf16.xpose.msra.mxu0 0
        %2793 = vmatprep.subr.bf16.mxu0 0
        %2794 = vmatpush2.bf16.xpose.msra.mxu0 0
        %2795 = vmatprep.subr.bf16.mxu0 0
        %2796 = vmatpush2.bf16.xpose.msra.mxu0 0
        %2797 = vmatprep.subr.bf16.mxu0 0
        %2798 = vmatpush2.bf16.xpose.msra.mxu0 0
        %2799 = vmatprep.subr.bf16.mxu0 0
        %2800 = vmatpush2.bf16.xpose.msra.mxu0 0
        %2801 = vmatprep.subr.bf16.mxu0 0
        %2802 = vmatpush2.bf16.xpose.msra.mxu0 0
        %2803 = vmatprep.subr.bf16.mxu0 0
        %2804 = vmatpush2.bf16.xpose.msra.mxu0 0
        %2805 = vmatprep.subr.bf16.mxu0 0
        %2806 = vmatpush2.bf16.xpose.msra.mxu0 0
        %2807 = vmatprep.mubr.bf16.mxu0 0
        %2808 = vmatmul.mubr.bf16.gmra.mxu0 %v2773
        %v2809 = vpop.f32.mrf.mxu0
        %v2810 = vadd.f32 0.0, %v2809
        %v2811 = vpop.f32.mrf.mxu0
        %v2812 = vpop.f32.mrf.mxu0
        %v2813 = vpop.f32.mrf.mxu0
        %2814 = vdwg.mxu0
        %v2816 = vsel %vm888, %v2765, 0
        %2818 = vmatprep.subr.bf16.mxu0 0
        %2819 = vmatpush1.bf16.xpose.msra.mxu0 0
        %2820 = vmatprep.subr.bf16.mxu0 0
        %2821 = vmatpush1.bf16.xpose.msra.mxu0 0
        %2822 = vmatprep.subr.bf16.mxu0 0
        %2823 = vmatpush1.bf16.xpose.msra.mxu0 0
        %2824 = vmatprep.subr.bf16.mxu0 0
        %2825 = vmatpush1.bf16.xpose.msra.mxu0 0
        %2826 = vmatprep.subr.bf16.mxu0 0
        %2827 = vmatpush1.bf16.xpose.msra.mxu0 0
        %2828 = vmatprep.subr.bf16.mxu0 0
        %2829 = vmatpush1.bf16.xpose.msra.mxu0 0
        %2830 = vmatprep.subr.bf16.mxu0 0
        %2831 = vmatpush1.bf16.xpose.msra.mxu0 0
        %2832 = vmatprep.subr.bf16.mxu0 0
        %2833 = vmatpush1.bf16.xpose.msra.mxu0 %v2816
        %2834 = vmatprep.subr.bf16.mxu0 0
        %2835 = vmatpush2.bf16.xpose.msra.mxu0 0
        %2836 = vmatprep.subr.bf16.mxu0 0
        %2837 = vmatpush2.bf16.xpose.msra.mxu0 0
        %2838 = vmatprep.subr.bf16.mxu0 0
        %2839 = vmatpush2.bf16.xpose.msra.mxu0 0
        %2840 = vmatprep.subr.bf16.mxu0 0
        %2841 = vmatpush2.bf16.xpose.msra.mxu0 0
        %2842 = vmatprep.subr.bf16.mxu0 0
        %2843 = vmatpush2.bf16.xpose.msra.mxu0 0
        %2844 = vmatprep.subr.bf16.mxu0 0
        %2845 = vmatpush2.bf16.xpose.msra.mxu0 0
        %2846 = vmatprep.subr.bf16.mxu0 0
        %2847 = vmatpush2.bf16.xpose.msra.mxu0 0
        %2848 = vmatprep.subr.bf16.mxu0 0
        %2849 = vmatpush2.bf16.xpose.msra.mxu0 0
        %2850 = vmatprep.mubr.bf16.mxu0 0
        %2851 = vmatmul.mubr.bf16.gmra.mxu0 %v2816
        %v2852 = vpop.f32.mrf.mxu0
        %v2853 = vadd.f32 0.0, %v2852
        %v2854 = vpop.f32.mrf.mxu0
        %v2855 = vpop.f32.mrf.mxu0
        %v2856 = vpop.f32.mrf.mxu0
        %2857 = vdwg.mxu0
        %v2859 = vsel %vm888, %v2766, 0
        %2861 = vmatprep.subr.bf16.mxu0 0
        %2862 = vmatpush1.bf16.xpose.msra.mxu0 0
        %2863 = vmatprep.subr.bf16.mxu0 0
        %2864 = vmatpush1.bf16.xpose.msra.mxu0 0
        %2865 = vmatprep.subr.bf16.mxu0 0
        %2866 = vmatpush1.bf16.xpose.msra.mxu0 0
        %2867 = vmatprep.subr.bf16.mxu0 0
        %2868 = vmatpush1.bf16.xpose.msra.mxu0 0
        %2869 = vmatprep.subr.bf16.mxu0 0
        %2870 = vmatpush1.bf16.xpose.msra.mxu0 0
        %2871 = vmatprep.subr.bf16.mxu0 0
        %2872 = vmatpush1.bf16.xpose.msra.mxu0 0
        %2873 = vmatprep.subr.bf16.mxu0 0
        %2874 = vmatpush1.bf16.xpose.msra.mxu0 0
        %2875 = vmatprep.subr.bf16.mxu0 0
        %2876 = vmatpush1.bf16.xpose.msra.mxu0 %v2859
        %2877 = vmatprep.subr.bf16.mxu0 0
        %2878 = vmatpush2.bf16.xpose.msra.mxu0 0
        %2879 = vmatprep.subr.bf16.mxu0 0
        %2880 = vmatpush2.bf16.xpose.msra.mxu0 0
        %2881 = vmatprep.subr.bf16.mxu0 0
        %2882 = vmatpush2.bf16.xpose.msra.mxu0 0
        %2883 = vmatprep.subr.bf16.mxu0 0
        %2884 = vmatpush2.bf16.xpose.msra.mxu0 0
        %2885 = vmatprep.subr.bf16.mxu0 0
        %2886 = vmatpush2.bf16.xpose.msra.mxu0 0
        %2887 = vmatprep.subr.bf16.mxu0 0
        %2888 = vmatpush2.bf16.xpose.msra.mxu0 0
        %2889 = vmatprep.subr.bf16.mxu0 0
        %2890 = vmatpush2.bf16.xpose.msra.mxu0 0
        %2891 = vmatprep.subr.bf16.mxu0 0
        %2892 = vmatpush2.bf16.xpose.msra.mxu0 0
        %2893 = vmatprep.mubr.bf16.mxu0 0
        %2894 = vmatmul.mubr.bf16.gmra.mxu0 %v2859
        %v2895 = vpop.f32.mrf.mxu0
        %v2896 = vadd.f32 0.0, %v2895
        %v2897 = vpop.f32.mrf.mxu0
        %v2898 = vpop.f32.mrf.mxu0
        %v2899 = vpop.f32.mrf.mxu0
        %2900 = vdwg.mxu0
        %v2902 = vsel %vm888, %v2767, 0
        %2904 = vmatprep.subr.bf16.mxu0 0
        %2905 = vmatpush1.bf16.xpose.msra.mxu0 0
        %2906 = vmatprep.subr.bf16.mxu0 0
        %2907 = vmatpush1.bf16.xpose.msra.mxu0 0
        %2908 = vmatprep.subr.bf16.mxu0 0
        %2909 = vmatpush1.bf16.xpose.msra.mxu0 0
        %2910 = vmatprep.subr.bf16.mxu0 0
        %2911 = vmatpush1.bf16.xpose.msra.mxu0 0
        %2912 = vmatprep.subr.bf16.mxu0 0
        %2913 = vmatpush1.bf16.xpose.msra.mxu0 0
        %2914 = vmatprep.subr.bf16.mxu0 0
        %2915 = vmatpush1.bf16.xpose.msra.mxu0 0
        %2916 = vmatprep.subr.bf16.mxu0 0
        %2917 = vmatpush1.bf16.xpose.msra.mxu0 0
        %2918 = vmatprep.subr.bf16.mxu0 0
        %2919 = vmatpush1.bf16.xpose.msra.mxu0 %v2902
        %2920 = vmatprep.subr.bf16.mxu0 0
        %2921 = vmatpush2.bf16.xpose.msra.mxu0 0
        %2922 = vmatprep.subr.bf16.mxu0 0
        %2923 = vmatpush2.bf16.xpose.msra.mxu0 0
        %2924 = vmatprep.subr.bf16.mxu0 0
        %2925 = vmatpush2.bf16.xpose.msra.mxu0 0
        %2926 = vmatprep.subr.bf16.mxu0 0
        %2927 = vmatpush2.bf16.xpose.msra.mxu0 0
        %2928 = vmatprep.subr.bf16.mxu0 0
        %2929 = vmatpush2.bf16.xpose.msra.mxu0 0
        %2930 = vmatprep.subr.bf16.mxu0 0
        %2931 = vmatpush2.bf16.xpose.msra.mxu0 0
        %2932 = vmatprep.subr.bf16.mxu0 0
        %2933 = vmatpush2.bf16.xpose.msra.mxu0 0
        %2934 = vmatprep.subr.bf16.mxu0 0
        %2935 = vmatpush2.bf16.xpose.msra.mxu0 0
        %2936 = vmatprep.mubr.bf16.mxu0 0
        %2937 = vmatmul.mubr.bf16.gmra.mxu0 %v2902
        %v2938 = vpop.f32.mrf.mxu0
        %v2939 = vadd.f32 0.0, %v2938
        %v2940 = vpop.f32.mrf.mxu0
        %v2941 = vpop.f32.mrf.mxu0
        %v2942 = vpop.f32.mrf.mxu0
        %2943 = vdwg.mxu0
        %v2945 = vsel %vm888, %v2768, 0
        %2947 = vmatprep.subr.bf16.mxu0 0
        %2948 = vmatpush1.bf16.xpose.msra.mxu0 0
        %2949 = vmatprep.subr.bf16.mxu0 0
        %2950 = vmatpush1.bf16.xpose.msra.mxu0 0
        %2951 = vmatprep.subr.bf16.mxu0 0
        %2952 = vmatpush1.bf16.xpose.msra.mxu0 0
        %2953 = vmatprep.subr.bf16.mxu0 0
        %2954 = vmatpush1.bf16.xpose.msra.mxu0 0
        %2955 = vmatprep.subr.bf16.mxu0 0
        %2956 = vmatpush1.bf16.xpose.msra.mxu0 0
        %2957 = vmatprep.subr.bf16.mxu0 0
        %2958 = vmatpush1.bf16.xpose.msra.mxu0 0
        %2959 = vmatprep.subr.bf16.mxu0 0
        %2960 = vmatpush1.bf16.xpose.msra.mxu0 0
        %2961 = vmatprep.subr.bf16.mxu0 0
        %2962 = vmatpush1.bf16.xpose.msra.mxu0 %v2945
        %2963 = vmatprep.subr.bf16.mxu0 0
        %2964 = vmatpush2.bf16.xpose.msra.mxu0 0
        %2965 = vmatprep.subr.bf16.mxu0 0
        %2966 = vmatpush2.bf16.xpose.msra.mxu0 0
        %2967 = vmatprep.subr.bf16.mxu0 0
        %2968 = vmatpush2.bf16.xpose.msra.mxu0 0
        %2969 = vmatprep.subr.bf16.mxu0 0
        %2970 = vmatpush2.bf16.xpose.msra.mxu0 0
        %2971 = vmatprep.subr.bf16.mxu0 0
        %2972 = vmatpush2.bf16.xpose.msra.mxu0 0
        %2973 = vmatprep.subr.bf16.mxu0 0
        %2974 = vmatpush2.bf16.xpose.msra.mxu0 0
        %2975 = vmatprep.subr.bf16.mxu0 0
        %2976 = vmatpush2.bf16.xpose.msra.mxu0 0
        %2977 = vmatprep.subr.bf16.mxu0 0
        %2978 = vmatpush2.bf16.xpose.msra.mxu0 0
        %2979 = vmatprep.mubr.bf16.mxu0 0
        %2980 = vmatmul.mubr.bf16.gmra.mxu0 %v2945
        %v2981 = vpop.f32.mrf.mxu0
        %v2982 = vadd.f32 0.0, %v2981
        %v2983 = vpop.f32.mrf.mxu0
        %v2984 = vpop.f32.mrf.mxu0
        %v2985 = vpop.f32.mrf.mxu0
        %2986 = vdwg.mxu0
        %v2988 = vsel %vm888, %v2769, 0
        %2990 = vmatprep.subr.bf16.mxu0 0
        %2991 = vmatpush1.bf16.xpose.msra.mxu0 0
        %2992 = vmatprep.subr.bf16.mxu0 0
        %2993 = vmatpush1.bf16.xpose.msra.mxu0 0
        %2994 = vmatprep.subr.bf16.mxu0 0
        %2995 = vmatpush1.bf16.xpose.msra.mxu0 0
        %2996 = vmatprep.subr.bf16.mxu0 0
        %2997 = vmatpush1.bf16.xpose.msra.mxu0 0
        %2998 = vmatprep.subr.bf16.mxu0 0
        %2999 = vmatpush1.bf16.xpose.msra.mxu0 0
        %3000 = vmatprep.subr.bf16.mxu0 0
        %3001 = vmatpush1.bf16.xpose.msra.mxu0 0
        %3002 = vmatprep.subr.bf16.mxu0 0
        %3003 = vmatpush1.bf16.xpose.msra.mxu0 0
        %3004 = vmatprep.subr.bf16.mxu0 0
        %3005 = vmatpush1.bf16.xpose.msra.mxu0 %v2988
        %3006 = vmatprep.subr.bf16.mxu0 0
        %3007 = vmatpush2.bf16.xpose.msra.mxu0 0
        %3008 = vmatprep.subr.bf16.mxu0 0
        %3009 = vmatpush2.bf16.xpose.msra.mxu0 0
        %3010 = vmatprep.subr.bf16.mxu0 0
        %3011 = vmatpush2.bf16.xpose.msra.mxu0 0
        %3012 = vmatprep.subr.bf16.mxu0 0
        %3013 = vmatpush2.bf16.xpose.msra.mxu0 0
        %3014 = vmatprep.subr.bf16.mxu0 0
        %3015 = vmatpush2.bf16.xpose.msra.mxu0 0
        %3016 = vmatprep.subr.bf16.mxu0 0
        %3017 = vmatpush2.bf16.xpose.msra.mxu0 0
        %3018 = vmatprep.subr.bf16.mxu0 0
        %3019 = vmatpush2.bf16.xpose.msra.mxu0 0
        %3020 = vmatprep.subr.bf16.mxu0 0
        %3021 = vmatpush2.bf16.xpose.msra.mxu0 0
        %3022 = vmatprep.mubr.bf16.mxu0 0
        %3023 = vmatmul.mubr.bf16.gmra.mxu0 %v2988
        %v3024 = vpop.f32.mrf.mxu0
        %v3025 = vadd.f32 0.0, %v3024
        %v3026 = vpop.f32.mrf.mxu0
        %v3027 = vpop.f32.mrf.mxu0
        %v3028 = vpop.f32.mrf.mxu0
        %3029 = vdwg.mxu0
        %v3031 = vsel %vm888, %v2770, 0
        %3033 = vmatprep.subr.bf16.mxu0 0
        %3034 = vmatpush1.bf16.xpose.msra.mxu0 0
        %3035 = vmatprep.subr.bf16.mxu0 0
        %3036 = vmatpush1.bf16.xpose.msra.mxu0 0
        %3037 = vmatprep.subr.bf16.mxu0 0
        %3038 = vmatpush1.bf16.xpose.msra.mxu0 0
        %3039 = vmatprep.subr.bf16.mxu0 0
        %3040 = vmatpush1.bf16.xpose.msra.mxu0 0
        %3041 = vmatprep.subr.bf16.mxu0 0
        %3042 = vmatpush1.bf16.xpose.msra.mxu0 0
        %3043 = vmatprep.subr.bf16.mxu0 0
        %3044 = vmatpush1.bf16.xpose.msra.mxu0 0
        %3045 = vmatprep.subr.bf16.mxu0 0
        %3046 = vmatpush1.bf16.xpose.msra.mxu0 0
        %3047 = vmatprep.subr.bf16.mxu0 0
        %3048 = vmatpush1.bf16.xpose.msra.mxu0 %v3031
        %3049 = vmatprep.subr.bf16.mxu0 0
        %3050 = vmatpush2.bf16.xpose.msra.mxu0 0
        %3051 = vmatprep.subr.bf16.mxu0 0
        %3052 = vmatpush2.bf16.xpose.msra.mxu0 0
        %3053 = vmatprep.subr.bf16.mxu0 0
        %3054 = vmatpush2.bf16.xpose.msra.mxu0 0
        %3055 = vmatprep.subr.bf16.mxu0 0
        %3056 = vmatpush2.bf16.xpose.msra.mxu0 0
        %3057 = vmatprep.subr.bf16.mxu0 0
        %3058 = vmatpush2.bf16.xpose.msra.mxu0 0
        %3059 = vmatprep.subr.bf16.mxu0 0
        %3060 = vmatpush2.bf16.xpose.msra.mxu0 0
        %3061 = vmatprep.subr.bf16.mxu0 0
        %3062 = vmatpush2.bf16.xpose.msra.mxu0 0
        %3063 = vmatprep.subr.bf16.mxu0 0
        %3064 = vmatpush2.bf16.xpose.msra.mxu0 0
        %3065 = vmatprep.mubr.bf16.mxu0 0
        %3066 = vmatmul.mubr.bf16.gmra.mxu0 %v3031
        %v3067 = vpop.f32.mrf.mxu0
        %v3068 = vadd.f32 0.0, %v3067
        %v3069 = vpop.f32.mrf.mxu0
        %v3070 = vpop.f32.mrf.mxu0
        %v3071 = vpop.f32.mrf.mxu0
        %3072 = vdwg.mxu0
        %v3074 = vsel %vm888, %v2771, 0
        %3076 = vmatprep.subr.bf16.mxu0 0
        %3077 = vmatpush1.bf16.xpose.msra.mxu0 0
        %3078 = vmatprep.subr.bf16.mxu0 0
        %3079 = vmatpush1.bf16.xpose.msra.mxu0 0
        %3080 = vmatprep.subr.bf16.mxu0 0
        %3081 = vmatpush1.bf16.xpose.msra.mxu0 0
        %3082 = vmatprep.subr.bf16.mxu0 0
        %3083 = vmatpush1.bf16.xpose.msra.mxu0 0
        %3084 = vmatprep.subr.bf16.mxu0 0
        %3085 = vmatpush1.bf16.xpose.msra.mxu0 0
        %3086 = vmatprep.subr.bf16.mxu0 0
        %3087 = vmatpush1.bf16.xpose.msra.mxu0 0
        %3088 = vmatprep.subr.bf16.mxu0 0
        %3089 = vmatpush1.bf16.xpose.msra.mxu0 0
        %3090 = vmatprep.subr.bf16.mxu0 0
        %3091 = vmatpush1.bf16.xpose.msra.mxu0 %v3074
        %3092 = vmatprep.subr.bf16.mxu0 0
        %3093 = vmatpush2.bf16.xpose.msra.mxu0 0
        %3094 = vmatprep.subr.bf16.mxu0 0
        %3095 = vmatpush2.bf16.xpose.msra.mxu0 0
        %3096 = vmatprep.subr.bf16.mxu0 0
        %3097 = vmatpush2.bf16.xpose.msra.mxu0 0
        %3098 = vmatprep.subr.bf16.mxu0 0
        %3099 = vmatpush2.bf16.xpose.msra.mxu0 0
        %3100 = vmatprep.subr.bf16.mxu0 0
        %3101 = vmatpush2.bf16.xpose.msra.mxu0 0
        %3102 = vmatprep.subr.bf16.mxu0 0
        %3103 = vmatpush2.bf16.xpose.msra.mxu0 0
        %3104 = vmatprep.subr.bf16.mxu0 0
        %3105 = vmatpush2.bf16.xpose.msra.mxu0 0
        %3106 = vmatprep.subr.bf16.mxu0 0
        %3107 = vmatpush2.bf16.xpose.msra.mxu0 0
        %3108 = vmatprep.mubr.bf16.mxu0 0
        %3109 = vmatmul.mubr.bf16.gmra.mxu0 %v3074
        %v3110 = vpop.f32.mrf.mxu0
        %v3111 = vadd.f32 0.0, %v3110
        %v3112 = vpop.f32.mrf.mxu0
        %v3113 = vpop.f32.mrf.mxu0
        %v3114 = vpop.f32.mrf.mxu0
        %3115 = vdwg.mxu0
        %v3116 = vmul.f32 %v2810, 0.5
        %v3117 = vmul.f32 %v2853, 0.5
        %v3118 = vmul.f32 %v2896, 0.5
        %v3119 = vmul.f32 %v2939, 0.5
        %v3120 = vmul.f32 %v2982, 0.5
        %v3121 = vmul.f32 %v3025, 0.5
        %v3122 = vmul.f32 %v3068, 0.5
        %v3123 = vmul.f32 %v3111, 0.5
        %v3124 = vadd.f32 %v3116, %v1245
        %v3125 = vadd.f32 %v3117, %v1245
        %v3126 = vadd.f32 %v3118, %v1245
        %v3127 = vadd.f32 %v3119, %v1245
        %v3128 = vadd.f32 %v3120, %v1245
        %v3129 = vadd.f32 %v3121, %v1245
        %v3130 = vadd.f32 %v3122, %v1245
        %v3131 = vadd.f32 %v3123, %v1245
        %v3132 = vsel %vm1255, %v3124, -inf
        %3133 = vmax.xlane.f32.xlu0 %v3132
        %v3134 = vpop.xlane.xlu0 %3133
        %v3135 = vsel %vm1255, %v3125, -inf
        %3136 = vmax.xlane.f32.xlu0 %v3135
        %v3137 = vpop.xlane.xlu0 %3136
        %v3138 = vsel %vm1255, %v3126, -inf
        %3139 = vmax.xlane.f32.xlu0 %v3138
        %v3140 = vpop.xlane.xlu0 %3139
        %v3141 = vsel %vm1255, %v3127, -inf
        %3142 = vmax.xlane.f32.xlu0 %v3141
        %v3143 = vpop.xlane.xlu0 %3142
        %v3144 = vsel %vm1255, %v3128, -inf
        %3145 = vmax.xlane.f32.xlu0 %v3144
        %v3146 = vpop.xlane.xlu0 %3145
        %v3147 = vsel %vm1255, %v3129, -inf
        %3148 = vmax.xlane.f32.xlu0 %v3147
        %v3149 = vpop.xlane.xlu0 %3148
        %v3150 = vsel %vm1255, %v3130, -inf
        %3151 = vmax.xlane.f32.xlu0 %v3150
        %v3152 = vpop.xlane.xlu0 %3151
        %v3153 = vsel %vm1255, %v3131, -inf
        %3154 = vmax.xlane.f32.xlu0 %v3153
        %v3155 = vpop.xlane.xlu0 %3154
        %v3156 = vsub.f32 %v3124, %v3134
        %v3157 = vsub.f32 %v3125, %v3137
        %v3158 = vsub.f32 %v3126, %v3140
        %v3159 = vsub.f32 %v3127, %v3143
        %v3160 = vsub.f32 %v3128, %v3146
        %v3161 = vsub.f32 %v3129, %v3149
        %v3162 = vsub.f32 %v3130, %v3152
        %v3163 = vsub.f32 %v3131, %v3155
        %v3164 = vmul.f32 %v3156, 1.442695
        %v3165 = vpow.pop %v3164
        %v3166 = vmul.f32 %v3157, 1.442695
        %v3167 = vpow.pop %v3166
        %v3168 = vmul.f32 %v3158, 1.442695
        %v3169 = vpow.pop %v3168
        %v3170 = vmul.f32 %v3159, 1.442695
        %v3171 = vpow.pop %v3170
        %v3172 = vmul.f32 %v3160, 1.442695
        %v3173 = vpow.pop %v3172
        %v3174 = vmul.f32 %v3161, 1.442695
        %v3175 = vpow.pop %v3174
        %v3176 = vmul.f32 %v3162, 1.442695
        %v3177 = vpow.pop %v3176
        %v3178 = vmul.f32 %v3163, 1.442695
        %v3179 = vpow.pop %v3178
        %v3180 = vsel %vm1255, %v3165, 0.0
        %3181 = vadd.xlane.f32.xlu0 %v3180
        %v3182 = vpop.xlane.xlu0 %3181
        %v3183 = vsel %vm1255, %v3167, 0.0
        %3184 = vadd.xlane.f32.xlu0 %v3183
        %v3185 = vpop.xlane.xlu0 %3184
        %v3186 = vsel %vm1255, %v3169, 0.0
        %3187 = vadd.xlane.f32.xlu0 %v3186
        %v3188 = vpop.xlane.xlu0 %3187
        %v3189 = vsel %vm1255, %v3171, 0.0
        %3190 = vadd.xlane.f32.xlu0 %v3189
        %v3191 = vpop.xlane.xlu0 %3190
        %v3192 = vsel %vm1255, %v3173, 0.0
        %3193 = vadd.xlane.f32.xlu0 %v3192
        %v3194 = vpop.xlane.xlu0 %3193
        %v3195 = vsel %vm1255, %v3175, 0.0
        %3196 = vadd.xlane.f32.xlu0 %v3195
        %v3197 = vpop.xlane.xlu0 %3196
        %v3198 = vsel %vm1255, %v3177, 0.0
        %3199 = vadd.xlane.f32.xlu0 %v3198
        %v3200 = vpop.xlane.xlu0 %3199
        %v3201 = vsel %vm1255, %v3179, 0.0
        %3202 = vadd.xlane.f32.xlu0 %v3201
        %v3203 = vpop.xlane.xlu0 %3202
        %v3204 = vrcp.pop %v3182
        %v3205 = vrcp.pop %v3185
        %v3206 = vrcp.pop %v3188
        %v3207 = vrcp.pop %v3191
        %v3208 = vrcp.pop %v3194
        %v3209 = vrcp.pop %v3197
        %v3210 = vrcp.pop %v3200
        %v3211 = vrcp.pop %v3203
        %v3212 = vmul.f32 %v3165, %v3204
        %v3213 = vmul.f32 %v3167, %v3205
        %v3214 = vmul.f32 %v3169, %v3206
        %v3215 = vmul.f32 %v3171, %v3207
        %v3216 = vmul.f32 %v3173, %v3208
        %v3217 = vmul.f32 %v3175, %v3209
        %v3218 = vmul.f32 %v3177, %v3210
        %v3219 = vmul.f32 %v3179, %v3211
        %v3220 = vpack.c.bf16 %v3212, %v3212
        %v3221 = vpack.c.bf16 %v3213, %v3213
        %v3222 = vpack.c.bf16 %v3214, %v3214
        %v3223 = vpack.c.bf16 %v3215, %v3215
        %v3224 = vpack.c.bf16 %v3216, %v3216
        %v3225 = vpack.c.bf16 %v3217, %v3217
        %v3226 = vpack.c.bf16 %v3218, %v3218
        %v3227 = vpack.c.bf16 %v3219, %v3219
        %v3229 = vsel %vm1255, %v3220, 0
        %v3231 = vsel %vm1355, %v2764, 0
        %3233 = vmatprep.subr.bf16.mxu0 0
        %3234 = vmatpush1.bf16.msra.mxu0 0
        %3235 = vmatprep.subr.bf16.mxu0 0
        %3236 = vmatpush1.bf16.msra.mxu0 0
        %3237 = vmatprep.subr.bf16.mxu0 0
        %3238 = vmatpush1.bf16.msra.mxu0 0
        %3239 = vmatprep.subr.bf16.mxu0 0
        %3240 = vmatpush1.bf16.msra.mxu0 0
        %3241 = vmatprep.subr.bf16.mxu0 0
        %3242 = vmatpush1.bf16.msra.mxu0 0
        %3243 = vmatprep.subr.bf16.mxu0 0
        %3244 = vmatpush1.bf16.msra.mxu0 0
        %3245 = vmatprep.subr.bf16.mxu0 0
        %3246 = vmatpush1.bf16.msra.mxu0 0
        %3247 = vmatprep.subr.bf16.mxu0 0
        %3248 = vmatpush1.bf16.msra.mxu0 %v3231
        %3249 = vmatprep.subr.bf16.mxu0 0
        %3250 = vmatpush2.bf16.msra.mxu0 0
        %3251 = vmatprep.subr.bf16.mxu0 0
        %3252 = vmatpush2.bf16.msra.mxu0 0
        %3253 = vmatprep.subr.bf16.mxu0 0
        %3254 = vmatpush2.bf16.msra.mxu0 0
        %3255 = vmatprep.subr.bf16.mxu0 0
        %3256 = vmatpush2.bf16.msra.mxu0 0
        %3257 = vmatprep.subr.bf16.mxu0 0
        %3258 = vmatpush2.bf16.msra.mxu0 0
        %3259 = vmatprep.subr.bf16.mxu0 0
        %3260 = vmatpush2.bf16.msra.mxu0 0
        %3261 = vmatprep.subr.bf16.mxu0 0
        %3262 = vmatpush2.bf16.msra.mxu0 0
        %3263 = vmatprep.subr.bf16.mxu0 0
        %3264 = vmatpush2.bf16.msra.mxu0 0
        %3265 = vmatprep.mubr.bf16.mxu0 0
        %3266 = vmatmul.mubr.bf16.gmra.mxu0 %v3229
        %v3267 = vpop.f32.mrf.mxu0
        %v3268 = vadd.f32 0.0, %v3267
        %v3269 = vpop.f32.mrf.mxu0
        %v3270 = vpop.f32.mrf.mxu0
        %v3271 = vpop.f32.mrf.mxu0
        %3272 = vdwg.mxu0
        %v3274 = vsel %vm1255, %v3221, 0
        %v3276 = vsel %vm1355, %v2765, 0
        %3278 = vmatprep.subr.bf16.mxu0 0
        %3279 = vmatpush1.bf16.msra.mxu0 0
        %3280 = vmatprep.subr.bf16.mxu0 0
        %3281 = vmatpush1.bf16.msra.mxu0 0
        %3282 = vmatprep.subr.bf16.mxu0 0
        %3283 = vmatpush1.bf16.msra.mxu0 0
        %3284 = vmatprep.subr.bf16.mxu0 0
        %3285 = vmatpush1.bf16.msra.mxu0 0
        %3286 = vmatprep.subr.bf16.mxu0 0
        %3287 = vmatpush1.bf16.msra.mxu0 0
        %3288 = vmatprep.subr.bf16.mxu0 0
        %3289 = vmatpush1.bf16.msra.mxu0 0
        %3290 = vmatprep.subr.bf16.mxu0 0
        %3291 = vmatpush1.bf16.msra.mxu0 0
        %3292 = vmatprep.subr.bf16.mxu0 0
        %3293 = vmatpush1.bf16.msra.mxu0 %v3276
        %3294 = vmatprep.subr.bf16.mxu0 0
        %3295 = vmatpush2.bf16.msra.mxu0 0
        %3296 = vmatprep.subr.bf16.mxu0 0
        %3297 = vmatpush2.bf16.msra.mxu0 0
        %3298 = vmatprep.subr.bf16.mxu0 0
        %3299 = vmatpush2.bf16.msra.mxu0 0
        %3300 = vmatprep.subr.bf16.mxu0 0
        %3301 = vmatpush2.bf16.msra.mxu0 0
        %3302 = vmatprep.subr.bf16.mxu0 0
        %3303 = vmatpush2.bf16.msra.mxu0 0
        %3304 = vmatprep.subr.bf16.mxu0 0
        %3305 = vmatpush2.bf16.msra.mxu0 0
        %3306 = vmatprep.subr.bf16.mxu0 0
        %3307 = vmatpush2.bf16.msra.mxu0 0
        %3308 = vmatprep.subr.bf16.mxu0 0
        %3309 = vmatpush2.bf16.msra.mxu0 0
        %3310 = vmatprep.mubr.bf16.mxu0 0
        %3311 = vmatmul.mubr.bf16.gmra.mxu0 %v3274
        %v3312 = vpop.f32.mrf.mxu0
        %v3313 = vadd.f32 0.0, %v3312
        %v3314 = vpop.f32.mrf.mxu0
        %v3315 = vpop.f32.mrf.mxu0
        %v3316 = vpop.f32.mrf.mxu0
        %3317 = vdwg.mxu0
        %v3319 = vsel %vm1255, %v3222, 0
        %v3321 = vsel %vm1355, %v2766, 0
        %3323 = vmatprep.subr.bf16.mxu0 0
        %3324 = vmatpush1.bf16.msra.mxu0 0
        %3325 = vmatprep.subr.bf16.mxu0 0
        %3326 = vmatpush1.bf16.msra.mxu0 0
        %3327 = vmatprep.subr.bf16.mxu0 0
        %3328 = vmatpush1.bf16.msra.mxu0 0
        %3329 = vmatprep.subr.bf16.mxu0 0
        %3330 = vmatpush1.bf16.msra.mxu0 0
        %3331 = vmatprep.subr.bf16.mxu0 0
        %3332 = vmatpush1.bf16.msra.mxu0 0
        %3333 = vmatprep.subr.bf16.mxu0 0
        %3334 = vmatpush1.bf16.msra.mxu0 0
        %3335 = vmatprep.subr.bf16.mxu0 0
        %3336 = vmatpush1.bf16.msra.mxu0 0
        %3337 = vmatprep.subr.bf16.mxu0 0
        %3338 = vmatpush1.bf16.msra.mxu0 %v3321
        %3339 = vmatprep.subr.bf16.mxu0 0
        %3340 = vmatpush2.bf16.msra.mxu0 0
        %3341 = vmatprep.subr.bf16.mxu0 0
        %3342 = vmatpush2.bf16.msra.mxu0 0
        %3343 = vmatprep.subr.bf16.mxu0 0
        %3344 = vmatpush2.bf16.msra.mxu0 0
        %3345 = vmatprep.subr.bf16.mxu0 0
        %3346 = vmatpush2.bf16.msra.mxu0 0
        %3347 = vmatprep.subr.bf16.mxu0 0
        %3348 = vmatpush2.bf16.msra.mxu0 0
        %3349 = vmatprep.subr.bf16.mxu0 0
        %3350 = vmatpush2.bf16.msra.mxu0 0
        %3351 = vmatprep.subr.bf16.mxu0 0
        %3352 = vmatpush2.bf16.msra.mxu0 0
        %3353 = vmatprep.subr.bf16.mxu0 0
        %3354 = vmatpush2.bf16.msra.mxu0 0
        %3355 = vmatprep.mubr.bf16.mxu0 0
        %3356 = vmatmul.mubr.bf16.gmra.mxu0 %v3319
        %v3357 = vpop.f32.mrf.mxu0
        %v3358 = vadd.f32 0.0, %v3357
        %v3359 = vpop.f32.mrf.mxu0
        %v3360 = vpop.f32.mrf.mxu0
        %v3361 = vpop.f32.mrf.mxu0
        %3362 = vdwg.mxu0
        %v3364 = vsel %vm1255, %v3223, 0
        %v3366 = vsel %vm1355, %v2767, 0
        %3368 = vmatprep.subr.bf16.mxu0 0
        %3369 = vmatpush1.bf16.msra.mxu0 0
        %3370 = vmatprep.subr.bf16.mxu0 0
        %3371 = vmatpush1.bf16.msra.mxu0 0
        %3372 = vmatprep.subr.bf16.mxu0 0
        %3373 = vmatpush1.bf16.msra.mxu0 0
        %3374 = vmatprep.subr.bf16.mxu0 0
        %3375 = vmatpush1.bf16.msra.mxu0 0
        %3376 = vmatprep.subr.bf16.mxu0 0
        %3377 = vmatpush1.bf16.msra.mxu0 0
        %3378 = vmatprep.subr.bf16.mxu0 0
        %3379 = vmatpush1.bf16.msra.mxu0 0
        %3380 = vmatprep.subr.bf16.mxu0 0
        %3381 = vmatpush1.bf16.msra.mxu0 0
        %3382 = vmatprep.subr.bf16.mxu0 0
        %3383 = vmatpush1.bf16.msra.mxu0 %v3366
        %3384 = vmatprep.subr.bf16.mxu0 0
        %3385 = vmatpush2.bf16.msra.mxu0 0
        %3386 = vmatprep.subr.bf16.mxu0 0
        %3387 = vmatpush2.bf16.msra.mxu0 0
        %3388 = vmatprep.subr.bf16.mxu0 0
        %3389 = vmatpush2.bf16.msra.mxu0 0
        %3390 = vmatprep.subr.bf16.mxu0 0
        %3391 = vmatpush2.bf16.msra.mxu0 0
        %3392 = vmatprep.subr.bf16.mxu0 0
        %3393 = vmatpush2.bf16.msra.mxu0 0
        %3394 = vmatprep.subr.bf16.mxu0 0
        %3395 = vmatpush2.bf16.msra.mxu0 0
        %3396 = vmatprep.subr.bf16.mxu0 0
        %3397 = vmatpush2.bf16.msra.mxu0 0
        %3398 = vmatprep.subr.bf16.mxu0 0
        %3399 = vmatpush2.bf16.msra.mxu0 0
        %3400 = vmatprep.mubr.bf16.mxu0 0
        %3401 = vmatmul.mubr.bf16.gmra.mxu0 %v3364
        %v3402 = vpop.f32.mrf.mxu0
        %v3403 = vadd.f32 0.0, %v3402
        %v3404 = vpop.f32.mrf.mxu0
        %v3405 = vpop.f32.mrf.mxu0
        %v3406 = vpop.f32.mrf.mxu0
        %3407 = vdwg.mxu0
        %v3409 = vsel %vm1255, %v3224, 0
        %v3411 = vsel %vm1355, %v2768, 0
        %3413 = vmatprep.subr.bf16.mxu0 0
        %3414 = vmatpush1.bf16.msra.mxu0 0
        %3415 = vmatprep.subr.bf16.mxu0 0
        %3416 = vmatpush1.bf16.msra.mxu0 0
        %3417 = vmatprep.subr.bf16.mxu0 0
        %3418 = vmatpush1.bf16.msra.mxu0 0
        %3419 = vmatprep.subr.bf16.mxu0 0
        %3420 = vmatpush1.bf16.msra.mxu0 0
        %3421 = vmatprep.subr.bf16.mxu0 0
        %3422 = vmatpush1.bf16.msra.mxu0 0
        %3423 = vmatprep.subr.bf16.mxu0 0
        %3424 = vmatpush1.bf16.msra.mxu0 0
        %3425 = vmatprep.subr.bf16.mxu0 0
        %3426 = vmatpush1.bf16.msra.mxu0 0
        %3427 = vmatprep.subr.bf16.mxu0 0
        %3428 = vmatpush1.bf16.msra.mxu0 %v3411
        %3429 = vmatprep.subr.bf16.mxu0 0
        %3430 = vmatpush2.bf16.msra.mxu0 0
        %3431 = vmatprep.subr.bf16.mxu0 0
        %3432 = vmatpush2.bf16.msra.mxu0 0
        %3433 = vmatprep.subr.bf16.mxu0 0
        %3434 = vmatpush2.bf16.msra.mxu0 0
        %3435 = vmatprep.subr.bf16.mxu0 0
        %3436 = vmatpush2.bf16.msra.mxu0 0
        %3437 = vmatprep.subr.bf16.mxu0 0
        %3438 = vmatpush2.bf16.msra.mxu0 0
        %3439 = vmatprep.subr.bf16.mxu0 0
        %3440 = vmatpush2.bf16.msra.mxu0 0
        %3441 = vmatprep.subr.bf16.mxu0 0
        %3442 = vmatpush2.bf16.msra.mxu0 0
        %3443 = vmatprep.subr.bf16.mxu0 0
        %3444 = vmatpush2.bf16.msra.mxu0 0
        %3445 = vmatprep.mubr.bf16.mxu0 0
        %3446 = vmatmul.mubr.bf16.gmra.mxu0 %v3409
        %v3447 = vpop.f32.mrf.mxu0
        %v3448 = vadd.f32 0.0, %v3447
        %v3449 = vpop.f32.mrf.mxu0
        %v3450 = vpop.f32.mrf.mxu0
        %v3451 = vpop.f32.mrf.mxu0
        %3452 = vdwg.mxu0
        %v3454 = vsel %vm1255, %v3225, 0
        %v3456 = vsel %vm1355, %v2769, 0
        %3458 = vmatprep.subr.bf16.mxu0 0
        %3459 = vmatpush1.bf16.msra.mxu0 0
        %3460 = vmatprep.subr.bf16.mxu0 0
        %3461 = vmatpush1.bf16.msra.mxu0 0
        %3462 = vmatprep.subr.bf16.mxu0 0
        %3463 = vmatpush1.bf16.msra.mxu0 0
        %3464 = vmatprep.subr.bf16.mxu0 0
        %3465 = vmatpush1.bf16.msra.mxu0 0
        %3466 = vmatprep.subr.bf16.mxu0 0
        %3467 = vmatpush1.bf16.msra.mxu0 0
        %3468 = vmatprep.subr.bf16.mxu0 0
        %3469 = vmatpush1.bf16.msra.mxu0 0
        %3470 = vmatprep.subr.bf16.mxu0 0
        %3471 = vmatpush1.bf16.msra.mxu0 0
        %3472 = vmatprep.subr.bf16.mxu0 0
        %3473 = vmatpush1.bf16.msra.mxu0 %v3456
        %3474 = vmatprep.subr.bf16.mxu0 0
        %3475 = vmatpush2.bf16.msra.mxu0 0
        %3476 = vmatprep.subr.bf16.mxu0 0
        %3477 = vmatpush2.bf16.msra.mxu0 0
        %3478 = vmatprep.subr.bf16.mxu0 0
        %3479 = vmatpush2.bf16.msra.mxu0 0
        %3480 = vmatprep.subr.bf16.mxu0 0
        %3481 = vmatpush2.bf16.msra.mxu0 0
        %3482 = vmatprep.subr.bf16.mxu0 0
        %3483 = vmatpush2.bf16.msra.mxu0 0
        %3484 = vmatprep.subr.bf16.mxu0 0
        %3485 = vmatpush2.bf16.msra.mxu0 0
        %3486 = vmatprep.subr.bf16.mxu0 0
        %3487 = vmatpush2.bf16.msra.mxu0 0
        %3488 = vmatprep.subr.bf16.mxu0 0
        %3489 = vmatpush2.bf16.msra.mxu0 0
        %3490 = vmatprep.mubr.bf16.mxu0 0
        %3491 = vmatmul.mubr.bf16.gmra.mxu0 %v3454
        %v3492 = vpop.f32.mrf.mxu0
        %v3493 = vadd.f32 0.0, %v3492
        %v3494 = vpop.f32.mrf.mxu0
        %v3495 = vpop.f32.mrf.mxu0
        %v3496 = vpop.f32.mrf.mxu0
        %3497 = vdwg.mxu0
        %v3499 = vsel %vm1255, %v3226, 0
        %v3501 = vsel %vm1355, %v2770, 0
        %3503 = vmatprep.subr.bf16.mxu0 0
        %3504 = vmatpush1.bf16.msra.mxu0 0
        %3505 = vmatprep.subr.bf16.mxu0 0
        %3506 = vmatpush1.bf16.msra.mxu0 0
        %3507 = vmatprep.subr.bf16.mxu0 0
        %3508 = vmatpush1.bf16.msra.mxu0 0
        %3509 = vmatprep.subr.bf16.mxu0 0
        %3510 = vmatpush1.bf16.msra.mxu0 0
        %3511 = vmatprep.subr.bf16.mxu0 0
        %3512 = vmatpush1.bf16.msra.mxu0 0
        %3513 = vmatprep.subr.bf16.mxu0 0
        %3514 = vmatpush1.bf16.msra.mxu0 0
        %3515 = vmatprep.subr.bf16.mxu0 0
        %3516 = vmatpush1.bf16.msra.mxu0 0
        %3517 = vmatprep.subr.bf16.mxu0 0
        %3518 = vmatpush1.bf16.msra.mxu0 %v3501
        %3519 = vmatprep.subr.bf16.mxu0 0
        %3520 = vmatpush2.bf16.msra.mxu0 0
        %3521 = vmatprep.subr.bf16.mxu0 0
        %3522 = vmatpush2.bf16.msra.mxu0 0
        %3523 = vmatprep.subr.bf16.mxu0 0
        %3524 = vmatpush2.bf16.msra.mxu0 0
        %3525 = vmatprep.subr.bf16.mxu0 0
        %3526 = vmatpush2.bf16.msra.mxu0 0
        %3527 = vmatprep.subr.bf16.mxu0 0
        %3528 = vmatpush2.bf16.msra.mxu0 0
        %3529 = vmatprep.subr.bf16.mxu0 0
        %3530 = vmatpush2.bf16.msra.mxu0 0
        %3531 = vmatprep.subr.bf16.mxu0 0
        %3532 = vmatpush2.bf16.msra.mxu0 0
        %3533 = vmatprep.subr.bf16.mxu0 0
        %3534 = vmatpush2.bf16.msra.mxu0 0
        %3535 = vmatprep.mubr.bf16.mxu0 0
        %3536 = vmatmul.mubr.bf16.gmra.mxu0 %v3499
        %v3537 = vpop.f32.mrf.mxu0
        %v3538 = vadd.f32 0.0, %v3537
        %v3539 = vpop.f32.mrf.mxu0
        %v3540 = vpop.f32.mrf.mxu0
        %v3541 = vpop.f32.mrf.mxu0
        %3542 = vdwg.mxu0
        %v3544 = vsel %vm1255, %v3227, 0
        %v3546 = vsel %vm1355, %v2771, 0
        %3548 = vmatprep.subr.bf16.mxu0 0
        %3549 = vmatpush1.bf16.msra.mxu0 0
        %3550 = vmatprep.subr.bf16.mxu0 0
        %3551 = vmatpush1.bf16.msra.mxu0 0
        %3552 = vmatprep.subr.bf16.mxu0 0
        %3553 = vmatpush1.bf16.msra.mxu0 0
        %3554 = vmatprep.subr.bf16.mxu0 0
        %3555 = vmatpush1.bf16.msra.mxu0 0
        %3556 = vmatprep.subr.bf16.mxu0 0
        %3557 = vmatpush1.bf16.msra.mxu0 0
        %3558 = vmatprep.subr.bf16.mxu0 0
        %3559 = vmatpush1.bf16.msra.mxu0 0
        %3560 = vmatprep.subr.bf16.mxu0 0
        %3561 = vmatpush1.bf16.msra.mxu0 0
        %3562 = vmatprep.subr.bf16.mxu0 0
        %3563 = vmatpush1.bf16.msra.mxu0 %v3546
        %3564 = vmatprep.subr.bf16.mxu0 0
        %3565 = vmatpush2.bf16.msra.mxu0 0
        %3566 = vmatprep.subr.bf16.mxu0 0
        %3567 = vmatpush2.bf16.msra.mxu0 0
        %3568 = vmatprep.subr.bf16.mxu0 0
        %3569 = vmatpush2.bf16.msra.mxu0 0
        %3570 = vmatprep.subr.bf16.mxu0 0
        %3571 = vmatpush2.bf16.msra.mxu0 0
        %3572 = vmatprep.subr.bf16.mxu0 0
        %3573 = vmatpush2.bf16.msra.mxu0 0
        %3574 = vmatprep.subr.bf16.mxu0 0
        %3575 = vmatpush2.bf16.msra.mxu0 0
        %3576 = vmatprep.subr.bf16.mxu0 0
        %3577 = vmatpush2.bf16.msra.mxu0 0
        %3578 = vmatprep.subr.bf16.mxu0 0
        %3579 = vmatpush2.bf16.msra.mxu0 0
        %3580 = vmatprep.mubr.bf16.mxu0 0
        %3581 = vmatmul.mubr.bf16.gmra.mxu0 %v3544
        %v3582 = vpop.f32.mrf.mxu0
        %v3583 = vadd.f32 0.0, %v3582
        %v3584 = vpop.f32.mrf.mxu0
        %v3585 = vpop.f32.mrf.mxu0
        %v3586 = vpop.f32.mrf.mxu0
        %3587 = vdwg.mxu0
        %v3588 = vpack.c.bf16 %v3268, %v3268
        %v3589 = vpack.c.bf16 %v3313, %v3313
        %v3590 = vpack.c.bf16 %v3358, %v3358
        %v3591 = vpack.c.bf16 %v3403, %v3403
        %v3592 = vpack.c.bf16 %v3448, %v3448
        %v3593 = vpack.c.bf16 %v3493, %v3493
        %v3594 = vpack.c.bf16 %v3538, %v3538
        %v3595 = vpack.c.bf16 %v3583, %v3583
        %s3596 = scalar_lea.vmem %s3, 16
        %v3597 = vld [vmem:[%s3596] sm:$0x3]
        %v3598 = vld [vmem:[%s3596 + $0x2] sm:$0x3]
        %v3599 = vld [vmem:[%s3596 + $0x4] sm:$0x3]
        %v3600 = vld [vmem:[%s3596 + $0x6] sm:$0x3]
        %v3601 = vld [vmem:[%s3596 + $0x8] sm:$0x3]
        %v3602 = vld [vmem:[%s3596 + $0xa] sm:$0x3]
        %v3603 = vld [vmem:[%s3596 + $0xc] sm:$0x3]
        %v3604 = vld [vmem:[%s3596 + $0xe] sm:$0x3]
        %v3606 = vsel %vm888, %v3588, 0
        %v3609 = vsel %vm1732, %v3597, 0
        %3611 = vmatprep.subr.bf16.mxu0 0
        %3612 = vmatpush1.bf16.msra.mxu0 0
        %3613 = vmatprep.subr.bf16.mxu0 0
        %3614 = vmatpush1.bf16.msra.mxu0 0
        %3615 = vmatprep.subr.bf16.mxu0 0
        %3616 = vmatpush1.bf16.msra.mxu0 0
        %3617 = vmatprep.subr.bf16.mxu0 0
        %3618 = vmatpush1.bf16.msra.mxu0 0
        %3619 = vmatprep.subr.bf16.mxu0 0
        %3620 = vmatpush1.bf16.msra.mxu0 0
        %3621 = vmatprep.subr.bf16.mxu0 0
        %3622 = vmatpush1.bf16.msra.mxu0 0
        %3623 = vmatprep.subr.bf16.mxu0 0
        %3624 = vmatpush1.bf16.msra.mxu0 0
        %3625 = vmatprep.subr.bf16.mxu0 0
        %3626 = vmatpush1.bf16.msra.mxu0 %v3609
        %3627 = vmatprep.subr.bf16.mxu0 0
        %3628 = vmatpush2.bf16.msra.mxu0 0
        %3629 = vmatprep.subr.bf16.mxu0 0
        %3630 = vmatpush2.bf16.msra.mxu0 0
        %3631 = vmatprep.subr.bf16.mxu0 0
        %3632 = vmatpush2.bf16.msra.mxu0 0
        %3633 = vmatprep.subr.bf16.mxu0 0
        %3634 = vmatpush2.bf16.msra.mxu0 0
        %3635 = vmatprep.subr.bf16.mxu0 0
        %3636 = vmatpush2.bf16.msra.mxu0 0
        %3637 = vmatprep.subr.bf16.mxu0 0
        %3638 = vmatpush2.bf16.msra.mxu0 0
        %3639 = vmatprep.subr.bf16.mxu0 0
        %3640 = vmatpush2.bf16.msra.mxu0 0
        %3641 = vmatprep.subr.bf16.mxu0 0
        %3642 = vmatpush2.bf16.msra.mxu0 0
        %3643 = vmatprep.mubr.bf16.mxu0 0
        %3644 = vmatmul.mubr.bf16.gmra.mxu0 %v3606
        %v3645 = vpop.f32.mrf.mxu0
        %v3646 = vadd.f32 0.0, %v3645
        %v3647 = vpop.f32.mrf.mxu0
        %v3648 = vpop.f32.mrf.mxu0
        %v3649 = vpop.f32.mrf.mxu0
        %3650 = vdwg.mxu0
        %v3652 = vsel %vm888, %v3589, 0
        %v3655 = vsel %vm1732, %v3598, 0
        %3657 = vmatprep.subr.bf16.mxu0 0
        %3658 = vmatpush1.bf16.msra.mxu0 0
        %3659 = vmatprep.subr.bf16.mxu0 0
        %3660 = vmatpush1.bf16.msra.mxu0 0
        %3661 = vmatprep.subr.bf16.mxu0 0
        %3662 = vmatpush1.bf16.msra.mxu0 0
        %3663 = vmatprep.subr.bf16.mxu0 0
        %3664 = vmatpush1.bf16.msra.mxu0 0
        %3665 = vmatprep.subr.bf16.mxu0 0
        %3666 = vmatpush1.bf16.msra.mxu0 0
        %3667 = vmatprep.subr.bf16.mxu0 0
        %3668 = vmatpush1.bf16.msra.mxu0 0
        %3669 = vmatprep.subr.bf16.mxu0 0
        %3670 = vmatpush1.bf16.msra.mxu0 0
        %3671 = vmatprep.subr.bf16.mxu0 0
        %3672 = vmatpush1.bf16.msra.mxu0 %v3655
        %3673 = vmatprep.subr.bf16.mxu0 0
        %3674 = vmatpush2.bf16.msra.mxu0 0
        %3675 = vmatprep.subr.bf16.mxu0 0
        %3676 = vmatpush2.bf16.msra.mxu0 0
        %3677 = vmatprep.subr.bf16.mxu0 0
        %3678 = vmatpush2.bf16.msra.mxu0 0
        %3679 = vmatprep.subr.bf16.mxu0 0
        %3680 = vmatpush2.bf16.msra.mxu0 0
        %3681 = vmatprep.subr.bf16.mxu0 0
        %3682 = vmatpush2.bf16.msra.mxu0 0
        %3683 = vmatprep.subr.bf16.mxu0 0
        %3684 = vmatpush2.bf16.msra.mxu0 0
        %3685 = vmatprep.subr.bf16.mxu0 0
        %3686 = vmatpush2.bf16.msra.mxu0 0
        %3687 = vmatprep.subr.bf16.mxu0 0
        %3688 = vmatpush2.bf16.msra.mxu0 0
        %3689 = vmatprep.mubr.bf16.mxu0 0
        %3690 = vmatmul.mubr.bf16.gmra.mxu0 %v3652
        %v3691 = vpop.f32.mrf.mxu0
        %v3692 = vadd.f32 0.0, %v3691
        %v3693 = vpop.f32.mrf.mxu0
        %v3694 = vpop.f32.mrf.mxu0
        %v3695 = vpop.f32.mrf.mxu0
        %3696 = vdwg.mxu0
        %v3698 = vsel %vm888, %v3590, 0
        %v3701 = vsel %vm1732, %v3599, 0
        %3703 = vmatprep.subr.bf16.mxu0 0
        %3704 = vmatpush1.bf16.msra.mxu0 0
        %3705 = vmatprep.subr.bf16.mxu0 0
        %3706 = vmatpush1.bf16.msra.mxu0 0
        %3707 = vmatprep.subr.bf16.mxu0 0
        %3708 = vmatpush1.bf16.msra.mxu0 0
        %3709 = vmatprep.subr.bf16.mxu0 0
        %3710 = vmatpush1.bf16.msra.mxu0 0
        %3711 = vmatprep.subr.bf16.mxu0 0
        %3712 = vmatpush1.bf16.msra.mxu0 0
        %3713 = vmatprep.subr.bf16.mxu0 0
        %3714 = vmatpush1.bf16.msra.mxu0 0
        %3715 = vmatprep.subr.bf16.mxu0 0
        %3716 = vmatpush1.bf16.msra.mxu0 0
        %3717 = vmatprep.subr.bf16.mxu0 0
        %3718 = vmatpush1.bf16.msra.mxu0 %v3701
        %3719 = vmatprep.subr.bf16.mxu0 0
        %3720 = vmatpush2.bf16.msra.mxu0 0
        %3721 = vmatprep.subr.bf16.mxu0 0
        %3722 = vmatpush2.bf16.msra.mxu0 0
        %3723 = vmatprep.subr.bf16.mxu0 0
        %3724 = vmatpush2.bf16.msra.mxu0 0
        %3725 = vmatprep.subr.bf16.mxu0 0
        %3726 = vmatpush2.bf16.msra.mxu0 0
        %3727 = vmatprep.subr.bf16.mxu0 0
        %3728 = vmatpush2.bf16.msra.mxu0 0
        %3729 = vmatprep.subr.bf16.mxu0 0
        %3730 = vmatpush2.bf16.msra.mxu0 0
        %3731 = vmatprep.subr.bf16.mxu0 0
        %3732 = vmatpush2.bf16.msra.mxu0 0
        %3733 = vmatprep.subr.bf16.mxu0 0
        %3734 = vmatpush2.bf16.msra.mxu0 0
        %3735 = vmatprep.mubr.bf16.mxu0 0
        %3736 = vmatmul.mubr.bf16.gmra.mxu0 %v3698
        %v3737 = vpop.f32.mrf.mxu0
        %v3738 = vadd.f32 0.0, %v3737
        %v3739 = vpop.f32.mrf.mxu0
        %v3740 = vpop.f32.mrf.mxu0
        %v3741 = vpop.f32.mrf.mxu0
        %3742 = vdwg.mxu0
        %v3744 = vsel %vm888, %v3591, 0
        %v3747 = vsel %vm1732, %v3600, 0
        %3749 = vmatprep.subr.bf16.mxu0 0
        %3750 = vmatpush1.bf16.msra.mxu0 0
        %3751 = vmatprep.subr.bf16.mxu0 0
        %3752 = vmatpush1.bf16.msra.mxu0 0
        %3753 = vmatprep.subr.bf16.mxu0 0
        %3754 = vmatpush1.bf16.msra.mxu0 0
        %3755 = vmatprep.subr.bf16.mxu0 0
        %3756 = vmatpush1.bf16.msra.mxu0 0
        %3757 = vmatprep.subr.bf16.mxu0 0
        %3758 = vmatpush1.bf16.msra.mxu0 0
        %3759 = vmatprep.subr.bf16.mxu0 0
        %3760 = vmatpush1.bf16.msra.mxu0 0
        %3761 = vmatprep.subr.bf16.mxu0 0
        %3762 = vmatpush1.bf16.msra.mxu0 0
        %3763 = vmatprep.subr.bf16.mxu0 0
        %3764 = vmatpush1.bf16.msra.mxu0 %v3747
        %3765 = vmatprep.subr.bf16.mxu0 0
        %3766 = vmatpush2.bf16.msra.mxu0 0
        %3767 = vmatprep.subr.bf16.mxu0 0
        %3768 = vmatpush2.bf16.msra.mxu0 0
        %3769 = vmatprep.subr.bf16.mxu0 0
        %3770 = vmatpush2.bf16.msra.mxu0 0
        %3771 = vmatprep.subr.bf16.mxu0 0
        %3772 = vmatpush2.bf16.msra.mxu0 0
        %3773 = vmatprep.subr.bf16.mxu0 0
        %3774 = vmatpush2.bf16.msra.mxu0 0
        %3775 = vmatprep.subr.bf16.mxu0 0
        %3776 = vmatpush2.bf16.msra.mxu0 0
        %3777 = vmatprep.subr.bf16.mxu0 0
        %3778 = vmatpush2.bf16.msra.mxu0 0
        %3779 = vmatprep.subr.bf16.mxu0 0
        %3780 = vmatpush2.bf16.msra.mxu0 0
        %3781 = vmatprep.mubr.bf16.mxu0 0
        %3782 = vmatmul.mubr.bf16.gmra.mxu0 %v3744
        %v3783 = vpop.f32.mrf.mxu0
        %v3784 = vadd.f32 0.0, %v3783
        %v3785 = vpop.f32.mrf.mxu0
        %v3786 = vpop.f32.mrf.mxu0
        %v3787 = vpop.f32.mrf.mxu0
        %3788 = vdwg.mxu0
        %v3790 = vsel %vm888, %v3592, 0
        %v3793 = vsel %vm1732, %v3601, 0
        %3795 = vmatprep.subr.bf16.mxu0 0
        %3796 = vmatpush1.bf16.msra.mxu0 0
        %3797 = vmatprep.subr.bf16.mxu0 0
        %3798 = vmatpush1.bf16.msra.mxu0 0
        %3799 = vmatprep.subr.bf16.mxu0 0
        %3800 = vmatpush1.bf16.msra.mxu0 0
        %3801 = vmatprep.subr.bf16.mxu0 0
        %3802 = vmatpush1.bf16.msra.mxu0 0
        %3803 = vmatprep.subr.bf16.mxu0 0
        %3804 = vmatpush1.bf16.msra.mxu0 0
        %3805 = vmatprep.subr.bf16.mxu0 0
        %3806 = vmatpush1.bf16.msra.mxu0 0
        %3807 = vmatprep.subr.bf16.mxu0 0
        %3808 = vmatpush1.bf16.msra.mxu0 0
        %3809 = vmatprep.subr.bf16.mxu0 0
        %3810 = vmatpush1.bf16.msra.mxu0 %v3793
        %3811 = vmatprep.subr.bf16.mxu0 0
        %3812 = vmatpush2.bf16.msra.mxu0 0
        %3813 = vmatprep.subr.bf16.mxu0 0
        %3814 = vmatpush2.bf16.msra.mxu0 0
        %3815 = vmatprep.subr.bf16.mxu0 0
        %3816 = vmatpush2.bf16.msra.mxu0 0
        %3817 = vmatprep.subr.bf16.mxu0 0
        %3818 = vmatpush2.bf16.msra.mxu0 0
        %3819 = vmatprep.subr.bf16.mxu0 0
        %3820 = vmatpush2.bf16.msra.mxu0 0
        %3821 = vmatprep.subr.bf16.mxu0 0
        %3822 = vmatpush2.bf16.msra.mxu0 0
        %3823 = vmatprep.subr.bf16.mxu0 0
        %3824 = vmatpush2.bf16.msra.mxu0 0
        %3825 = vmatprep.subr.bf16.mxu0 0
        %3826 = vmatpush2.bf16.msra.mxu0 0
        %3827 = vmatprep.mubr.bf16.mxu0 0
        %3828 = vmatmul.mubr.bf16.gmra.mxu0 %v3790
        %v3829 = vpop.f32.mrf.mxu0
        %v3830 = vadd.f32 0.0, %v3829
        %v3831 = vpop.f32.mrf.mxu0
        %v3832 = vpop.f32.mrf.mxu0
        %v3833 = vpop.f32.mrf.mxu0
        %3834 = vdwg.mxu0
        %v3836 = vsel %vm888, %v3593, 0
        %v3839 = vsel %vm1732, %v3602, 0
        %3841 = vmatprep.subr.bf16.mxu0 0
        %3842 = vmatpush1.bf16.msra.mxu0 0
        %3843 = vmatprep.subr.bf16.mxu0 0
        %3844 = vmatpush1.bf16.msra.mxu0 0
        %3845 = vmatprep.subr.bf16.mxu0 0
        %3846 = vmatpush1.bf16.msra.mxu0 0
        %3847 = vmatprep.subr.bf16.mxu0 0
        %3848 = vmatpush1.bf16.msra.mxu0 0
        %3849 = vmatprep.subr.bf16.mxu0 0
        %3850 = vmatpush1.bf16.msra.mxu0 0
        %3851 = vmatprep.subr.bf16.mxu0 0
        %3852 = vmatpush1.bf16.msra.mxu0 0
        %3853 = vmatprep.subr.bf16.mxu0 0
        %3854 = vmatpush1.bf16.msra.mxu0 0
        %3855 = vmatprep.subr.bf16.mxu0 0
        %3856 = vmatpush1.bf16.msra.mxu0 %v3839
        %3857 = vmatprep.subr.bf16.mxu0 0
        %3858 = vmatpush2.bf16.msra.mxu0 0
        %3859 = vmatprep.subr.bf16.mxu0 0
        %3860 = vmatpush2.bf16.msra.mxu0 0
        %3861 = vmatprep.subr.bf16.mxu0 0
        %3862 = vmatpush2.bf16.msra.mxu0 0
        %3863 = vmatprep.subr.bf16.mxu0 0
        %3864 = vmatpush2.bf16.msra.mxu0 0
        %3865 = vmatprep.subr.bf16.mxu0 0
        %3866 = vmatpush2.bf16.msra.mxu0 0
        %3867 = vmatprep.subr.bf16.mxu0 0
        %3868 = vmatpush2.bf16.msra.mxu0 0
        %3869 = vmatprep.subr.bf16.mxu0 0
        %3870 = vmatpush2.bf16.msra.mxu0 0
        %3871 = vmatprep.subr.bf16.mxu0 0
        %3872 = vmatpush2.bf16.msra.mxu0 0
        %3873 = vmatprep.mubr.bf16.mxu0 0
        %3874 = vmatmul.mubr.bf16.gmra.mxu0 %v3836
        %v3875 = vpop.f32.mrf.mxu0
        %v3876 = vadd.f32 0.0, %v3875
        %v3877 = vpop.f32.mrf.mxu0
        %v3878 = vpop.f32.mrf.mxu0
        %v3879 = vpop.f32.mrf.mxu0
        %3880 = vdwg.mxu0
        %v3882 = vsel %vm888, %v3594, 0
        %v3885 = vsel %vm1732, %v3603, 0
        %3887 = vmatprep.subr.bf16.mxu0 0
        %3888 = vmatpush1.bf16.msra.mxu0 0
        %3889 = vmatprep.subr.bf16.mxu0 0
        %3890 = vmatpush1.bf16.msra.mxu0 0
        %3891 = vmatprep.subr.bf16.mxu0 0
        %3892 = vmatpush1.bf16.msra.mxu0 0
        %3893 = vmatprep.subr.bf16.mxu0 0
        %3894 = vmatpush1.bf16.msra.mxu0 0
        %3895 = vmatprep.subr.bf16.mxu0 0
        %3896 = vmatpush1.bf16.msra.mxu0 0
        %3897 = vmatprep.subr.bf16.mxu0 0
        %3898 = vmatpush1.bf16.msra.mxu0 0
        %3899 = vmatprep.subr.bf16.mxu0 0
        %3900 = vmatpush1.bf16.msra.mxu0 0
        %3901 = vmatprep.subr.bf16.mxu0 0
        %3902 = vmatpush1.bf16.msra.mxu0 %v3885
        %3903 = vmatprep.subr.bf16.mxu0 0
        %3904 = vmatpush2.bf16.msra.mxu0 0
        %3905 = vmatprep.subr.bf16.mxu0 0
        %3906 = vmatpush2.bf16.msra.mxu0 0
        %3907 = vmatprep.subr.bf16.mxu0 0
        %3908 = vmatpush2.bf16.msra.mxu0 0
        %3909 = vmatprep.subr.bf16.mxu0 0
        %3910 = vmatpush2.bf16.msra.mxu0 0
        %3911 = vmatprep.subr.bf16.mxu0 0
        %3912 = vmatpush2.bf16.msra.mxu0 0
        %3913 = vmatprep.subr.bf16.mxu0 0
        %3914 = vmatpush2.bf16.msra.mxu0 0
        %3915 = vmatprep.subr.bf16.mxu0 0
        %3916 = vmatpush2.bf16.msra.mxu0 0
        %3917 = vmatprep.subr.bf16.mxu0 0
        %3918 = vmatpush2.bf16.msra.mxu0 0
        %3919 = vmatprep.mubr.bf16.mxu0 0
        %3920 = vmatmul.mubr.bf16.gmra.mxu0 %v3882
        %v3921 = vpop.f32.mrf.mxu0
        %v3922 = vadd.f32 0.0, %v3921
        %v3923 = vpop.f32.mrf.mxu0
        %v3924 = vpop.f32.mrf.mxu0
        %v3925 = vpop.f32.mrf.mxu0
        %3926 = vdwg.mxu0
        %v3928 = vsel %vm888, %v3595, 0
        %v3931 = vsel %vm1732, %v3604, 0
        %3933 = vmatprep.subr.bf16.mxu0 0
        %3934 = vmatpush1.bf16.msra.mxu0 0
        %3935 = vmatprep.subr.bf16.mxu0 0
        %3936 = vmatpush1.bf16.msra.mxu0 0
        %3937 = vmatprep.subr.bf16.mxu0 0
        %3938 = vmatpush1.bf16.msra.mxu0 0
        %3939 = vmatprep.subr.bf16.mxu0 0
        %3940 = vmatpush1.bf16.msra.mxu0 0
        %3941 = vmatprep.subr.bf16.mxu0 0
        %3942 = vmatpush1.bf16.msra.mxu0 0
        %3943 = vmatprep.subr.bf16.mxu0 0
        %3944 = vmatpush1.bf16.msra.mxu0 0
        %3945 = vmatprep.subr.bf16.mxu0 0
        %3946 = vmatpush1.bf16.msra.mxu0 0
        %3947 = vmatprep.subr.bf16.mxu0 0
        %3948 = vmatpush1.bf16.msra.mxu0 %v3931
        %3949 = vmatprep.subr.bf16.mxu0 0
        %3950 = vmatpush2.bf16.msra.mxu0 0
        %3951 = vmatprep.subr.bf16.mxu0 0
        %3952 = vmatpush2.bf16.msra.mxu0 0
        %3953 = vmatprep.subr.bf16.mxu0 0
        %3954 = vmatpush2.bf16.msra.mxu0 0
        %3955 = vmatprep.subr.bf16.mxu0 0
        %3956 = vmatpush2.bf16.msra.mxu0 0
        %3957 = vmatprep.subr.bf16.mxu0 0
        %3958 = vmatpush2.bf16.msra.mxu0 0
        %3959 = vmatprep.subr.bf16.mxu0 0
        %3960 = vmatpush2.bf16.msra.mxu0 0
        %3961 = vmatprep.subr.bf16.mxu0 0
        %3962 = vmatpush2.bf16.msra.mxu0 0
        %3963 = vmatprep.subr.bf16.mxu0 0
        %3964 = vmatpush2.bf16.msra.mxu0 0
        %3965 = vmatprep.mubr.bf16.mxu0 0
        %3966 = vmatmul.mubr.bf16.gmra.mxu0 %v3928
        %v3967 = vpop.f32.mrf.mxu0
        %v3968 = vadd.f32 0.0, %v3967
        %v3969 = vpop.f32.mrf.mxu0
        %v3970 = vpop.f32.mrf.mxu0
        %v3971 = vpop.f32.mrf.mxu0
        %3972 = vdwg.mxu0
        %v3973 = vsel %vm472, %v3646, 0.0
        %v3974 = vsel %vm472, %v3692, 0.0
        %v3975 = vadd.f32 %v3973, %v3974
        %v3976 = vsel %vm472, %v3738, 0.0
        %v3977 = vadd.f32 %v3975, %v3976
        %v3978 = vsel %vm472, %v3784, 0.0
        %v3979 = vadd.f32 %v3977, %v3978
        %v3980 = vsel %vm472, %v3830, 0.0
        %v3981 = vadd.f32 %v3979, %v3980
        %v3982 = vsel %vm472, %v3876, 0.0
        %v3983 = vadd.f32 %v3981, %v3982
        %v3984 = vsel %vm472, %v3922, 0.0
        %v3985 = vadd.f32 %v3983, %v3984
        %v3986 = vsel %vm472, %v3968, 0.0
        %v3987 = vadd.f32 %v3985, %v3986
        %v3988 = vadd.f32 %v2310, %v3987
        %v3989 = vsel %vm472, %v3988, 0.0
        %3990 = vadd.xlane.f32.xlu0 %v3989
        %v3991 = vpop.xlane.xlu0 %3990
        %v3992 = vmul.f32 %v3991, %v2117
        %v3993 = vsub.f32 %v3988, %v3992
        %v3994 = vmul.f32 %v3993, %v3993
        %v3995 = vsel %vm472, %v3994, 0.0
        %3996 = vadd.xlane.f32.xlu0 %v3995
        %v3997 = vpop.xlane.xlu0 %3996
        %v3998 = vmul.f32 %v3997, %v2117
        %v3999 = vadd.f32 %v3998, 1e-05
        %v4000 = vrsqrt.pop %v3999
        %v4001 = vmul.f32 %v3993, %v4000
        %s4002 = scalar_lea.vmem %s8, 1
        %v4003 = vld [vmem:[%s4002] sm:$0x1]
        %v4005 = vlaneseq
        %v4006 = vshrl.u32 %v4005, 7
        %v4007 = vsub.s32 0, %v4006
        %v4008 = vrot.slane %v4003, %v4007
        %v4010 = vmul.f32 %v4001, %v4008
        %s4011 = scalar_lea.vmem %s9, 1
        %v4012 = vld [vmem:[%s4011] sm:$0x1]
        %v4014 = vlaneseq
        %v4015 = vshrl.u32 %v4014, 7
        %v4016 = vsub.s32 0, %v4015
        %v4017 = vrot.slane %v4012, %v4016
        %v4019 = vadd.f32 %v4010, %v4017
        %v4020 = vpack.c.bf16 %v4019, %v4019
        %s4021 = scalar_lea.vmem %s4, 16
        %v4022 = vld [vmem:[%s4021] sm:$0xf]
        %v4023 = vld [vmem:[%s4021 + $0x4] sm:$0xf]
        %v4024 = vld [vmem:[%s4021 + $0x8] sm:$0xf]
        %v4025 = vld [vmem:[%s4021 + $0xc] sm:$0xf]
        %s4026 = scalar_lea.vmem %s5, 1
        %v4027 = vld [vmem:[%s4026] sm:$0x1]
        %v4029 = vlaneseq
        %v4030 = vshrl.u32 %v4029, 7
        %v4031 = vsub.s32 0, %v4030
        %v4032 = vrot.slane %v4027, %v4031
        %v4038 = vunpack.c.l.b16 %v4022
        %v4039 = vunpack.c.l.b16 %v4023
        %v4040 = vunpack.c.l.b16 %v4024
        %v4041 = vunpack.c.l.b16 %v4025
        %v4042 = vpack.c.b16 %v4039, %v4038
        %v4043 = vpack.c.b16 %v4041, %v4040
        %v4047 = vsel %vm472, %v4020, 0
        %4049 = vmatprep.subr.bf16.mxu0 0
        %4050 = vmatpush1.bf16.msra.mxu0 0
        %4051 = vmatprep.subr.bf16.mxu0 0
        %4052 = vmatpush1.bf16.msra.mxu0 0
        %4053 = vmatprep.subr.bf16.mxu0 0
        %4054 = vmatpush1.bf16.msra.mxu0 0
        %4055 = vmatprep.subr.bf16.mxu0 0
        %4056 = vmatpush1.bf16.msra.mxu0 0
        %4057 = vmatprep.subr.bf16.mxu0 0
        %4058 = vmatpush1.bf16.msra.mxu0 0
        %4059 = vmatprep.subr.bf16.mxu0 0
        %4060 = vmatpush1.bf16.msra.mxu0 0
        %4061 = vmatprep.subr.bf16.mxu0 0
        %4062 = vmatpush1.bf16.msra.mxu0 %v4043
        %4063 = vmatprep.subr.bf16.mxu0 0
        %4064 = vmatpush1.bf16.msra.mxu0 %v4042
        %4065 = vmatprep.subr.bf16.mxu0 0
        %4066 = vmatpush2.bf16.msra.mxu0 0
        %4067 = vmatprep.subr.bf16.mxu0 0
        %4068 = vmatpush2.bf16.msra.mxu0 0
        %4069 = vmatprep.subr.bf16.mxu0 0
        %4070 = vmatpush2.bf16.msra.mxu0 0
        %4071 = vmatprep.subr.bf16.mxu0 0
        %4072 = vmatpush2.bf16.msra.mxu0 0
        %4073 = vmatprep.subr.bf16.mxu0 0
        %4074 = vmatpush2.bf16.msra.mxu0 0
        %4075 = vmatprep.subr.bf16.mxu0 0
        %4076 = vmatpush2.bf16.msra.mxu0 0
        %4077 = vmatprep.subr.bf16.mxu0 0
        %4078 = vmatpush2.bf16.msra.mxu0 0
        %4079 = vmatprep.subr.bf16.mxu0 0
        %4080 = vmatpush2.bf16.msra.mxu0 0
        %4081 = vmatprep.mubr.bf16.mxu0 0
        %4082 = vmatmul.mubr.bf16.gmra.mxu0 %v4047
        %v4083 = vpop.f32.mrf.mxu0
        %v4084 = vadd.f32 %v4032, %v4083
        %v4085 = vpop.f32.mrf.mxu0
        %v4086 = vpop.f32.mrf.mxu0
        %v4087 = vpop.f32.mrf.mxu0
        %4088 = vdwg.mxu0
        %vm4089 = vcmp.ge.f32.partialorder %v4084, 0.0
        %v4090 = vmul.f32 %v4084, 0.1
        %v4091 = vsel %vm4089, %v4084, %v4090
        %v4092 = vpack.c.bf16 %v4091, %v4091
        %s4093 = scalar_lea.vmem %s6, 16
        %v4094 = vld [vmem:[%s4093] sm:$0xf]
        %v4095 = vld [vmem:[%s4093 + $0x4] sm:$0xf]
        %v4096 = vld [vmem:[%s4093 + $0x8] sm:$0xf]
        %v4097 = vld [vmem:[%s4093 + $0xc] sm:$0xf]
        %s4098 = scalar_lea.vmem %s7, 1
        %v4099 = vld [vmem:[%s4098] sm:$0x1]
        %v4101 = vlaneseq
        %v4102 = vshrl.u32 %v4101, 7
        %v4103 = vsub.s32 0, %v4102
        %v4104 = vrot.slane %v4099, %v4103
        %v4110 = vunpack.c.l.b16 %v4094
        %v4111 = vunpack.c.l.b16 %v4095
        %v4112 = vunpack.c.l.b16 %v4096
        %v4113 = vunpack.c.l.b16 %v4097
        %v4114 = vpack.c.b16 %v4111, %v4110
        %v4115 = vpack.c.b16 %v4113, %v4112
        %v4119 = vsel %vm472, %v4092, 0
        %4121 = vmatprep.subr.bf16.mxu0 0
        %4122 = vmatpush1.bf16.msra.mxu0 0
        %4123 = vmatprep.subr.bf16.mxu0 0
        %4124 = vmatpush1.bf16.msra.mxu0 0
        %4125 = vmatprep.subr.bf16.mxu0 0
        %4126 = vmatpush1.bf16.msra.mxu0 0
        %4127 = vmatprep.subr.bf16.mxu0 0
        %4128 = vmatpush1.bf16.msra.mxu0 0
        %4129 = vmatprep.subr.bf16.mxu0 0
        %4130 = vmatpush1.bf16.msra.mxu0 0
        %4131 = vmatprep.subr.bf16.mxu0 0
        %4132 = vmatpush1.bf16.msra.mxu0 0
        %4133 = vmatprep.subr.bf16.mxu0 0
        %4134 = vmatpush1.bf16.msra.mxu0 %v4115
        %4135 = vmatprep.subr.bf16.mxu0 0
        %4136 = vmatpush1.bf16.msra.mxu0 %v4114
        %4137 = vmatprep.subr.bf16.mxu0 0
        %4138 = vmatpush2.bf16.msra.mxu0 0
        %4139 = vmatprep.subr.bf16.mxu0 0
        %4140 = vmatpush2.bf16.msra.mxu0 0
        %4141 = vmatprep.subr.bf16.mxu0 0
        %4142 = vmatpush2.bf16.msra.mxu0 0
        %4143 = vmatprep.subr.bf16.mxu0 0
        %4144 = vmatpush2.bf16.msra.mxu0 0
        %4145 = vmatprep.subr.bf16.mxu0 0
        %4146 = vmatpush2.bf16.msra.mxu0 0
        %4147 = vmatprep.subr.bf16.mxu0 0
        %4148 = vmatpush2.bf16.msra.mxu0 0
        %4149 = vmatprep.subr.bf16.mxu0 0
        %4150 = vmatpush2.bf16.msra.mxu0 0
        %4151 = vmatprep.subr.bf16.mxu0 0
        %4152 = vmatpush2.bf16.msra.mxu0 0
        %4153 = vmatprep.mubr.bf16.mxu0 0
        %4154 = vmatmul.mubr.bf16.gmra.mxu0 %v4119
        %v4155 = vpop.f32.mrf.mxu0
        %v4156 = vadd.f32 %v4104, %v4155
        %v4157 = vpop.f32.mrf.mxu0
        %v4158 = vpop.f32.mrf.mxu0
        %v4159 = vpop.f32.mrf.mxu0
        %4160 = vdwg.mxu0
        %v4161 = vadd.f32 %v4019, %v4156
        %v4162 = vsel %vm472, %v4161, 0.0
        %4163 = vadd.xlane.f32.xlu0 %v4162
        %v4164 = vpop.xlane.xlu0 %4163
        %v4165 = vmul.f32 %v4164, %v2117
        %v4166 = vsub.f32 %v4161, %v4165
        %v4167 = vmul.f32 %v4166, %v4166
        %v4168 = vsel %vm472, %v4167, 0.0
        %4169 = vadd.xlane.f32.xlu0 %v4168
        %v4170 = vpop.xlane.xlu0 %4169
        %v4171 = vmul.f32 %v4170, %v2117
        %v4172 = vadd.f32 %v4171, 1e-05
        %v4173 = vrsqrt.pop %v4172
        %v4174 = vmul.f32 %v4166, %v4173
        %s4175 = scalar_lea.vmem %s10, 1
        %v4176 = vld [vmem:[%s4175] sm:$0x1]
        %v4178 = vlaneseq
        %v4179 = vshrl.u32 %v4178, 7
        %v4180 = vsub.s32 0, %v4179
        %v4181 = vrot.slane %v4176, %v4180
        %v4183 = vmul.f32 %v4174, %v4181
        %s4184 = scalar_lea.vmem %s11, 1
        %v4185 = vld [vmem:[%s4184] sm:$0x1]
        %v4187 = vlaneseq
        %v4188 = vshrl.u32 %v4187, 7
        %v4189 = vsub.s32 0, %v4188
        %v4190 = vrot.slane %v4185, %v4189
        %v4192 = vadd.f32 %v4183, %v4190
        %4193 = vst.msk [vmem:[%s415] sm:$0xff] %vm472, %v4192
        %s4194 = sand.u32 %s296, 1
        %s4195 = scalar_lea.sflag [#allocation3], %s4194
        %s4196 = sand.u32 %s296, 1
        %s4197 = smul.addr %s4196, 8
        %s4198 = scalar_lea.vmem [#allocation2], %s4197
        // Predicated region
        $region69: #{tpu_custom_call.1} parent=67 // pred_check
          %p4199 = pneg %p306
        $region70: #{tpu_custom_call.1} parent=67 // pred_check_branch
          %4201 = sbr.rel (%p4199) target = $region72
        $region71: #{tpu_custom_call.1} parent=67 // pred_region
          %s4203 = ssub.s32 128, 128
          %4204 = vsyncadd %s4195, %s4203
          %s4205 = smul.addr %s26, 128
          %s4206 = scalar_lea.hbm %s12, %s4205
          %s4208 = sshll.u32 %s4198, 4
          %s4209 = int_to_ptr.vmem [resolvable:$true] %s4208
          %4211 = dma.vmem_to_hbm [thread:$0]  %s4209, 128, %s4206, %s4195
        $region72: #{tpu_custom_call.1} parent=67 // pred_fallthru
          _
      $region68: #{tpu_custom_call.1} parent=5 // pred_fallthru
        _
      %p4212 = scmp.le.s32.totalorder 2, %s21
      // Predicated region
      $region73: #{tpu_custom_call.1} parent=5 // pred_check
        %p4213 = pneg %p4212
      $region74: #{tpu_custom_call.1} parent=5 // pred_check_branch
        %4215 = sbr.rel (%p4213) target = $region76
      $region75: #{tpu_custom_call.1} parent=5 // pred_region
        %s4216 = ssub.s32 %s21, 2
        // Predicated region
        $region77: #{tpu_custom_call.1} parent=75 // pred_check
          %p4217 = pneg %p312
        $region78: #{tpu_custom_call.1} parent=75 // pred_check_branch
          %4219 = sbr.rel (%p4217) target = $region80
        $region79: #{tpu_custom_call.1} parent=75 // pred_region
          %s4220 = sand.u32 %s297, 1
          %s4221 = scalar_lea.sflag [#allocation3], %s4220
          %s4222 = sand.u32 %s297, 1
          %s4223 = smul.addr %s4222, 8
          %s4224 = scalar_lea.vmem [#allocation2], %s4223
          %4225 = dma.done %s4221, 128
        $region80: #{tpu_custom_call.1} parent=75 // pred_fallthru
          _
      $region76: #{tpu_custom_call.1} parent=5 // pred_fallthru
        _
    $region6: #{tpu_custom_call.1} parent=1 // loop_footer
      %s25 = sadd.s32 1, %s21
    $region7: #{tpu_custom_call.1} parent=1 // loop_footer_branch
      %20 = sbr.rel target = $region3
    $region8: #{tpu_custom_call.1} parent=1 // loop_exit
      _
    %4226 = vsyncpa [#allocation3], 1
    %s4227 = scalar_lea.sflag [#allocation3], 1
    %4228 = vsyncpa %s4227, 1

</llo_original>
